<compile_context>
chip_gen: v7x
topology: tpu7x:2x2x1
jax: 0.10.0
libtpu: 0.0.40
codegen_flags: <defaults>
</compile_context>

<pallas_src>
import functools

import jax
import jax.numpy as jnp
from jax.experimental import pallas as pl
from jax.experimental.pallas import tpu as pltpu

# small-but-consistent hyper parameters (EarlyRNN structure)
IN_CH = 3        # input_dim
CONV_CH = 16     # fixed inside CNNFeatureExtractor
HIDDEN = 32      # hidden_dims
NCLASS = 6
NLAYERS = 4
BN_EPS = 1e-5
LN_EPS = 1e-5
LH = NLAYERS * HIDDEN        # 128: the 4 layers' hidden states stacked on lanes
GATES = 4 * LH               # 512 gate columns, gate-major: [i | f | g | o] x 4 layers


def _full_spec(shape):
    rank = len(shape)
    return pl.BlockSpec(shape, lambda *_: (0,) * rank)


# ----------------------------------------------------------------------------
# Kernel 1: batched per-frame CNN feature extractor (+ folded LSTM layer-0 proj)
# ----------------------------------------------------------------------------
def _cnn_kernel(bands_ref, wband_ref, bnscale_ref, bnbias_ref, pmat_ref,
                bproj_ref, lng_ref, lnb_ref, wx0_ref, out_ref):
    TN, Hh, K = bands_ref.shape                   # K = 3*(W+2)*C, fused contraction
    WCC = wband_ref.shape[1]                      # W * CONV_CH
    CC = CONV_CH

    # fused conv3x3: ONE bf16 MXU matmul per block (no per-band slices/relayouts)
    xb = bands_ref[...].reshape(TN * Hh, K)       # bf16 operand
    acc = jnp.dot(xb, wband_ref[...], preferred_element_type=jnp.float32)

    # f32 epilogue (v5e has no bf16 VPU/EUP): conv-bias + eval BN (folded), ReLU
    y = acc * bnscale_ref[...] + bnbias_ref[...]
    y = jnp.maximum(y, 0.0)                       # Dropout2d = identity in eval

    # MaxPool2d(2,2): pairwise max over adjacent rows, then over adjacent column
    # groups of CONV_CH lanes (lane index = col*CONV_CH + out_channel)
    y3 = y.reshape(TN, Hh, WCC)
    rmax = jnp.maximum(y3[:, :Hh - 1, :], y3[:, 1:, :])          # valid at even rows
    cmax = jnp.maximum(rmax[:, :, :WCC - CC], rmax[:, :, CC:])   # valid at even cols

    # keep only even pooled rows and sum over rows; even-column selection, the
    # 1/((H/2)*(W/2)) average and Linear(16->HIDDEN) are all folded into pmat
    rsel = jax.lax.broadcasted_iota(jnp.int32, cmax.shape, 1) % 2 == 0
    zsum = jnp.sum(jnp.where(rsel, cmax, 0.0), axis=1)           # (TN, (W-1)*CC)

    h = jnp.dot(zsum, pmat_ref[...],
                preferred_element_type=jnp.float32) + bproj_ref[...]   # (TN, HIDDEN)

    mu = jnp.mean(h, axis=-1, keepdims=True)                     # LayerNorm(HIDDEN)
    var = jnp.mean((h - mu) ** 2, axis=-1, keepdims=True)
    h = (h - mu) * jax.lax.rsqrt(var + LN_EPS) * lng_ref[...] + lnb_ref[...]

    # fold the LSTM layer-0 input projection here -> lane-dense (TN, 512) store
    out_ref[...] = jnp.dot(h, wx0_ref[...],
                           preferred_element_type=jnp.float32).astype(out_ref.dtype)


def _pick_tn(n, h):
    """Frames per CNN grid step: a multiple-of-8 divisor of N giving up to ~1024
    matmul rows per step (keeps the f32 intermediates comfortably inside v7x's
    64 MiB VMEM / 32 MiB scoped default) while preserving >= 2 grid steps for
    pipelining and megacore sharding."""
    best = None
    for d in range(8, n + 1, 8):
        if n % d:
            continue
        if d * h > 1024:
            break
        if n // d >= 2:
            best = d
        elif best is None:
            best = d
    return best if best is not None else n        # perf cliff only, still correct


def _expand_wx0(wx0):
    """(HIDDEN, 4*HIDDEN) layer-0 input weights -> (HIDDEN, GATES), gate-major with
    layer-0 columns scattered so the result adds directly onto the wavefront gates."""
    w = jnp.zeros((HIDDEN, GATES), jnp.float32)
    for gi in range(4):
        w = w.at[:, gi * LH: gi * LH + HIDDEN].set(wx0[:, gi * HIDDEN:(gi + 1) * HIDDEN])
    return w


def _build_wbig(wx, wh):
    """Block weights for the layer-time wavefront: stacked hidden (B, LH) -> all
    gates (B, GATES).  Column block (gi, l) receives wh[l] from layer l's rows and
    wx[l] from layer l-1's rows (inter-layer input)."""
    w = jnp.zeros((LH, GATES), jnp.float32)
    for l in range(NLAYERS):
        for gi in range(4):
            col = gi * LH + l * HIDDEN
            w = w.at[l * HIDDEN:(l + 1) * HIDDEN, col:col + HIDDEN].set(
                wh[l][:, gi * HIDDEN:(gi + 1) * HIDDEN])
            if l > 0:
                w = w.at[(l - 1) * HIDDEN:l * HIDDEN, col:col + HIDDEN].set(
                    wx[l][:, gi * HIDDEN:(gi + 1) * HIDDEN])
    return w


def cnn_to_gates(x, p):
    """CNNFeatureExtractor + folded LSTM layer-0 input projection.
    Returns (T*B, GATES) f32 in TIME-MAJOR row order (row = t*B + b)."""
    B, C, T, H, W = x.shape
    assert H % 2 == 0 and W % 2 == 0              # MaxPool2d(2,2) pairing
    N = T * B
    TN = _pick_tn(N, H)

    # one glue pass: NCTHW -> TIME-MAJOR zero-padded NHWC frames with the three
    # conv kernel rows laid out along the contraction axis; bf16 MXU operand
    xr = jnp.transpose(x, (2, 0, 3, 4, 1)).reshape(N, H, W, C)
    xpad = jnp.pad(xr, ((0, 0), (1, 1), (1, 1), (0, 0)))          # (N, H+2, W+2, C)
    bands = jnp.stack([xpad[:, ky:ky + H] for ky in range(3)], axis=2)
    bands = bands.reshape(N, H, 3 * (W + 2) * C).astype(jnp.bfloat16)

    # fused conv weight: (3*(W+2)*C, W*CONV_CH), bf16 (one MXU pass on v6e/v7x)
    wconv = p["wconv"]                            # (3, 3, C, CONV_CH) HWIO
    wband = jnp.concatenate([
        sum(jnp.kron(jnp.eye(W + 2, W, k=-kx, dtype=jnp.float32), wconv[ky, kx])
            for kx in range(3))
        for ky in range(3)], axis=0).astype(jnp.bfloat16)

    bnscale_t = jnp.tile(p["bn_scale"][None, :], (1, W))          # (1, W*CONV_CH)
    bnbias_t = jnp.tile(p["bn_bias"][None, :], (1, W))

    # even-column selection + avg-pool scaling + Linear(16->HIDDEN), folded
    xsel = (jnp.arange(W - 1) % 2 == 0).astype(jnp.float32)
    pmat = jnp.kron(xsel[:, None], p["wproj"]) / float((H // 2) * (W // 2))
    wx0_exp = _expand_wx0(p["wx"][0])

    K = 3 * (W + 2) * C
    g0 = pl.pallas_call(
        _cnn_kernel,
        out_shape=jax.ShapeDtypeStruct((N, GATES), jnp.float32),
        grid=(N // TN,),
        in_specs=[
            pl.BlockSpec((TN, H, K), lambda n: (n, 0, 0)),
            _full_spec((K, W * CONV_CH)),
            _full_spec((1, W * CONV_CH)),
            _full_spec((1, W * CONV_CH)),
            _full_spec(((W - 1) * CONV_CH, HIDDEN)),
            _full_spec((1, HIDDEN)),
            _full_spec((1, HIDDEN)),
            _full_spec((1, HIDDEN)),
            _full_spec((HIDDEN, GATES)),
        ],
        out_specs=pl.BlockSpec((TN, GATES), lambda n: (n, 0)),
        compiler_params=pltpu.CompilerParams(dimension_semantics=("parallel",)),
    )(bands, wband, bnscale_t, bnbias_t, pmat,
      p["bproj"][None, :], p["ln_g"][None, :], p["ln_b"][None, :], wx0_exp)
    return g0


# ----------------------------------------------------------------------------
# Kernel 2: 4-layer LSTM (bias=False) as a layer-time wavefront + both heads.
# ----------------------------------------------------------------------------
def _lstm_heads_kernel(g0_ref, wbig_ref, whead_ref, bhead_ref, out_ref,
                       h_st, c_st, hs_st):
    T, B, _ = g0_ref.shape
    Hd = HIDDEN

    h_st[...] = jnp.zeros(h_st.shape, jnp.float32)   # (B, LH) stacked hidden states
    c_st[...] = jnp.zeros(c_st.shape, jnp.float32)   # (B, LH) stacked cell states

    nsteps = T + NLAYERS - 1                         # wavefront length

    def wave_step(s, carry):
        # layer-0 input projection for timestep s (already in the scattered
        # gate-major layout, zero elsewhere).  Past T-1 the clamped read only
        # feeds layer-0 updates that are never consumed again.
        g0 = g0_ref[jnp.minimum(s, T - 1)]                           # (B, GATES)
        gates = g0 + jnp.dot(h_st[...], wbig_ref[...],
                             preferred_element_type=jnp.float32)     # ONE matmul/step
        i = jax.nn.sigmoid(gates[:, 0 * LH:1 * LH])                  # sigmoid: i,f,o only
        f = jax.nn.sigmoid(gates[:, 1 * LH:2 * LH])
        g = jnp.tanh(gates[:, 2 * LH:3 * LH])                        # tanh: g only
        o = jax.nn.sigmoid(gates[:, 3 * LH:4 * LH])
        c = f * c_st[...] + i * g
        h = o * jnp.tanh(c)
        c_st[...] = c
        h_st[...] = h
        # bias=False => not-yet-started layers see all-zero gates and stay exactly
        # zero, so no ramp-up masking is needed; the clamped early stores to
        # hs_st[0] are overwritten by the first valid top-layer output.
        hs_st[jnp.maximum(s - (NLAYERS - 1), 0)] = h[:, (NLAYERS - 1) * Hd:]
        return carry

    unroll = True if nsteps <= 16 else 4             # modest unroll once T is large
    jax.lax.fori_loop(0, nsteps, wave_step, 0, unroll=unroll)

    # both heads on the whole sequence at once; single combined output store
    hs = hs_st[...].reshape(T * B, Hd)
    logits = jnp.dot(hs, whead_ref[...],
                     preferred_element_type=jnp.float32) + bhead_ref[...]  # (T*B, 7)
    cl = logits[:, :NCLASS]                                          # ClassificationHead
    m = jnp.max(cl, axis=-1, keepdims=True)
    lse = m + jnp.log(jnp.sum(jnp.exp(cl - m), axis=-1, keepdims=True))
    col = jax.lax.broadcasted_iota(jnp.int32, logits.shape, 1)
    out_ref[...] = jnp.where(col < NCLASS, logits - lse,
                             jax.nn.sigmoid(logits)).astype(out_ref.dtype)


def lstm_from_gates(g0_flat, p, B, T):
    """4-layer LSTM (bias=False, eval) + classification / stopping heads.
    g0_flat: (T*B, GATES) time-major layer-0 input projections (gate-major)."""
    g0 = g0_flat.reshape(T, B, GATES)                # free HBM reshape, time-major
    wbig = _build_wbig(p["wx"], p["wh"])
    whead = jnp.concatenate([p["wc"], p["wd"]], axis=1)              # (Hd, NCLASS+1)
    bhead = jnp.concatenate([p["bc"], p["bd"]])[None, :]             # (1, NCLASS+1)

    out = pl.pallas_call(
        _lstm_heads_kernel,
        out_shape=jax.ShapeDtypeStruct((T * B, NCLASS + 1), jnp.float32),
        grid=(1,),
        in_specs=[
            _full_spec((T, B, GATES)),
            _full_spec((LH, GATES)),
            _full_spec((HIDDEN, NCLASS + 1)),
            _full_spec((1, NCLASS + 1)),
        ],
        out_specs=_full_spec((T * B, NCLASS + 1)),
        scratch_shapes=[pltpu.VMEM((B, LH), jnp.float32),            # stacked h
                        pltpu.VMEM((B, LH), jnp.float32),            # stacked c
                        pltpu.VMEM((T, B, HIDDEN), jnp.float32)],    # top-layer h per t
        compiler_params=pltpu.CompilerParams(dimension_semantics=("arbitrary",)),
    )(g0, wbig, whead, bhead)
    # TODO(synk): for B >= 16, shard the batch over a "parallel" grid axis so both
    # v7x TensorCores run the recurrence; at B=2 a single core is the right choice.

    log_probs = jnp.transpose(out[:, :NCLASS].reshape(T, B, NCLASS), (1, 0, 2))
    prob_stop = jnp.transpose(out[:, NCLASS].reshape(T, B), (1, 0))
    return log_probs, prob_stop


def early_rnn_forward(x, params):
    B, T = x.shape[0], x.shape[2]
    g0 = cnn_to_gates(x, params)                 # CNNFeatureExtractor (+ wx[0] folded)
    return lstm_from_gates(g0, params, B, T)     # LSTM backbone + both heads


# ----------------------------------------------------------------------------
# Deterministic parameter initialisation (shapes match EarlyRNN.__init__)
# ----------------------------------------------------------------------------
def init_params(key):
    ks = jax.random.split(key, 13)
    wconv = 0.1 * jax.random.normal(ks[0], (3, 3, IN_CH, CONV_CH), jnp.float32)   # HWIO
    bconv = 0.1 * jax.random.normal(ks[1], (CONV_CH,), jnp.float32)
    bn_g = 1.0 + 0.1 * jax.random.normal(ks[2], (CONV_CH,), jnp.float32)
    bn_b = 0.1 * jax.random.normal(ks[3], (CONV_CH,), jnp.float32)
    bn_mean = 0.1 * jax.random.normal(ks[4], (CONV_CH,), jnp.float32)
    bn_var = 1.0 + 0.1 * jnp.abs(jax.random.normal(ks[5], (CONV_CH,), jnp.float32))
    # fold conv bias + eval-mode BatchNorm into a single affine (scale, bias)
    bn_scale = bn_g / jnp.sqrt(bn_var + BN_EPS)
    bn_bias = bn_b + (bconv - bn_mean) * bn_scale

    wproj = jax.random.normal(ks[6], (CONV_CH, HIDDEN), jnp.float32) / (CONV_CH ** 0.5)
    bproj = 0.1 * jax.random.normal(ks[7], (HIDDEN,), jnp.float32)

    s = 1.0 / (HIDDEN ** 0.5)
    klstm = jax.random.split(ks[8], 2 * NLAYERS)
    wx = jnp.stack([jax.random.uniform(klstm[2 * l], (HIDDEN, 4 * HIDDEN),
                                       jnp.float32, -s, s) for l in range(NLAYERS)])
    wh = jnp.stack([jax.random.uniform(klstm[2 * l + 1], (HIDDEN, 4 * HIDDEN),
                                       jnp.float32, -s, s) for l in range(NLAYERS)])

    wc = 0.1 * jax.random.normal(ks[9], (HIDDEN, NCLASS), jnp.float32)
    bc = 0.1 * jax.random.normal(ks[10], (NCLASS,), jnp.float32)
    wd = 0.1 * jax.random.normal(ks[11], (HIDDEN, 1), jnp.float32)
    bd = -20.0 + 0.1 * jax.random.normal(ks[12], (1,), jnp.float32)   # DecisionHead bias init

    return {"wconv": wconv, "bn_scale": bn_scale, "bn_bias": bn_bias,
            "wproj": wproj, "bproj": bproj,
            "ln_g": jnp.ones((HIDDEN,), jnp.float32),
            "ln_b": jnp.zeros((HIDDEN,), jnp.float32),
            "wx": wx, "wh": wh, "wc": wc, "bc": bc, "wd": wd, "bd": bd}


# ----------------------------------------------------------------------------
# Plain-JAX references (used only for the in-script numerical checks)
# ----------------------------------------------------------------------------
def _reference_cnn(x, p):
    B, C, T, H, W = x.shape
    xr = jnp.transpose(x, (0, 2, 3, 4, 1)).reshape(B * T, H, W, C)
    y = jax.lax.conv_general_dilated(
        xr, p["wconv"], (1, 1), ((1, 1), (1, 1)),
        dimension_numbers=("NHWC", "HWIO", "NHWC"),
        precision=jax.lax.Precision.HIGHEST)
    y = y * p["bn_scale"] + p["bn_bias"]
    y = jnp.maximum(y, 0.0)
    y = jax.lax.reduce_window(y, -jnp.inf, jax.lax.max,
                              (1, 2, 2, 1), (1, 2, 2, 1), "VALID")
    feat = jnp.mean(y, axis=(1, 2))
    h = feat @ p["wproj"] + p["bproj"]
    mu = jnp.mean(h, -1, keepdims=True)
    var = jnp.mean((h - mu) ** 2, -1, keepdims=True)
    h = (h - mu) * jax.lax.rsqrt(var + LN_EPS) * p["ln_g"] + p["ln_b"]
    return h.reshape(B, T, HIDDEN)


def _reference_lstm_heads(feats, p):
    B, T, Hd = feats.shape
    hi = jax.lax.Precision.HIGHEST
    x = feats
    for l in range(NLAYERS):
        h = jnp.zeros((B, Hd), jnp.float32)
        c = jnp.zeros((B, Hd), jnp.float32)
        outs = []
        for t in range(T):
            gates = (jnp.dot(x[:, t], p["wx"][l], precision=hi)
                     + jnp.dot(h, p["wh"][l], precision=hi))
            i = jax.nn.sigmoid(gates[:, :Hd])
            f = jax.nn.sigmoid(gates[:, Hd:2 * Hd])
            g = jnp.tanh(gates[:, 2 * Hd:3 * Hd])
            o = jax.nn.sigmoid(gates[:, 3 * Hd:])
            c = f * c + i * g
            h = o * jnp.tanh(c)
            outs.append(h)
        x = jnp.stack(outs, axis=1)
    logits = jnp.dot(x, p["wc"], precision=hi) + p["bc"]
    logp = jax.nn.log_softmax(logits, axis=-1)
    delta = jax.nn.sigmoid(jnp.dot(x, p["wd"], precision=hi)[..., 0] + p["bd"][0])
    return logp, delta


if __name__ == "__main__":
    key = jax.random.PRNGKey(0)
    pkey, xkey = jax.random.split(key)
    params = init_params(pkey)

    B, T, H, W = 2, 8, 16, 16
    x = jax.random.normal(xkey, (B, IN_CH, T, H, W), jnp.float32)

    fwd = jax.jit(functools.partial(early_rnn_forward, params=params))
    log_class_probabilities, probability_stopping = fwd(x)
    log_class_probabilities = jax.block_until_ready(log_class_probabilities)
    probability_stopping = jax.block_until_ready(probability_stopping)

    assert log_class_probabilities.shape == (B, T, NCLASS)
    assert probability_stopping.shape == (B, T)
    assert bool(jnp.all(jnp.isfinite(log_class_probabilities)))
    assert bool(jnp.all(jnp.isfinite(probability_stopping)))

    # end-to-end check against plain-JAX references (only bf16 conv quantization)
    feats_r = _reference_cnn(x, params)                       # (B, T, HIDDEN), f32
    logp_r, delta_r = _reference_lstm_heads(feats_r, params)
    assert float(jnp.max(jnp.abs(log_class_probabilities - logp_r))) < 1.5e-1
    assert float(jnp.max(jnp.abs(probability_stopping - delta_r))) < 1e-6

    # CNN-stage check (kernel 1 output = LayerNorm-features @ expanded wx[0])
    g0_k = jax.jit(cnn_to_gates)(x, params)
    feats_tm = jnp.transpose(feats_r, (1, 0, 2)).reshape(T * B, HIDDEN)
    g0_r = feats_tm @ _expand_wx0(params["wx"][0])
    assert float(jnp.max(jnp.abs(g0_k - g0_r))) < 1e-1

    # LSTM-stage check in isolation (all-f32 inputs -> tight wavefront tolerance)
    logp2, delta2 = jax.jit(functools.partial(lstm_from_gates, B=B, T=T))(g0_r, params)
    assert float(jnp.max(jnp.abs(logp2 - logp_r))) < 5e-3
    assert float(jnp.max(jnp.abs(delta2 - delta_r))) < 1e-6

    print("KERNEL_OK")
</pallas_src>

<mosaic_0001>
module attributes {stable_mosaic.version = 11 : i64} {
  func.func @_cnn_kernel(%arg0: i32, %arg1: memref<8x16x162xbf16, #tpu.memory_space<vmem>>, %arg2: memref<162x256xbf16, #tpu.memory_space<vmem>>, %arg3: memref<1x256xf32, #tpu.memory_space<vmem>>, %arg4: memref<1x256xf32, #tpu.memory_space<vmem>>, %arg5: memref<240x32xf32, #tpu.memory_space<vmem>>, %arg6: memref<1x32xf32, #tpu.memory_space<vmem>>, %arg7: memref<1x32xf32, #tpu.memory_space<vmem>>, %arg8: memref<1x32xf32, #tpu.memory_space<vmem>>, %arg9: memref<32x512xf32, #tpu.memory_space<vmem>>, %arg10: memref<8x512xf32, #tpu.memory_space<vmem>>) attributes {dimension_semantics = [#tpu.dimension_semantics<parallel>], iteration_bounds = array<i64: 2>, scalar_prefetch = 0 : i64, scratch_operands = 0 : i64, tpu.core_type = #tpu.core_type<tc>, window_params = [{transform_indices = @transform_0, window_bounds = array<i64: 8, 16, 162>}, {pipeline_mode = #tpu.pipeline_mode<synchronous>, transform_indices = @transform_1, window_bounds = array<i64: 162, 256>}, {pipeline_mode = #tpu.pipeline_mode<synchronous>, transform_indices = @transform_2, window_bounds = array<i64: 1, 256>}, {pipeline_mode = #tpu.pipeline_mode<synchronous>, transform_indices = @transform_3, window_bounds = array<i64: 1, 256>}, {pipeline_mode = #tpu.pipeline_mode<synchronous>, transform_indices = @transform_4, window_bounds = array<i64: 240, 32>}, {pipeline_mode = #tpu.pipeline_mode<synchronous>, transform_indices = @transform_5, window_bounds = array<i64: 1, 32>}, {pipeline_mode = #tpu.pipeline_mode<synchronous>, transform_indices = @transform_6, window_bounds = array<i64: 1, 32>}, {pipeline_mode = #tpu.pipeline_mode<synchronous>, transform_indices = @transform_7, window_bounds = array<i64: 1, 32>}, {pipeline_mode = #tpu.pipeline_mode<synchronous>, transform_indices = @transform_8, window_bounds = array<i64: 32, 512>}, {transform_indices = @transform_9, window_bounds = array<i64: 8, 512>}]} {
    %c0 = arith.constant 0 : index
    %c0_0 = arith.constant 0 : index
    %c0_1 = arith.constant 0 : index
    %0 = vector.load %arg1[%c0, %c0_0, %c0_1] : memref<8x16x162xbf16, #tpu.memory_space<vmem>>, vector<8x16x162xbf16>
    %1 = vector.shape_cast %0 : vector<8x16x162xbf16> to vector<128x162xbf16>
    %c0_2 = arith.constant 0 : index
    %c0_3 = arith.constant 0 : index
    %2 = vector.load %arg2[%c0_2, %c0_3] : memref<162x256xbf16, #tpu.memory_space<vmem>>, vector<162x256xbf16>
    %cst = arith.constant dense<0.000000e+00> : vector<128x256xf32>
    %3 = tpu.matmul %1, %2, %cst {dimension_numbers = #tpu.dot_dimension_numbers<[1], [0], [0], [1], [0, 0, 1, 1], [], []>} : vector<128x162xbf16>, vector<162x256xbf16>, vector<128x256xf32> -> vector<128x256xf32>
    %c0_4 = arith.constant 0 : index
    %c0_5 = arith.constant 0 : index
    %4 = vector.load %arg3[%c0_4, %c0_5] : memref<1x256xf32, #tpu.memory_space<vmem>>, vector<1x256xf32>
    %5 = vector.broadcast %4 : vector<1x256xf32> to vector<128x256xf32>
    %6 = arith.mulf %3, %5 : vector<128x256xf32>
    %c0_6 = arith.constant 0 : index
    %c0_7 = arith.constant 0 : index
    %7 = vector.load %arg4[%c0_6, %c0_7] : memref<1x256xf32, #tpu.memory_space<vmem>>, vector<1x256xf32>
    %8 = vector.broadcast %7 : vector<1x256xf32> to vector<128x256xf32>
    %9 = arith.addf %6, %8 : vector<128x256xf32>
    %cst_8 = arith.constant 0.000000e+00 : f32
    %10 = vector.broadcast %cst_8 : f32 to vector<128x256xf32>
    %11 = arith.maximumf %9, %10 : vector<128x256xf32>
    %12 = vector.shape_cast %11 : vector<128x256xf32> to vector<8x16x256xf32>
    %13 = vector.extract_strided_slice %12 {offsets = [0, 0, 0], sizes = [8, 15, 256], strides = [1, 1, 1]} : vector<8x16x256xf32> to vector<8x15x256xf32>
    %14 = vector.extract_strided_slice %12 {offsets = [0, 1, 0], sizes = [8, 15, 256], strides = [1, 1, 1]} : vector<8x16x256xf32> to vector<8x15x256xf32>
    %15 = arith.maximumf %13, %14 : vector<8x15x256xf32>
    %16 = vector.extract_strided_slice %15 {offsets = [0, 0, 0], sizes = [8, 15, 240], strides = [1, 1, 1]} : vector<8x15x256xf32> to vector<8x15x240xf32>
    %17 = vector.extract_strided_slice %15 {offsets = [0, 0, 16], sizes = [8, 15, 240], strides = [1, 1, 1]} : vector<8x15x256xf32> to vector<8x15x240xf32>
    %18 = arith.maximumf %16, %17 : vector<8x15x240xf32>
    %19 = tpu.iota {dimensions = array<i32: 1>} : vector<8x15x240xi32>
    %c2_i32 = arith.constant 2 : i32
    %c0_i32 = arith.constant 0 : i32
    %20 = arith.cmpi eq, %c2_i32, %c0_i32 : i32
    %c1_i32 = arith.constant 1 : i32
    %21 = arith.select %20, %c1_i32, %c2_i32 : i32
    %22 = vector.broadcast %21 : i32 to vector<8x15x240xi32>
    %23 = arith.remsi %19, %22 : vector<8x15x240xi32>
    %c0_i32_9 = arith.constant 0 : i32
    %24 = vector.broadcast %c0_i32_9 : i32 to vector<8x15x240xi32>
    %25 = arith.cmpi ne, %23, %24 : vector<8x15x240xi32>
    %c0_i32_10 = arith.constant 0 : i32
    %26 = vector.broadcast %c0_i32_10 : i32 to vector<8x15x240xi32>
    %27 = arith.cmpi slt, %23, %26 : vector<8x15x240xi32>
    %c0_i32_11 = arith.constant 0 : i32
    %28 = arith.cmpi slt, %21, %c0_i32_11 : i32
    %29 = vector.broadcast %28 : i1 to vector<8x15x240xi1>
    %30 = vector.broadcast %29 : vector<8x15x240xi1> to vector<8x15x240xi1>
    %31 = arith.xori %27, %30 : vector<8x15x240xi1>
    %32 = arith.andi %31, %25 : vector<8x15x240xi1>
    %33 = vector.broadcast %21 : i32 to vector<8x15x240xi32>
    %34 = arith.addi %23, %33 : vector<8x15x240xi32>
    %35 = arith.select %32, %34, %23 : vector<8x15x240xi1>, vector<8x15x240xi32>
    %c0_i32_12 = arith.constant 0 : i32
    %36 = vector.broadcast %c0_i32_12 : i32 to vector<8x15x240xi32>
    %37 = arith.cmpi eq, %35, %36 : vector<8x15x240xi32>
    %cst_13 = arith.constant 0.000000e+00 : f32
    %38 = vector.broadcast %cst_13 : f32 to vector<8x15x240xf32>
    %39 = arith.select %37, %18, %38 : vector<8x15x240xi1>, vector<8x15x240xf32>
    %cst_14 = arith.constant dense<0.000000e+00> : vector<8x240xf32>
    %40 = vector.multi_reduction <add>, %39, %cst_14 [1] : vector<8x15x240xf32> to vector<8x240xf32>
    %c0_15 = arith.constant 0 : index
    %c0_16 = arith.constant 0 : index
    %41 = vector.load %arg5[%c0_15, %c0_16] : memref<240x32xf32, #tpu.memory_space<vmem>>, vector<240x32xf32>
    %cst_17 = arith.constant dense<0.000000e+00> : vector<8x32xf32>
    %42 = tpu.matmul %40, %41, %cst_17 {dimension_numbers = #tpu.dot_dimension_numbers<[1], [0], [0], [1], [0, 0, 1, 1], [], []>} : vector<8x240xf32>, vector<240x32xf32>, vector<8x32xf32> -> vector<8x32xf32>
    %c0_18 = arith.constant 0 : index
    %c0_19 = arith.constant 0 : index
    %43 = vector.load %arg6[%c0_18, %c0_19] : memref<1x32xf32, #tpu.memory_space<vmem>>, vector<1x32xf32>
    %44 = vector.broadcast %43 : vector<1x32xf32> to vector<8x32xf32>
    %45 = arith.addf %42, %44 : vector<8x32xf32>
    %cst_20 = arith.constant dense<0.000000e+00> : vector<8xf32>
    %46 = vector.multi_reduction <add>, %45, %cst_20 [1] : vector<8x32xf32> to vector<8xf32>
    %47 = vector.shape_cast %46 : vector<8xf32> to vector<8x1xf32>
    %cst_21 = arith.constant 3.200000e+01 : f32
    %48 = vector.broadcast %cst_21 : f32 to vector<8x1xf32>
    %49 = arith.divf %47, %48 : vector<8x1xf32>
    %50 = vector.broadcast %49 : vector<8x1xf32> to vector<8x32xf32>
    %51 = arith.subf %45, %50 : vector<8x32xf32>
    %52 = arith.mulf %51, %51 : vector<8x32xf32>
    %cst_22 = arith.constant dense<0.000000e+00> : vector<8xf32>
    %53 = vector.multi_reduction <add>, %52, %cst_22 [1] : vector<8x32xf32> to vector<8xf32>
    %54 = vector.shape_cast %53 : vector<8xf32> to vector<8x1xf32>
    %cst_23 = arith.constant 3.200000e+01 : f32
    %55 = vector.broadcast %cst_23 : f32 to vector<8x1xf32>
    %56 = arith.divf %54, %55 : vector<8x1xf32>
    %57 = vector.broadcast %49 : vector<8x1xf32> to vector<8x32xf32>
    %58 = arith.subf %45, %57 : vector<8x32xf32>
    %cst_24 = arith.constant 9.99999974E-6 : f32
    %59 = vector.broadcast %cst_24 : f32 to vector<8x1xf32>
    %60 = arith.addf %56, %59 : vector<8x1xf32>
    %61 = math.rsqrt %60 : vector<8x1xf32>
    %62 = vector.broadcast %61 : vector<8x1xf32> to vector<8x32xf32>
    %63 = arith.mulf %58, %62 : vector<8x32xf32>
    %c0_25 = arith.constant 0 : index
    %c0_26 = arith.constant 0 : index
    %64 = vector.load %arg7[%c0_25, %c0_26] : memref<1x32xf32, #tpu.memory_space<vmem>>, vector<1x32xf32>
    %65 = vector.broadcast %64 : vector<1x32xf32> to vector<8x32xf32>
    %66 = arith.mulf %63, %65 : vector<8x32xf32>
    %c0_27 = arith.constant 0 : index
    %c0_28 = arith.constant 0 : index
    %67 = vector.load %arg8[%c0_27, %c0_28] : memref<1x32xf32, #tpu.memory_space<vmem>>, vector<1x32xf32>
    %68 = vector.broadcast %67 : vector<1x32xf32> to vector<8x32xf32>
    %69 = arith.addf %66, %68 : vector<8x32xf32>
    %c0_29 = arith.constant 0 : index
    %c0_30 = arith.constant 0 : index
    %70 = vector.load %arg9[%c0_29, %c0_30] : memref<32x512xf32, #tpu.memory_space<vmem>>, vector<32x512xf32>
    %cst_31 = arith.constant dense<0.000000e+00> : vector<8x512xf32>
    %71 = tpu.matmul %69, %70, %cst_31 {dimension_numbers = #tpu.dot_dimension_numbers<[1], [0], [0], [1], [0, 0, 1, 1], [], []>} : vector<8x32xf32>, vector<32x512xf32>, vector<8x512xf32> -> vector<8x512xf32>
    %c0_32 = arith.constant 0 : index
    %c0_33 = arith.constant 0 : index
    %72 = vector.load %arg10[%c0_32, %c0_33] : memref<8x512xf32, #tpu.memory_space<vmem>>, vector<8x512xf32>
    tpu.vector_store %arg10[%c0_32, %c0_33], %71 {strides = array<i32>} : memref<8x512xf32, #tpu.memory_space<vmem>>, vector<8x512xf32>,
    return
  }
  func.func @transform_0(%arg0: i32) -> (i32, i32, i32) {
    %c0_i32 = arith.constant 0 : i32
    %c0_i32_0 = arith.constant 0 : i32
    %c0_i32_1 = arith.constant 0 : i32
    return %arg0, %c0_i32, %c0_i32_0 : i32, i32, i32
  }
  func.func @transform_1(%arg0: i32) -> (i32, i32) {
    %c0_i32 = arith.constant 0 : i32
    %c0_i32_0 = arith.constant 0 : i32
    %c0_i32_1 = arith.constant 0 : i32
    return %c0_i32, %c0_i32_0 : i32, i32
  }
  func.func @transform_2(%arg0: i32) -> (i32, i32) {
    %c0_i32 = arith.constant 0 : i32
    %c0_i32_0 = arith.constant 0 : i32
    %c0_i32_1 = arith.constant 0 : i32
    return %c0_i32, %c0_i32_0 : i32, i32
  }
  func.func @transform_3(%arg0: i32) -> (i32, i32) {
    %c0_i32 = arith.constant 0 : i32
    %c0_i32_0 = arith.constant 0 : i32
    %c0_i32_1 = arith.constant 0 : i32
    return %c0_i32, %c0_i32_0 : i32, i32
  }
  func.func @transform_4(%arg0: i32) -> (i32, i32) {
    %c0_i32 = arith.constant 0 : i32
    %c0_i32_0 = arith.constant 0 : i32
    %c0_i32_1 = arith.constant 0 : i32
    return %c0_i32, %c0_i32_0 : i32, i32
  }
  func.func @transform_5(%arg0: i32) -> (i32, i32) {
    %c0_i32 = arith.constant 0 : i32
    %c0_i32_0 = arith.constant 0 : i32
    %c0_i32_1 = arith.constant 0 : i32
    return %c0_i32, %c0_i32_0 : i32, i32
  }
  func.func @transform_6(%arg0: i32) -> (i32, i32) {
    %c0_i32 = arith.constant 0 : i32
    %c0_i32_0 = arith.constant 0 : i32
    %c0_i32_1 = arith.constant 0 : i32
    return %c0_i32, %c0_i32_0 : i32, i32
  }
  func.func @transform_7(%arg0: i32) -> (i32, i32) {
    %c0_i32 = arith.constant 0 : i32
    %c0_i32_0 = arith.constant 0 : i32
    %c0_i32_1 = arith.constant 0 : i32
    return %c0_i32, %c0_i32_0 : i32, i32
  }
  func.func @transform_8(%arg0: i32) -> (i32, i32) {
    %c0_i32 = arith.constant 0 : i32
    %c0_i32_0 = arith.constant 0 : i32
    %c0_i32_1 = arith.constant 0 : i32
    return %c0_i32, %c0_i32_0 : i32, i32
  }
  func.func @transform_9(%arg0: i32) -> (i32, i32) {
    %c0_i32 = arith.constant 0 : i32
    %c0_i32_0 = arith.constant 0 : i32
    return %arg0, %c0_i32 : i32, i32
  }
}

module attributes {stable_mosaic.version = 11 : i64} {
  func.func @_lstm_heads_kernel(%arg0: i32, %arg1: memref<8x2x512xf32, #tpu.memory_space<vmem>>, %arg2: memref<128x512xf32, #tpu.memory_space<vmem>>, %arg3: memref<32x7xf32, #tpu.memory_space<vmem>>, %arg4: memref<1x7xf32, #tpu.memory_space<vmem>>, %arg5: memref<16x7xf32, #tpu.memory_space<vmem>>, %arg6: memref<2x128xf32, #tpu.memory_space<vmem>>, %arg7: memref<2x128xf32, #tpu.memory_space<vmem>>, %arg8: memref<8x2x32xf32, #tpu.memory_space<vmem>>) attributes {dimension_semantics = [#tpu.dimension_semantics<arbitrary>], iteration_bounds = array<i64: 1>, scalar_prefetch = 0 : i64, scratch_operands = 3 : i64, tpu.core_type = #tpu.core_type<tc>, window_params = [{pipeline_mode = #tpu.pipeline_mode<synchronous>, transform_indices = @transform_0, window_bounds = array<i64: 8, 2, 512>}, {pipeline_mode = #tpu.pipeline_mode<synchronous>, transform_indices = @transform_1, window_bounds = array<i64: 128, 512>}, {pipeline_mode = #tpu.pipeline_mode<synchronous>, transform_indices = @transform_2, window_bounds = array<i64: 32, 7>}, {pipeline_mode = #tpu.pipeline_mode<synchronous>, transform_indices = @transform_3, window_bounds = array<i64: 1, 7>}, {pipeline_mode = #tpu.pipeline_mode<synchronous>, transform_indices = @transform_4, window_bounds = array<i64: 16, 7>}]} {
    %cst = arith.constant 0.000000e+00 : f32
    %0 = vector.broadcast %cst : f32 to vector<2x128xf32>
    %c0 = arith.constant 0 : index
    %c0_0 = arith.constant 0 : index
    %1 = vector.load %arg6[%c0, %c0_0] : memref<2x128xf32, #tpu.memory_space<vmem>>, vector<2x128xf32>
    tpu.vector_store %arg6[%c0, %c0_0], %0 {strides = array<i32>} : memref<2x128xf32, #tpu.memory_space<vmem>>, vector<2x128xf32>,
    %cst_1 = arith.constant 0.000000e+00 : f32
    %2 = vector.broadcast %cst_1 : f32 to vector<2x128xf32>
    %c0_2 = arith.constant 0 : index
    %c0_3 = arith.constant 0 : index
    %3 = vector.load %arg7[%c0_2, %c0_3] : memref<2x128xf32, #tpu.memory_space<vmem>>, vector<2x128xf32>
    tpu.vector_store %arg7[%c0_2, %c0_3], %2 {strides = array<i32>} : memref<2x128xf32, #tpu.memory_space<vmem>>, vector<2x128xf32>,
    %c0_i32 = arith.constant 0 : i32
    %c7_i32 = arith.constant 7 : i32
    %4 = arith.minsi %c0_i32, %c7_i32 : i32
    %5 = arith.index_cast %4 : i32 to index
    %c0_4 = arith.constant 0 : index
    %c0_5 = arith.constant 0 : index
    %6 = vector.load %arg1[%5, %c0_4, %c0_5] : memref<8x2x512xf32, #tpu.memory_space<vmem>>, vector<1x2x512xf32>
    %7 = vector.shape_cast %6 : vector<1x2x512xf32> to vector<2x512xf32>
    %c0_6 = arith.constant 0 : index
    %c0_7 = arith.constant 0 : index
    %8 = vector.load %arg6[%c0_6, %c0_7] : memref<2x128xf32, #tpu.memory_space<vmem>>, vector<2x128xf32>
    %c0_8 = arith.constant 0 : index
    %c0_9 = arith.constant 0 : index
    %9 = vector.load %arg2[%c0_8, %c0_9] : memref<128x512xf32, #tpu.memory_space<vmem>>, vector<128x512xf32>
    %cst_10 = arith.constant dense<0.000000e+00> : vector<2x512xf32>
    %10 = tpu.matmul %8, %9, %cst_10 {dimension_numbers = #tpu.dot_dimension_numbers<[1], [0], [0], [1], [0, 0, 1, 1], [], []>} : vector<2x128xf32>, vector<128x512xf32>, vector<2x512xf32> -> vector<2x512xf32>
    %11 = arith.addf %7, %10 : vector<2x512xf32>
    %12 = vector.extract_strided_slice %11 {offsets = [0, 0], sizes = [2, 128], strides = [1, 1]} : vector<2x512xf32> to vector<2x128xf32>
    %13 = arith.negf %12 : vector<2x128xf32>
    %14 = math.exp %13 : vector<2x128xf32>
    %cst_11 = arith.constant 1.000000e+00 : f32
    %15 = vector.broadcast %cst_11 : f32 to vector<2x128xf32>
    %16 = arith.addf %15, %14 : vector<2x128xf32>
    %17 = arith.divf %15, %16 : vector<2x128xf32>
    %18 = vector.extract_strided_slice %11 {offsets = [0, 128], sizes = [2, 128], strides = [1, 1]} : vector<2x512xf32> to vector<2x128xf32>
    %19 = arith.negf %18 : vector<2x128xf32>
    %20 = math.exp %19 : vector<2x128xf32>
    %cst_12 = arith.constant 1.000000e+00 : f32
    %21 = vector.broadcast %cst_12 : f32 to vector<2x128xf32>
    %22 = arith.addf %21, %20 : vector<2x128xf32>
    %23 = arith.divf %21, %22 : vector<2x128xf32>
    %24 = vector.extract_strided_slice %11 {offsets = [0, 256], sizes = [2, 128], strides = [1, 1]} : vector<2x512xf32> to vector<2x128xf32>
    %25 = math.tanh %24 : vector<2x128xf32>
    %26 = vector.extract_strided_slice %11 {offsets = [0, 384], sizes = [2, 128], strides = [1, 1]} : vector<2x512xf32> to vector<2x128xf32>
    %27 = arith.negf %26 : vector<2x128xf32>
    %28 = math.exp %27 : vector<2x128xf32>
    %cst_13 = arith.constant 1.000000e+00 : f32
    %29 = vector.broadcast %cst_13 : f32 to vector<2x128xf32>
    %30 = arith.addf %29, %28 : vector<2x128xf32>
    %31 = arith.divf %29, %30 : vector<2x128xf32>
    %c0_14 = arith.constant 0 : index
    %c0_15 = arith.constant 0 : index
    %32 = vector.load %arg7[%c0_14, %c0_15] : memref<2x128xf32, #tpu.memory_space<vmem>>, vector<2x128xf32>
    %33 = arith.mulf %23, %32 : vector<2x128xf32>
    %34 = arith.mulf %17, %25 : vector<2x128xf32>
    %35 = arith.addf %33, %34 : vector<2x128xf32>
    %36 = math.tanh %35 : vector<2x128xf32>
    %37 = arith.mulf %31, %36 : vector<2x128xf32>
    %c0_16 = arith.constant 0 : index
    %c0_17 = arith.constant 0 : index
    %38 = vector.load %arg7[%c0_16, %c0_17] : memref<2x128xf32, #tpu.memory_space<vmem>>, vector<2x128xf32>
    tpu.vector_store %arg7[%c0_16, %c0_17], %35 {strides = array<i32>} : memref<2x128xf32, #tpu.memory_space<vmem>>, vector<2x128xf32>,
    %c0_18 = arith.constant 0 : index
    %c0_19 = arith.constant 0 : index
    %39 = vector.load %arg6[%c0_18, %c0_19] : memref<2x128xf32, #tpu.memory_space<vmem>>, vector<2x128xf32>
    tpu.vector_store %arg6[%c0_18, %c0_19], %37 {strides = array<i32>} : memref<2x128xf32, #tpu.memory_space<vmem>>, vector<2x128xf32>,
    %40 = vector.extract_strided_slice %37 {offsets = [0, 96], sizes = [2, 32], strides = [1, 1]} : vector<2x128xf32> to vector<2x32xf32>
    %c3_i32 = arith.constant 3 : i32
    %41 = arith.subi %c0_i32, %c3_i32 : i32
    %c0_i32_20 = arith.constant 0 : i32
    %42 = arith.maxsi %41, %c0_i32_20 : i32
    %43 = arith.index_cast %42 : i32 to index
    %c0_21 = arith.constant 0 : index
    %c0_22 = arith.constant 0 : index
    %44 = vector.load %arg8[%43, %c0_21, %c0_22] : memref<8x2x32xf32, #tpu.memory_space<vmem>>, vector<1x2x32xf32>
    %45 = vector.shape_cast %44 : vector<1x2x32xf32> to vector<2x32xf32>
    %46 = vector.shape_cast %40 : vector<2x32xf32> to vector<1x2x32xf32>
    tpu.vector_store %arg8[%43, %c0_21, %c0_22], %46 {strides = array<i32>} : memref<8x2x32xf32, #tpu.memory_space<vmem>>, vector<1x2x32xf32>,
    %c1_i32 = arith.constant 1 : i32
    %c7_i32_23 = arith.constant 7 : i32
    %47 = arith.minsi %c1_i32, %c7_i32_23 : i32
    %48 = arith.index_cast %47 : i32 to index
    %c0_24 = arith.constant 0 : index
    %c0_25 = arith.constant 0 : index
    %49 = vector.load %arg1[%48, %c0_24, %c0_25] : memref<8x2x512xf32, #tpu.memory_space<vmem>>, vector<1x2x512xf32>
    %50 = vector.shape_cast %49 : vector<1x2x512xf32> to vector<2x512xf32>
    %c0_26 = arith.constant 0 : index
    %c0_27 = arith.constant 0 : index
    %51 = vector.load %arg6[%c0_26, %c0_27] : memref<2x128xf32, #tpu.memory_space<vmem>>, vector<2x128xf32>
    %c0_28 = arith.constant 0 : index
    %c0_29 = arith.constant 0 : index
    %52 = vector.load %arg2[%c0_28, %c0_29] : memref<128x512xf32, #tpu.memory_space<vmem>>, vector<128x512xf32>
    %cst_30 = arith.constant dense<0.000000e+00> : vector<2x512xf32>
    %53 = tpu.matmul %51, %52, %cst_30 {dimension_numbers = #tpu.dot_dimension_numbers<[1], [0], [0], [1], [0, 0, 1, 1], [], []>} : vector<2x128xf32>, vector<128x512xf32>, vector<2x512xf32> -> vector<2x512xf32>
    %54 = arith.addf %50, %53 : vector<2x512xf32>
    %55 = vector.extract_strided_slice %54 {offsets = [0, 0], sizes = [2, 128], strides = [1, 1]} : vector<2x512xf32> to vector<2x128xf32>
    %56 = arith.negf %55 : vector<2x128xf32>
    %57 = math.exp %56 : vector<2x128xf32>
    %cst_31 = arith.constant 1.000000e+00 : f32
    %58 = vector.broadcast %cst_31 : f32 to vector<2x128xf32>
    %59 = arith.addf %58, %57 : vector<2x128xf32>
    %60 = arith.divf %58, %59 : vector<2x128xf32>
    %61 = vector.extract_strided_slice %54 {offsets = [0, 128], sizes = [2, 128], strides = [1, 1]} : vector<2x512xf32> to vector<2x128xf32>
    %62 = arith.negf %61 : vector<2x128xf32>
    %63 = math.exp %62 : vector<2x128xf32>
    %cst_32 = arith.constant 1.000000e+00 : f32
    %64 = vector.broadcast %cst_32 : f32 to vector<2x128xf32>
    %65 = arith.addf %64, %63 : vector<2x128xf32>
    %66 = arith.divf %64, %65 : vector<2x128xf32>
    %67 = vector.extract_strided_slice %54 {offsets = [0, 256], sizes = [2, 128], strides = [1, 1]} : vector<2x512xf32> to vector<2x128xf32>
    %68 = math.tanh %67 : vector<2x128xf32>
    %69 = vector.extract_strided_slice %54 {offsets = [0, 384], sizes = [2, 128], strides = [1, 1]} : vector<2x512xf32> to vector<2x128xf32>
    %70 = arith.negf %69 : vector<2x128xf32>
    %71 = math.exp %70 : vector<2x128xf32>
    %cst_33 = arith.constant 1.000000e+00 : f32
    %72 = vector.broadcast %cst_33 : f32 to vector<2x128xf32>
    %73 = arith.addf %72, %71 : vector<2x128xf32>
    %74 = arith.divf %72, %73 : vector<2x128xf32>
    %c0_34 = arith.constant 0 : index
    %c0_35 = arith.constant 0 : index
    %75 = vector.load %arg7[%c0_34, %c0_35] : memref<2x128xf32, #tpu.memory_space<vmem>>, vector<2x128xf32>
    %76 = arith.mulf %66, %75 : vector<2x128xf32>
    %77 = arith.mulf %60, %68 : vector<2x128xf32>
    %78 = arith.addf %76, %77 : vector<2x128xf32>
    %79 = math.tanh %78 : vector<2x128xf32>
    %80 = arith.mulf %74, %79 : vector<2x128xf32>
    %c0_36 = arith.constant 0 : index
    %c0_37 = arith.constant 0 : index
    %81 = vector.load %arg7[%c0_36, %c0_37] : memref<2x128xf32, #tpu.memory_space<vmem>>, vector<2x128xf32>
    tpu.vector_store %arg7[%c0_36, %c0_37], %78 {strides = array<i32>} : memref<2x128xf32, #tpu.memory_space<vmem>>, vector<2x128xf32>,
    %c0_38 = arith.constant 0 : index
    %c0_39 = arith.constant 0 : index
    %82 = vector.load %arg6[%c0_38, %c0_39] : memref<2x128xf32, #tpu.memory_space<vmem>>, vector<2x128xf32>
    tpu.vector_store %arg6[%c0_38, %c0_39], %80 {strides = array<i32>} : memref<2x128xf32, #tpu.memory_space<vmem>>, vector<2x128xf32>,
    %83 = vector.extract_strided_slice %80 {offsets = [0, 96], sizes = [2, 32], strides = [1, 1]} : vector<2x128xf32> to vector<2x32xf32>
    %c3_i32_40 = arith.constant 3 : i32
    %84 = arith.subi %c1_i32, %c3_i32_40 : i32
    %c0_i32_41 = arith.constant 0 : i32
    %85 = arith.maxsi %84, %c0_i32_41 : i32
    %86 = arith.index_cast %85 : i32 to index
    %c0_42 = arith.constant 0 : index
    %c0_43 = arith.constant 0 : index
    %87 = vector.load %arg8[%86, %c0_42, %c0_43] : memref<8x2x32xf32, #tpu.memory_space<vmem>>, vector<1x2x32xf32>
    %88 = vector.shape_cast %87 : vector<1x2x32xf32> to vector<2x32xf32>
    %89 = vector.shape_cast %83 : vector<2x32xf32> to vector<1x2x32xf32>
    tpu.vector_store %arg8[%86, %c0_42, %c0_43], %89 {strides = array<i32>} : memref<8x2x32xf32, #tpu.memory_space<vmem>>, vector<1x2x32xf32>,
    %c2_i32 = arith.constant 2 : i32
    %c7_i32_44 = arith.constant 7 : i32
    %90 = arith.minsi %c2_i32, %c7_i32_44 : i32
    %91 = arith.index_cast %90 : i32 to index
    %c0_45 = arith.constant 0 : index
    %c0_46 = arith.constant 0 : index
    %92 = vector.load %arg1[%91, %c0_45, %c0_46] : memref<8x2x512xf32, #tpu.memory_space<vmem>>, vector<1x2x512xf32>
    %93 = vector.shape_cast %92 : vector<1x2x512xf32> to vector<2x512xf32>
    %c0_47 = arith.constant 0 : index
    %c0_48 = arith.constant 0 : index
    %94 = vector.load %arg6[%c0_47, %c0_48] : memref<2x128xf32, #tpu.memory_space<vmem>>, vector<2x128xf32>
    %c0_49 = arith.constant 0 : index
    %c0_50 = arith.constant 0 : index
    %95 = vector.load %arg2[%c0_49, %c0_50] : memref<128x512xf32, #tpu.memory_space<vmem>>, vector<128x512xf32>
    %cst_51 = arith.constant dense<0.000000e+00> : vector<2x512xf32>
    %96 = tpu.matmul %94, %95, %cst_51 {dimension_numbers = #tpu.dot_dimension_numbers<[1], [0], [0], [1], [0, 0, 1, 1], [], []>} : vector<2x128xf32>, vector<128x512xf32>, vector<2x512xf32> -> vector<2x512xf32>
    %97 = arith.addf %93, %96 : vector<2x512xf32>
    %98 = vector.extract_strided_slice %97 {offsets = [0, 0], sizes = [2, 128], strides = [1, 1]} : vector<2x512xf32> to vector<2x128xf32>
    %99 = arith.negf %98 : vector<2x128xf32>
    %100 = math.exp %99 : vector<2x128xf32>
    %cst_52 = arith.constant 1.000000e+00 : f32
    %101 = vector.broadcast %cst_52 : f32 to vector<2x128xf32>
    %102 = arith.addf %101, %100 : vector<2x128xf32>
    %103 = arith.divf %101, %102 : vector<2x128xf32>
    %104 = vector.extract_strided_slice %97 {offsets = [0, 128], sizes = [2, 128], strides = [1, 1]} : vector<2x512xf32> to vector<2x128xf32>
    %105 = arith.negf %104 : vector<2x128xf32>
    %106 = math.exp %105 : vector<2x128xf32>
    %cst_53 = arith.constant 1.000000e+00 : f32
    %107 = vector.broadcast %cst_53 : f32 to vector<2x128xf32>
    %108 = arith.addf %107, %106 : vector<2x128xf32>
    %109 = arith.divf %107, %108 : vector<2x128xf32>
    %110 = vector.extract_strided_slice %97 {offsets = [0, 256], sizes = [2, 128], strides = [1, 1]} : vector<2x512xf32> to vector<2x128xf32>
    %111 = math.tanh %110 : vector<2x128xf32>
    %112 = vector.extract_strided_slice %97 {offsets = [0, 384], sizes = [2, 128], strides = [1, 1]} : vector<2x512xf32> to vector<2x128xf32>
    %113 = arith.negf %112 : vector<2x128xf32>
    %114 = math.exp %113 : vector<2x128xf32>
    %cst_54 = arith.constant 1.000000e+00 : f32
    %115 = vector.broadcast %cst_54 : f32 to vector<2x128xf32>
    %116 = arith.addf %115, %114 : vector<2x128xf32>
    %117 = arith.divf %115, %116 : vector<2x128xf32>
    %c0_55 = arith.constant 0 : index
    %c0_56 = arith.constant 0 : index
    %118 = vector.load %arg7[%c0_55, %c0_56] : memref<2x128xf32, #tpu.memory_space<vmem>>, vector<2x128xf32>
    %119 = arith.mulf %109, %118 : vector<2x128xf32>
    %120 = arith.mulf %103, %111 : vector<2x128xf32>
    %121 = arith.addf %119, %120 : vector<2x128xf32>
    %122 = math.tanh %121 : vector<2x128xf32>
    %123 = arith.mulf %117, %122 : vector<2x128xf32>
    %c0_57 = arith.constant 0 : index
    %c0_58 = arith.constant 0 : index
    %124 = vector.load %arg7[%c0_57, %c0_58] : memref<2x128xf32, #tpu.memory_space<vmem>>, vector<2x128xf32>
    tpu.vector_store %arg7[%c0_57, %c0_58], %121 {strides = array<i32>} : memref<2x128xf32, #tpu.memory_space<vmem>>, vector<2x128xf32>,
    %c0_59 = arith.constant 0 : index
    %c0_60 = arith.constant 0 : index
    %125 = vector.load %arg6[%c0_59, %c0_60] : memref<2x128xf32, #tpu.memory_space<vmem>>, vector<2x128xf32>
    tpu.vector_store %arg6[%c0_59, %c0_60], %123 {strides = array<i32>} : memref<2x128xf32, #tpu.memory_space<vmem>>, vector<2x128xf32>,
    %126 = vector.extract_strided_slice %123 {offsets = [0, 96], sizes = [2, 32], strides = [1, 1]} : vector<2x128xf32> to vector<2x32xf32>
    %c3_i32_61 = arith.constant 3 : i32
    %127 = arith.subi %c2_i32, %c3_i32_61 : i32
    %c0_i32_62 = arith.constant 0 : i32
    %128 = arith.maxsi %127, %c0_i32_62 : i32
    %129 = arith.index_cast %128 : i32 to index
    %c0_63 = arith.constant 0 : index
    %c0_64 = arith.constant 0 : index
    %130 = vector.load %arg8[%129, %c0_63, %c0_64] : memref<8x2x32xf32, #tpu.memory_space<vmem>>, vector<1x2x32xf32>
    %131 = vector.shape_cast %130 : vector<1x2x32xf32> to vector<2x32xf32>
    %132 = vector.shape_cast %126 : vector<2x32xf32> to vector<1x2x32xf32>
    tpu.vector_store %arg8[%129, %c0_63, %c0_64], %132 {strides = array<i32>} : memref<8x2x32xf32, #tpu.memory_space<vmem>>, vector<1x2x32xf32>,
    %c3_i32_65 = arith.constant 3 : i32
    %c7_i32_66 = arith.constant 7 : i32
    %133 = arith.minsi %c3_i32_65, %c7_i32_66 : i32
    %134 = arith.index_cast %133 : i32 to index
    %c0_67 = arith.constant 0 : index
    %c0_68 = arith.constant 0 : index
    %135 = vector.load %arg1[%134, %c0_67, %c0_68] : memref<8x2x512xf32, #tpu.memory_space<vmem>>, vector<1x2x512xf32>
    %136 = vector.shape_cast %135 : vector<1x2x512xf32> to vector<2x512xf32>
    %c0_69 = arith.constant 0 : index
    %c0_70 = arith.constant 0 : index
    %137 = vector.load %arg6[%c0_69, %c0_70] : memref<2x128xf32, #tpu.memory_space<vmem>>, vector<2x128xf32>
    %c0_71 = arith.constant 0 : index
    %c0_72 = arith.constant 0 : index
    %138 = vector.load %arg2[%c0_71, %c0_72] : memref<128x512xf32, #tpu.memory_space<vmem>>, vector<128x512xf32>
    %cst_73 = arith.constant dense<0.000000e+00> : vector<2x512xf32>
    %139 = tpu.matmul %137, %138, %cst_73 {dimension_numbers = #tpu.dot_dimension_numbers<[1], [0], [0], [1], [0, 0, 1, 1], [], []>} : vector<2x128xf32>, vector<128x512xf32>, vector<2x512xf32> -> vector<2x512xf32>
    %140 = arith.addf %136, %139 : vector<2x512xf32>
    %141 = vector.extract_strided_slice %140 {offsets = [0, 0], sizes = [2, 128], strides = [1, 1]} : vector<2x512xf32> to vector<2x128xf32>
    %142 = arith.negf %141 : vector<2x128xf32>
    %143 = math.exp %142 : vector<2x128xf32>
    %cst_74 = arith.constant 1.000000e+00 : f32
    %144 = vector.broadcast %cst_74 : f32 to vector<2x128xf32>
    %145 = arith.addf %144, %143 : vector<2x128xf32>
    %146 = arith.divf %144, %145 : vector<2x128xf32>
    %147 = vector.extract_strided_slice %140 {offsets = [0, 128], sizes = [2, 128], strides = [1, 1]} : vector<2x512xf32> to vector<2x128xf32>
    %148 = arith.negf %147 : vector<2x128xf32>
    %149 = math.exp %148 : vector<2x128xf32>
    %cst_75 = arith.constant 1.000000e+00 : f32
    %150 = vector.broadcast %cst_75 : f32 to vector<2x128xf32>
    %151 = arith.addf %150, %149 : vector<2x128xf32>
    %152 = arith.divf %150, %151 : vector<2x128xf32>
    %153 = vector.extract_strided_slice %140 {offsets = [0, 256], sizes = [2, 128], strides = [1, 1]} : vector<2x512xf32> to vector<2x128xf32>
    %154 = math.tanh %153 : vector<2x128xf32>
    %155 = vector.extract_strided_slice %140 {offsets = [0, 384], sizes = [2, 128], strides = [1, 1]} : vector<2x512xf32> to vector<2x128xf32>
    %156 = arith.negf %155 : vector<2x128xf32>
    %157 = math.exp %156 : vector<2x128xf32>
    %cst_76 = arith.constant 1.000000e+00 : f32
    %158 = vector.broadcast %cst_76 : f32 to vector<2x128xf32>
    %159 = arith.addf %158, %157 : vector<2x128xf32>
    %160 = arith.divf %158, %159 : vector<2x128xf32>
    %c0_77 = arith.constant 0 : index
    %c0_78 = arith.constant 0 : index
    %161 = vector.load %arg7[%c0_77, %c0_78] : memref<2x128xf32, #tpu.memory_space<vmem>>, vector<2x128xf32>
    %162 = arith.mulf %152, %161 : vector<2x128xf32>
    %163 = arith.mulf %146, %154 : vector<2x128xf32>
    %164 = arith.addf %162, %163 : vector<2x128xf32>
    %165 = math.tanh %164 : vector<2x128xf32>
    %166 = arith.mulf %160, %165 : vector<2x128xf32>
    %c0_79 = arith.constant 0 : index
    %c0_80 = arith.constant 0 : index
    %167 = vector.load %arg7[%c0_79, %c0_80] : memref<2x128xf32, #tpu.memory_space<vmem>>, vector<2x128xf32>
    tpu.vector_store %arg7[%c0_79, %c0_80], %164 {strides = array<i32>} : memref<2x128xf32, #tpu.memory_space<vmem>>, vector<2x128xf32>,
    %c0_81 = arith.constant 0 : index
    %c0_82 = arith.constant 0 : index
    %168 = vector.load %arg6[%c0_81, %c0_82] : memref<2x128xf32, #tpu.memory_space<vmem>>, vector<2x128xf32>
    tpu.vector_store %arg6[%c0_81, %c0_82], %166 {strides = array<i32>} : memref<2x128xf32, #tpu.memory_space<vmem>>, vector<2x128xf32>,
    %169 = vector.extract_strided_slice %166 {offsets = [0, 96], sizes = [2, 32], strides = [1, 1]} : vector<2x128xf32> to vector<2x32xf32>
    %c3_i32_83 = arith.constant 3 : i32
    %170 = arith.subi %c3_i32_65, %c3_i32_83 : i32
    %c0_i32_84 = arith.constant 0 : i32
    %171 = arith.maxsi %170, %c0_i32_84 : i32
    %172 = arith.index_cast %171 : i32 to index
    %c0_85 = arith.constant 0 : index
    %c0_86 = arith.constant 0 : index
    %173 = vector.load %arg8[%172, %c0_85, %c0_86] : memref<8x2x32xf32, #tpu.memory_space<vmem>>, vector<1x2x32xf32>
    %174 = vector.shape_cast %173 : vector<1x2x32xf32> to vector<2x32xf32>
    %175 = vector.shape_cast %169 : vector<2x32xf32> to vector<1x2x32xf32>
    tpu.vector_store %arg8[%172, %c0_85, %c0_86], %175 {strides = array<i32>} : memref<8x2x32xf32, #tpu.memory_space<vmem>>, vector<1x2x32xf32>,
    %c4_i32 = arith.constant 4 : i32
    %c7_i32_87 = arith.constant 7 : i32
    %176 = arith.minsi %c4_i32, %c7_i32_87 : i32
    %177 = arith.index_cast %176 : i32 to index
    %c0_88 = arith.constant 0 : index
    %c0_89 = arith.constant 0 : index
    %178 = vector.load %arg1[%177, %c0_88, %c0_89] : memref<8x2x512xf32, #tpu.memory_space<vmem>>, vector<1x2x512xf32>
    %179 = vector.shape_cast %178 : vector<1x2x512xf32> to vector<2x512xf32>
    %c0_90 = arith.constant 0 : index
    %c0_91 = arith.constant 0 : index
    %180 = vector.load %arg6[%c0_90, %c0_91] : memref<2x128xf32, #tpu.memory_space<vmem>>, vector<2x128xf32>
    %c0_92 = arith.constant 0 : index
    %c0_93 = arith.constant 0 : index
    %181 = vector.load %arg2[%c0_92, %c0_93] : memref<128x512xf32, #tpu.memory_space<vmem>>, vector<128x512xf32>
    %cst_94 = arith.constant dense<0.000000e+00> : vector<2x512xf32>
    %182 = tpu.matmul %180, %181, %cst_94 {dimension_numbers = #tpu.dot_dimension_numbers<[1], [0], [0], [1], [0, 0, 1, 1], [], []>} : vector<2x128xf32>, vector<128x512xf32>, vector<2x512xf32> -> vector<2x512xf32>
    %183 = arith.addf %179, %182 : vector<2x512xf32>
    %184 = vector.extract_strided_slice %183 {offsets = [0, 0], sizes = [2, 128], strides = [1, 1]} : vector<2x512xf32> to vector<2x128xf32>
    %185 = arith.negf %184 : vector<2x128xf32>
    %186 = math.exp %185 : vector<2x128xf32>
    %cst_95 = arith.constant 1.000000e+00 : f32
    %187 = vector.broadcast %cst_95 : f32 to vector<2x128xf32>
    %188 = arith.addf %187, %186 : vector<2x128xf32>
    %189 = arith.divf %187, %188 : vector<2x128xf32>
    %190 = vector.extract_strided_slice %183 {offsets = [0, 128], sizes = [2, 128], strides = [1, 1]} : vector<2x512xf32> to vector<2x128xf32>
    %191 = arith.negf %190 : vector<2x128xf32>
    %192 = math.exp %191 : vector<2x128xf32>
    %cst_96 = arith.constant 1.000000e+00 : f32
    %193 = vector.broadcast %cst_96 : f32 to vector<2x128xf32>
    %194 = arith.addf %193, %192 : vector<2x128xf32>
    %195 = arith.divf %193, %194 : vector<2x128xf32>
    %196 = vector.extract_strided_slice %183 {offsets = [0, 256], sizes = [2, 128], strides = [1, 1]} : vector<2x512xf32> to vector<2x128xf32>
    %197 = math.tanh %196 : vector<2x128xf32>
    %198 = vector.extract_strided_slice %183 {offsets = [0, 384], sizes = [2, 128], strides = [1, 1]} : vector<2x512xf32> to vector<2x128xf32>
    %199 = arith.negf %198 : vector<2x128xf32>
    %200 = math.exp %199 : vector<2x128xf32>
    %cst_97 = arith.constant 1.000000e+00 : f32
    %201 = vector.broadcast %cst_97 : f32 to vector<2x128xf32>
    %202 = arith.addf %201, %200 : vector<2x128xf32>
    %203 = arith.divf %201, %202 : vector<2x128xf32>
    %c0_98 = arith.constant 0 : index
    %c0_99 = arith.constant 0 : index
    %204 = vector.load %arg7[%c0_98, %c0_99] : memref<2x128xf32, #tpu.memory_space<vmem>>, vector<2x128xf32>
    %205 = arith.mulf %195, %204 : vector<2x128xf32>
    %206 = arith.mulf %189, %197 : vector<2x128xf32>
    %207 = arith.addf %205, %206 : vector<2x128xf32>
    %208 = math.tanh %207 : vector<2x128xf32>
    %209 = arith.mulf %203, %208 : vector<2x128xf32>
    %c0_100 = arith.constant 0 : index
    %c0_101 = arith.constant 0 : index
    %210 = vector.load %arg7[%c0_100, %c0_101] : memref<2x128xf32, #tpu.memory_space<vmem>>, vector<2x128xf32>
    tpu.vector_store %arg7[%c0_100, %c0_101], %207 {strides = array<i32>} : memref<2x128xf32, #tpu.memory_space<vmem>>, vector<2x128xf32>,
    %c0_102 = arith.constant 0 : index
    %c0_103 = arith.constant 0 : index
    %211 = vector.load %arg6[%c0_102, %c0_103] : memref<2x128xf32, #tpu.memory_space<vmem>>, vector<2x128xf32>
    tpu.vector_store %arg6[%c0_102, %c0_103], %209 {strides = array<i32>} : memref<2x128xf32, #tpu.memory_space<vmem>>, vector<2x128xf32>,
    %212 = vector.extract_strided_slice %209 {offsets = [0, 96], sizes = [2, 32], strides = [1, 1]} : vector<2x128xf32> to vector<2x32xf32>
    %c3_i32_104 = arith.constant 3 : i32
    %213 = arith.subi %c4_i32, %c3_i32_104 : i32
    %c0_i32_105 = arith.constant 0 : i32
    %214 = arith.maxsi %213, %c0_i32_105 : i32
    %215 = arith.index_cast %214 : i32 to index
    %c0_106 = arith.constant 0 : index
    %c0_107 = arith.constant 0 : index
    %216 = vector.load %arg8[%215, %c0_106, %c0_107] : memref<8x2x32xf32, #tpu.memory_space<vmem>>, vector<1x2x32xf32>
    %217 = vector.shape_cast %216 : vector<1x2x32xf32> to vector<2x32xf32>
    %218 = vector.shape_cast %212 : vector<2x32xf32> to vector<1x2x32xf32>
    tpu.vector_store %arg8[%215, %c0_106, %c0_107], %218 {strides = array<i32>} : memref<8x2x32xf32, #tpu.memory_space<vmem>>, vector<1x2x32xf32>,
    %c5_i32 = arith.constant 5 : i32
    %c7_i32_108 = arith.constant 7 : i32
    %219 = arith.minsi %c5_i32, %c7_i32_108 : i32
    %220 = arith.index_cast %219 : i32 to index
    %c0_109 = arith.constant 0 : index
    %c0_110 = arith.constant 0 : index
    %221 = vector.load %arg1[%220, %c0_109, %c0_110] : memref<8x2x512xf32, #tpu.memory_space<vmem>>, vector<1x2x512xf32>
    %222 = vector.shape_cast %221 : vector<1x2x512xf32> to vector<2x512xf32>
    %c0_111 = arith.constant 0 : index
    %c0_112 = arith.constant 0 : index
    %223 = vector.load %arg6[%c0_111, %c0_112] : memref<2x128xf32, #tpu.memory_space<vmem>>, vector<2x128xf32>
    %c0_113 = arith.constant 0 : index
    %c0_114 = arith.constant 0 : index
    %224 = vector.load %arg2[%c0_113, %c0_114] : memref<128x512xf32, #tpu.memory_space<vmem>>, vector<128x512xf32>
    %cst_115 = arith.constant dense<0.000000e+00> : vector<2x512xf32>
    %225 = tpu.matmul %223, %224, %cst_115 {dimension_numbers = #tpu.dot_dimension_numbers<[1], [0], [0], [1], [0, 0, 1, 1], [], []>} : vector<2x128xf32>, vector<128x512xf32>, vector<2x512xf32> -> vector<2x512xf32>
    %226 = arith.addf %222, %225 : vector<2x512xf32>
    %227 = vector.extract_strided_slice %226 {offsets = [0, 0], sizes = [2, 128], strides = [1, 1]} : vector<2x512xf32> to vector<2x128xf32>
    %228 = arith.negf %227 : vector<2x128xf32>
    %229 = math.exp %228 : vector<2x128xf32>
    %cst_116 = arith.constant 1.000000e+00 : f32
    %230 = vector.broadcast %cst_116 : f32 to vector<2x128xf32>
    %231 = arith.addf %230, %229 : vector<2x128xf32>
    %232 = arith.divf %230, %231 : vector<2x128xf32>
    %233 = vector.extract_strided_slice %226 {offsets = [0, 128], sizes = [2, 128], strides = [1, 1]} : vector<2x512xf32> to vector<2x128xf32>
    %234 = arith.negf %233 : vector<2x128xf32>
    %235 = math.exp %234 : vector<2x128xf32>
    %cst_117 = arith.constant 1.000000e+00 : f32
    %236 = vector.broadcast %cst_117 : f32 to vector<2x128xf32>
    %237 = arith.addf %236, %235 : vector<2x128xf32>
    %238 = arith.divf %236, %237 : vector<2x128xf32>
    %239 = vector.extract_strided_slice %226 {offsets = [0, 256], sizes = [2, 128], strides = [1, 1]} : vector<2x512xf32> to vector<2x128xf32>
    %240 = math.tanh %239 : vector<2x128xf32>
    %241 = vector.extract_strided_slice %226 {offsets = [0, 384], sizes = [2, 128], strides = [1, 1]} : vector<2x512xf32> to vector<2x128xf32>
    %242 = arith.negf %241 : vector<2x128xf32>
    %243 = math.exp %242 : vector<2x128xf32>
    %cst_118 = arith.constant 1.000000e+00 : f32
    %244 = vector.broadcast %cst_118 : f32 to vector<2x128xf32>
    %245 = arith.addf %244, %243 : vector<2x128xf32>
    %246 = arith.divf %244, %245 : vector<2x128xf32>
    %c0_119 = arith.constant 0 : index
    %c0_120 = arith.constant 0 : index
    %247 = vector.load %arg7[%c0_119, %c0_120] : memref<2x128xf32, #tpu.memory_space<vmem>>, vector<2x128xf32>
    %248 = arith.mulf %238, %247 : vector<2x128xf32>
    %249 = arith.mulf %232, %240 : vector<2x128xf32>
    %250 = arith.addf %248, %249 : vector<2x128xf32>
    %251 = math.tanh %250 : vector<2x128xf32>
    %252 = arith.mulf %246, %251 : vector<2x128xf32>
    %c0_121 = arith.constant 0 : index
    %c0_122 = arith.constant 0 : index
    %253 = vector.load %arg7[%c0_121, %c0_122] : memref<2x128xf32, #tpu.memory_space<vmem>>, vector<2x128xf32>
    tpu.vector_store %arg7[%c0_121, %c0_122], %250 {strides = array<i32>} : memref<2x128xf32, #tpu.memory_space<vmem>>, vector<2x128xf32>,
    %c0_123 = arith.constant 0 : index
    %c0_124 = arith.constant 0 : index
    %254 = vector.load %arg6[%c0_123, %c0_124] : memref<2x128xf32, #tpu.memory_space<vmem>>, vector<2x128xf32>
    tpu.vector_store %arg6[%c0_123, %c0_124], %252 {strides = array<i32>} : memref<2x128xf32, #tpu.memory_space<vmem>>, vector<2x128xf32>,
    %255 = vector.extract_strided_slice %252 {offsets = [0, 96], sizes = [2, 32], strides = [1, 1]} : vector<2x128xf32> to vector<2x32xf32>
    %c3_i32_125 = arith.constant 3 : i32
    %256 = arith.subi %c5_i32, %c3_i32_125 : i32
    %c0_i32_126 = arith.constant 0 : i32
    %257 = arith.maxsi %256, %c0_i32_126 : i32
    %258 = arith.index_cast %257 : i32 to index
    %c0_127 = arith.constant 0 : index
    %c0_128 = arith.constant 0 : index
    %259 = vector.load %arg8[%258, %c0_127, %c0_128] : memref<8x2x32xf32, #tpu.memory_space<vmem>>, vector<1x2x32xf32>
    %260 = vector.shape_cast %259 : vector<1x2x32xf32> to vector<2x32xf32>
    %261 = vector.shape_cast %255 : vector<2x32xf32> to vector<1x2x32xf32>
    tpu.vector_store %arg8[%258, %c0_127, %c0_128], %261 {strides = array<i32>} : memref<8x2x32xf32, #tpu.memory_space<vmem>>, vector<1x2x32xf32>,
    %c6_i32 = arith.constant 6 : i32
    %c7_i32_129 = arith.constant 7 : i32
    %262 = arith.minsi %c6_i32, %c7_i32_129 : i32
    %263 = arith.index_cast %262 : i32 to index
    %c0_130 = arith.constant 0 : index
    %c0_131 = arith.constant 0 : index
    %264 = vector.load %arg1[%263, %c0_130, %c0_131] : memref<8x2x512xf32, #tpu.memory_space<vmem>>, vector<1x2x512xf32>
    %265 = vector.shape_cast %264 : vector<1x2x512xf32> to vector<2x512xf32>
    %c0_132 = arith.constant 0 : index
    %c0_133 = arith.constant 0 : index
    %266 = vector.load %arg6[%c0_132, %c0_133] : memref<2x128xf32, #tpu.memory_space<vmem>>, vector<2x128xf32>
    %c0_134 = arith.constant 0 : index
    %c0_135 = arith.constant 0 : index
    %267 = vector.load %arg2[%c0_134, %c0_135] : memref<128x512xf32, #tpu.memory_space<vmem>>, vector<128x512xf32>
    %cst_136 = arith.constant dense<0.000000e+00> : vector<2x512xf32>
    %268 = tpu.matmul %266, %267, %cst_136 {dimension_numbers = #tpu.dot_dimension_numbers<[1], [0], [0], [1], [0, 0, 1, 1], [], []>} : vector<2x128xf32>, vector<128x512xf32>, vector<2x512xf32> -> vector<2x512xf32>
    %269 = arith.addf %265, %268 : vector<2x512xf32>
    %270 = vector.extract_strided_slice %269 {offsets = [0, 0], sizes = [2, 128], strides = [1, 1]} : vector<2x512xf32> to vector<2x128xf32>
    %271 = arith.negf %270 : vector<2x128xf32>
    %272 = math.exp %271 : vector<2x128xf32>
    %cst_137 = arith.constant 1.000000e+00 : f32
    %273 = vector.broadcast %cst_137 : f32 to vector<2x128xf32>
    %274 = arith.addf %273, %272 : vector<2x128xf32>
    %275 = arith.divf %273, %274 : vector<2x128xf32>
    %276 = vector.extract_strided_slice %269 {offsets = [0, 128], sizes = [2, 128], strides = [1, 1]} : vector<2x512xf32> to vector<2x128xf32>
    %277 = arith.negf %276 : vector<2x128xf32>
    %278 = math.exp %277 : vector<2x128xf32>
    %cst_138 = arith.constant 1.000000e+00 : f32
    %279 = vector.broadcast %cst_138 : f32 to vector<2x128xf32>
    %280 = arith.addf %279, %278 : vector<2x128xf32>
    %281 = arith.divf %279, %280 : vector<2x128xf32>
    %282 = vector.extract_strided_slice %269 {offsets = [0, 256], sizes = [2, 128], strides = [1, 1]} : vector<2x512xf32> to vector<2x128xf32>
    %283 = math.tanh %282 : vector<2x128xf32>
    %284 = vector.extract_strided_slice %269 {offsets = [0, 384], sizes = [2, 128], strides = [1, 1]} : vector<2x512xf32> to vector<2x128xf32>
    %285 = arith.negf %284 : vector<2x128xf32>
    %286 = math.exp %285 : vector<2x128xf32>
    %cst_139 = arith.constant 1.000000e+00 : f32
    %287 = vector.broadcast %cst_139 : f32 to vector<2x128xf32>
    %288 = arith.addf %287, %286 : vector<2x128xf32>
    %289 = arith.divf %287, %288 : vector<2x128xf32>
    %c0_140 = arith.constant 0 : index
    %c0_141 = arith.constant 0 : index
    %290 = vector.load %arg7[%c0_140, %c0_141] : memref<2x128xf32, #tpu.memory_space<vmem>>, vector<2x128xf32>
    %291 = arith.mulf %281, %290 : vector<2x128xf32>
    %292 = arith.mulf %275, %283 : vector<2x128xf32>
    %293 = arith.addf %291, %292 : vector<2x128xf32>
    %294 = math.tanh %293 : vector<2x128xf32>
    %295 = arith.mulf %289, %294 : vector<2x128xf32>
    %c0_142 = arith.constant 0 : index
    %c0_143 = arith.constant 0 : index
    %296 = vector.load %arg7[%c0_142, %c0_143] : memref<2x128xf32, #tpu.memory_space<vmem>>, vector<2x128xf32>
    tpu.vector_store %arg7[%c0_142, %c0_143], %293 {strides = array<i32>} : memref<2x128xf32, #tpu.memory_space<vmem>>, vector<2x128xf32>,
    %c0_144 = arith.constant 0 : index
    %c0_145 = arith.constant 0 : index
    %297 = vector.load %arg6[%c0_144, %c0_145] : memref<2x128xf32, #tpu.memory_space<vmem>>, vector<2x128xf32>
    tpu.vector_store %arg6[%c0_144, %c0_145], %295 {strides = array<i32>} : memref<2x128xf32, #tpu.memory_space<vmem>>, vector<2x128xf32>,
    %298 = vector.extract_strided_slice %295 {offsets = [0, 96], sizes = [2, 32], strides = [1, 1]} : vector<2x128xf32> to vector<2x32xf32>
    %c3_i32_146 = arith.constant 3 : i32
    %299 = arith.subi %c6_i32, %c3_i32_146 : i32
    %c0_i32_147 = arith.constant 0 : i32
    %300 = arith.maxsi %299, %c0_i32_147 : i32
    %301 = arith.index_cast %300 : i32 to index
    %c0_148 = arith.constant 0 : index
    %c0_149 = arith.constant 0 : index
    %302 = vector.load %arg8[%301, %c0_148, %c0_149] : memref<8x2x32xf32, #tpu.memory_space<vmem>>, vector<1x2x32xf32>
    %303 = vector.shape_cast %302 : vector<1x2x32xf32> to vector<2x32xf32>
    %304 = vector.shape_cast %298 : vector<2x32xf32> to vector<1x2x32xf32>
    tpu.vector_store %arg8[%301, %c0_148, %c0_149], %304 {strides = array<i32>} : memref<8x2x32xf32, #tpu.memory_space<vmem>>, vector<1x2x32xf32>,
    %c7_i32_150 = arith.constant 7 : i32
    %c7_i32_151 = arith.constant 7 : i32
    %305 = arith.minsi %c7_i32_150, %c7_i32_151 : i32
    %306 = arith.index_cast %305 : i32 to index
    %c0_152 = arith.constant 0 : index
    %c0_153 = arith.constant 0 : index
    %307 = vector.load %arg1[%306, %c0_152, %c0_153] : memref<8x2x512xf32, #tpu.memory_space<vmem>>, vector<1x2x512xf32>
    %308 = vector.shape_cast %307 : vector<1x2x512xf32> to vector<2x512xf32>
    %c0_154 = arith.constant 0 : index
    %c0_155 = arith.constant 0 : index
    %309 = vector.load %arg6[%c0_154, %c0_155] : memref<2x128xf32, #tpu.memory_space<vmem>>, vector<2x128xf32>
    %c0_156 = arith.constant 0 : index
    %c0_157 = arith.constant 0 : index
    %310 = vector.load %arg2[%c0_156, %c0_157] : memref<128x512xf32, #tpu.memory_space<vmem>>, vector<128x512xf32>
    %cst_158 = arith.constant dense<0.000000e+00> : vector<2x512xf32>
    %311 = tpu.matmul %309, %310, %cst_158 {dimension_numbers = #tpu.dot_dimension_numbers<[1], [0], [0], [1], [0, 0, 1, 1], [], []>} : vector<2x128xf32>, vector<128x512xf32>, vector<2x512xf32> -> vector<2x512xf32>
    %312 = arith.addf %308, %311 : vector<2x512xf32>
    %313 = vector.extract_strided_slice %312 {offsets = [0, 0], sizes = [2, 128], strides = [1, 1]} : vector<2x512xf32> to vector<2x128xf32>
    %314 = arith.negf %313 : vector<2x128xf32>
    %315 = math.exp %314 : vector<2x128xf32>
    %cst_159 = arith.constant 1.000000e+00 : f32
    %316 = vector.broadcast %cst_159 : f32 to vector<2x128xf32>
    %317 = arith.addf %316, %315 : vector<2x128xf32>
    %318 = arith.divf %316, %317 : vector<2x128xf32>
    %319 = vector.extract_strided_slice %312 {offsets = [0, 128], sizes = [2, 128], strides = [1, 1]} : vector<2x512xf32> to vector<2x128xf32>
    %320 = arith.negf %319 : vector<2x128xf32>
    %321 = math.exp %320 : vector<2x128xf32>
    %cst_160 = arith.constant 1.000000e+00 : f32
    %322 = vector.broadcast %cst_160 : f32 to vector<2x128xf32>
    %323 = arith.addf %322, %321 : vector<2x128xf32>
    %324 = arith.divf %322, %323 : vector<2x128xf32>
    %325 = vector.extract_strided_slice %312 {offsets = [0, 256], sizes = [2, 128], strides = [1, 1]} : vector<2x512xf32> to vector<2x128xf32>
    %326 = math.tanh %325 : vector<2x128xf32>
    %327 = vector.extract_strided_slice %312 {offsets = [0, 384], sizes = [2, 128], strides = [1, 1]} : vector<2x512xf32> to vector<2x128xf32>
    %328 = arith.negf %327 : vector<2x128xf32>
    %329 = math.exp %328 : vector<2x128xf32>
    %cst_161 = arith.constant 1.000000e+00 : f32
    %330 = vector.broadcast %cst_161 : f32 to vector<2x128xf32>
    %331 = arith.addf %330, %329 : vector<2x128xf32>
    %332 = arith.divf %330, %331 : vector<2x128xf32>
    %c0_162 = arith.constant 0 : index
    %c0_163 = arith.constant 0 : index
    %333 = vector.load %arg7[%c0_162, %c0_163] : memref<2x128xf32, #tpu.memory_space<vmem>>, vector<2x128xf32>
    %334 = arith.mulf %324, %333 : vector<2x128xf32>
    %335 = arith.mulf %318, %326 : vector<2x128xf32>
    %336 = arith.addf %334, %335 : vector<2x128xf32>
    %337 = math.tanh %336 : vector<2x128xf32>
    %338 = arith.mulf %332, %337 : vector<2x128xf32>
    %c0_164 = arith.constant 0 : index
    %c0_165 = arith.constant 0 : index
    %339 = vector.load %arg7[%c0_164, %c0_165] : memref<2x128xf32, #tpu.memory_space<vmem>>, vector<2x128xf32>
    tpu.vector_store %arg7[%c0_164, %c0_165], %336 {strides = array<i32>} : memref<2x128xf32, #tpu.memory_space<vmem>>, vector<2x128xf32>,
    %c0_166 = arith.constant 0 : index
    %c0_167 = arith.constant 0 : index
    %340 = vector.load %arg6[%c0_166, %c0_167] : memref<2x128xf32, #tpu.memory_space<vmem>>, vector<2x128xf32>
    tpu.vector_store %arg6[%c0_166, %c0_167], %338 {strides = array<i32>} : memref<2x128xf32, #tpu.memory_space<vmem>>, vector<2x128xf32>,
    %341 = vector.extract_strided_slice %338 {offsets = [0, 96], sizes = [2, 32], strides = [1, 1]} : vector<2x128xf32> to vector<2x32xf32>
    %c3_i32_168 = arith.constant 3 : i32
    %342 = arith.subi %c7_i32_150, %c3_i32_168 : i32
    %c0_i32_169 = arith.constant 0 : i32
    %343 = arith.maxsi %342, %c0_i32_169 : i32
    %344 = arith.index_cast %343 : i32 to index
    %c0_170 = arith.constant 0 : index
    %c0_171 = arith.constant 0 : index
    %345 = vector.load %arg8[%344, %c0_170, %c0_171] : memref<8x2x32xf32, #tpu.memory_space<vmem>>, vector<1x2x32xf32>
    %346 = vector.shape_cast %345 : vector<1x2x32xf32> to vector<2x32xf32>
    %347 = vector.shape_cast %341 : vector<2x32xf32> to vector<1x2x32xf32>
    tpu.vector_store %arg8[%344, %c0_170, %c0_171], %347 {strides = array<i32>} : memref<8x2x32xf32, #tpu.memory_space<vmem>>, vector<1x2x32xf32>,
    %c8_i32 = arith.constant 8 : i32
    %c7_i32_172 = arith.constant 7 : i32
    %348 = arith.minsi %c8_i32, %c7_i32_172 : i32
    %349 = arith.index_cast %348 : i32 to index
    %c0_173 = arith.constant 0 : index
    %c0_174 = arith.constant 0 : index
    %350 = vector.load %arg1[%349, %c0_173, %c0_174] : memref<8x2x512xf32, #tpu.memory_space<vmem>>, vector<1x2x512xf32>
    %351 = vector.shape_cast %350 : vector<1x2x512xf32> to vector<2x512xf32>
    %c0_175 = arith.constant 0 : index
    %c0_176 = arith.constant 0 : index
    %352 = vector.load %arg6[%c0_175, %c0_176] : memref<2x128xf32, #tpu.memory_space<vmem>>, vector<2x128xf32>
    %c0_177 = arith.constant 0 : index
    %c0_178 = arith.constant 0 : index
    %353 = vector.load %arg2[%c0_177, %c0_178] : memref<128x512xf32, #tpu.memory_space<vmem>>, vector<128x512xf32>
    %cst_179 = arith.constant dense<0.000000e+00> : vector<2x512xf32>
    %354 = tpu.matmul %352, %353, %cst_179 {dimension_numbers = #tpu.dot_dimension_numbers<[1], [0], [0], [1], [0, 0, 1, 1], [], []>} : vector<2x128xf32>, vector<128x512xf32>, vector<2x512xf32> -> vector<2x512xf32>
    %355 = arith.addf %351, %354 : vector<2x512xf32>
    %356 = vector.extract_strided_slice %355 {offsets = [0, 0], sizes = [2, 128], strides = [1, 1]} : vector<2x512xf32> to vector<2x128xf32>
    %357 = arith.negf %356 : vector<2x128xf32>
    %358 = math.exp %357 : vector<2x128xf32>
    %cst_180 = arith.constant 1.000000e+00 : f32
    %359 = vector.broadcast %cst_180 : f32 to vector<2x128xf32>
    %360 = arith.addf %359, %358 : vector<2x128xf32>
    %361 = arith.divf %359, %360 : vector<2x128xf32>
    %362 = vector.extract_strided_slice %355 {offsets = [0, 128], sizes = [2, 128], strides = [1, 1]} : vector<2x512xf32> to vector<2x128xf32>
    %363 = arith.negf %362 : vector<2x128xf32>
    %364 = math.exp %363 : vector<2x128xf32>
    %cst_181 = arith.constant 1.000000e+00 : f32
    %365 = vector.broadcast %cst_181 : f32 to vector<2x128xf32>
    %366 = arith.addf %365, %364 : vector<2x128xf32>
    %367 = arith.divf %365, %366 : vector<2x128xf32>
    %368 = vector.extract_strided_slice %355 {offsets = [0, 256], sizes = [2, 128], strides = [1, 1]} : vector<2x512xf32> to vector<2x128xf32>
    %369 = math.tanh %368 : vector<2x128xf32>
    %370 = vector.extract_strided_slice %355 {offsets = [0, 384], sizes = [2, 128], strides = [1, 1]} : vector<2x512xf32> to vector<2x128xf32>
    %371 = arith.negf %370 : vector<2x128xf32>
    %372 = math.exp %371 : vector<2x128xf32>
    %cst_182 = arith.constant 1.000000e+00 : f32
    %373 = vector.broadcast %cst_182 : f32 to vector<2x128xf32>
    %374 = arith.addf %373, %372 : vector<2x128xf32>
    %375 = arith.divf %373, %374 : vector<2x128xf32>
    %c0_183 = arith.constant 0 : index
    %c0_184 = arith.constant 0 : index
    %376 = vector.load %arg7[%c0_183, %c0_184] : memref<2x128xf32, #tpu.memory_space<vmem>>, vector<2x128xf32>
    %377 = arith.mulf %367, %376 : vector<2x128xf32>
    %378 = arith.mulf %361, %369 : vector<2x128xf32>
    %379 = arith.addf %377, %378 : vector<2x128xf32>
    %380 = math.tanh %379 : vector<2x128xf32>
    %381 = arith.mulf %375, %380 : vector<2x128xf32>
    %c0_185 = arith.constant 0 : index
    %c0_186 = arith.constant 0 : index
    %382 = vector.load %arg7[%c0_185, %c0_186] : memref<2x128xf32, #tpu.memory_space<vmem>>, vector<2x128xf32>
    tpu.vector_store %arg7[%c0_185, %c0_186], %379 {strides = array<i32>} : memref<2x128xf32, #tpu.memory_space<vmem>>, vector<2x128xf32>,
    %c0_187 = arith.constant 0 : index
    %c0_188 = arith.constant 0 : index
    %383 = vector.load %arg6[%c0_187, %c0_188] : memref<2x128xf32, #tpu.memory_space<vmem>>, vector<2x128xf32>
    tpu.vector_store %arg6[%c0_187, %c0_188], %381 {strides = array<i32>} : memref<2x128xf32, #tpu.memory_space<vmem>>, vector<2x128xf32>,
    %384 = vector.extract_strided_slice %381 {offsets = [0, 96], sizes = [2, 32], strides = [1, 1]} : vector<2x128xf32> to vector<2x32xf32>
    %c3_i32_189 = arith.constant 3 : i32
    %385 = arith.subi %c8_i32, %c3_i32_189 : i32
    %c0_i32_190 = arith.constant 0 : i32
    %386 = arith.maxsi %385, %c0_i32_190 : i32
    %387 = arith.index_cast %386 : i32 to index
    %c0_191 = arith.constant 0 : index
    %c0_192 = arith.constant 0 : index
    %388 = vector.load %arg8[%387, %c0_191, %c0_192] : memref<8x2x32xf32, #tpu.memory_space<vmem>>, vector<1x2x32xf32>
    %389 = vector.shape_cast %388 : vector<1x2x32xf32> to vector<2x32xf32>
    %390 = vector.shape_cast %384 : vector<2x32xf32> to vector<1x2x32xf32>
    tpu.vector_store %arg8[%387, %c0_191, %c0_192], %390 {strides = array<i32>} : memref<8x2x32xf32, #tpu.memory_space<vmem>>, vector<1x2x32xf32>,
    %c9_i32 = arith.constant 9 : i32
    %c7_i32_193 = arith.constant 7 : i32
    %391 = arith.minsi %c9_i32, %c7_i32_193 : i32
    %392 = arith.index_cast %391 : i32 to index
    %c0_194 = arith.constant 0 : index
    %c0_195 = arith.constant 0 : index
    %393 = vector.load %arg1[%392, %c0_194, %c0_195] : memref<8x2x512xf32, #tpu.memory_space<vmem>>, vector<1x2x512xf32>
    %394 = vector.shape_cast %393 : vector<1x2x512xf32> to vector<2x512xf32>
    %c0_196 = arith.constant 0 : index
    %c0_197 = arith.constant 0 : index
    %395 = vector.load %arg6[%c0_196, %c0_197] : memref<2x128xf32, #tpu.memory_space<vmem>>, vector<2x128xf32>
    %c0_198 = arith.constant 0 : index
    %c0_199 = arith.constant 0 : index
    %396 = vector.load %arg2[%c0_198, %c0_199] : memref<128x512xf32, #tpu.memory_space<vmem>>, vector<128x512xf32>
    %cst_200 = arith.constant dense<0.000000e+00> : vector<2x512xf32>
    %397 = tpu.matmul %395, %396, %cst_200 {dimension_numbers = #tpu.dot_dimension_numbers<[1], [0], [0], [1], [0, 0, 1, 1], [], []>} : vector<2x128xf32>, vector<128x512xf32>, vector<2x512xf32> -> vector<2x512xf32>
    %398 = arith.addf %394, %397 : vector<2x512xf32>
    %399 = vector.extract_strided_slice %398 {offsets = [0, 0], sizes = [2, 128], strides = [1, 1]} : vector<2x512xf32> to vector<2x128xf32>
    %400 = arith.negf %399 : vector<2x128xf32>
    %401 = math.exp %400 : vector<2x128xf32>
    %cst_201 = arith.constant 1.000000e+00 : f32
    %402 = vector.broadcast %cst_201 : f32 to vector<2x128xf32>
    %403 = arith.addf %402, %401 : vector<2x128xf32>
    %404 = arith.divf %402, %403 : vector<2x128xf32>
    %405 = vector.extract_strided_slice %398 {offsets = [0, 128], sizes = [2, 128], strides = [1, 1]} : vector<2x512xf32> to vector<2x128xf32>
    %406 = arith.negf %405 : vector<2x128xf32>
    %407 = math.exp %406 : vector<2x128xf32>
    %cst_202 = arith.constant 1.000000e+00 : f32
    %408 = vector.broadcast %cst_202 : f32 to vector<2x128xf32>
    %409 = arith.addf %408, %407 : vector<2x128xf32>
    %410 = arith.divf %408, %409 : vector<2x128xf32>
    %411 = vector.extract_strided_slice %398 {offsets = [0, 256], sizes = [2, 128], strides = [1, 1]} : vector<2x512xf32> to vector<2x128xf32>
    %412 = math.tanh %411 : vector<2x128xf32>
    %413 = vector.extract_strided_slice %398 {offsets = [0, 384], sizes = [2, 128], strides = [1, 1]} : vector<2x512xf32> to vector<2x128xf32>
    %414 = arith.negf %413 : vector<2x128xf32>
    %415 = math.exp %414 : vector<2x128xf32>
    %cst_203 = arith.constant 1.000000e+00 : f32
    %416 = vector.broadcast %cst_203 : f32 to vector<2x128xf32>
    %417 = arith.addf %416, %415 : vector<2x128xf32>
    %418 = arith.divf %416, %417 : vector<2x128xf32>
    %c0_204 = arith.constant 0 : index
    %c0_205 = arith.constant 0 : index
    %419 = vector.load %arg7[%c0_204, %c0_205] : memref<2x128xf32, #tpu.memory_space<vmem>>, vector<2x128xf32>
    %420 = arith.mulf %410, %419 : vector<2x128xf32>
    %421 = arith.mulf %404, %412 : vector<2x128xf32>
    %422 = arith.addf %420, %421 : vector<2x128xf32>
    %423 = math.tanh %422 : vector<2x128xf32>
    %424 = arith.mulf %418, %423 : vector<2x128xf32>
    %c0_206 = arith.constant 0 : index
    %c0_207 = arith.constant 0 : index
    %425 = vector.load %arg7[%c0_206, %c0_207] : memref<2x128xf32, #tpu.memory_space<vmem>>, vector<2x128xf32>
    tpu.vector_store %arg7[%c0_206, %c0_207], %422 {strides = array<i32>} : memref<2x128xf32, #tpu.memory_space<vmem>>, vector<2x128xf32>,
    %c0_208 = arith.constant 0 : index
    %c0_209 = arith.constant 0 : index
    %426 = vector.load %arg6[%c0_208, %c0_209] : memref<2x128xf32, #tpu.memory_space<vmem>>, vector<2x128xf32>
    tpu.vector_store %arg6[%c0_208, %c0_209], %424 {strides = array<i32>} : memref<2x128xf32, #tpu.memory_space<vmem>>, vector<2x128xf32>,
    %427 = vector.extract_strided_slice %424 {offsets = [0, 96], sizes = [2, 32], strides = [1, 1]} : vector<2x128xf32> to vector<2x32xf32>
    %c3_i32_210 = arith.constant 3 : i32
    %428 = arith.subi %c9_i32, %c3_i32_210 : i32
    %c0_i32_211 = arith.constant 0 : i32
    %429 = arith.maxsi %428, %c0_i32_211 : i32
    %430 = arith.index_cast %429 : i32 to index
    %c0_212 = arith.constant 0 : index
    %c0_213 = arith.constant 0 : index
    %431 = vector.load %arg8[%430, %c0_212, %c0_213] : memref<8x2x32xf32, #tpu.memory_space<vmem>>, vector<1x2x32xf32>
    %432 = vector.shape_cast %431 : vector<1x2x32xf32> to vector<2x32xf32>
    %433 = vector.shape_cast %427 : vector<2x32xf32> to vector<1x2x32xf32>
    tpu.vector_store %arg8[%430, %c0_212, %c0_213], %433 {strides = array<i32>} : memref<8x2x32xf32, #tpu.memory_space<vmem>>, vector<1x2x32xf32>,
    %c10_i32 = arith.constant 10 : i32
    %c7_i32_214 = arith.constant 7 : i32
    %434 = arith.minsi %c10_i32, %c7_i32_214 : i32
    %435 = arith.index_cast %434 : i32 to index
    %c0_215 = arith.constant 0 : index
    %c0_216 = arith.constant 0 : index
    %436 = vector.load %arg1[%435, %c0_215, %c0_216] : memref<8x2x512xf32, #tpu.memory_space<vmem>>, vector<1x2x512xf32>
    %437 = vector.shape_cast %436 : vector<1x2x512xf32> to vector<2x512xf32>
    %c0_217 = arith.constant 0 : index
    %c0_218 = arith.constant 0 : index
    %438 = vector.load %arg6[%c0_217, %c0_218] : memref<2x128xf32, #tpu.memory_space<vmem>>, vector<2x128xf32>
    %c0_219 = arith.constant 0 : index
    %c0_220 = arith.constant 0 : index
    %439 = vector.load %arg2[%c0_219, %c0_220] : memref<128x512xf32, #tpu.memory_space<vmem>>, vector<128x512xf32>
    %cst_221 = arith.constant dense<0.000000e+00> : vector<2x512xf32>
    %440 = tpu.matmul %438, %439, %cst_221 {dimension_numbers = #tpu.dot_dimension_numbers<[1], [0], [0], [1], [0, 0, 1, 1], [], []>} : vector<2x128xf32>, vector<128x512xf32>, vector<2x512xf32> -> vector<2x512xf32>
    %441 = arith.addf %437, %440 : vector<2x512xf32>
    %442 = vector.extract_strided_slice %441 {offsets = [0, 0], sizes = [2, 128], strides = [1, 1]} : vector<2x512xf32> to vector<2x128xf32>
    %443 = arith.negf %442 : vector<2x128xf32>
    %444 = math.exp %443 : vector<2x128xf32>
    %cst_222 = arith.constant 1.000000e+00 : f32
    %445 = vector.broadcast %cst_222 : f32 to vector<2x128xf32>
    %446 = arith.addf %445, %444 : vector<2x128xf32>
    %447 = arith.divf %445, %446 : vector<2x128xf32>
    %448 = vector.extract_strided_slice %441 {offsets = [0, 128], sizes = [2, 128], strides = [1, 1]} : vector<2x512xf32> to vector<2x128xf32>
    %449 = arith.negf %448 : vector<2x128xf32>
    %450 = math.exp %449 : vector<2x128xf32>
    %cst_223 = arith.constant 1.000000e+00 : f32
    %451 = vector.broadcast %cst_223 : f32 to vector<2x128xf32>
    %452 = arith.addf %451, %450 : vector<2x128xf32>
    %453 = arith.divf %451, %452 : vector<2x128xf32>
    %454 = vector.extract_strided_slice %441 {offsets = [0, 256], sizes = [2, 128], strides = [1, 1]} : vector<2x512xf32> to vector<2x128xf32>
    %455 = math.tanh %454 : vector<2x128xf32>
    %456 = vector.extract_strided_slice %441 {offsets = [0, 384], sizes = [2, 128], strides = [1, 1]} : vector<2x512xf32> to vector<2x128xf32>
    %457 = arith.negf %456 : vector<2x128xf32>
    %458 = math.exp %457 : vector<2x128xf32>
    %cst_224 = arith.constant 1.000000e+00 : f32
    %459 = vector.broadcast %cst_224 : f32 to vector<2x128xf32>
    %460 = arith.addf %459, %458 : vector<2x128xf32>
    %461 = arith.divf %459, %460 : vector<2x128xf32>
    %c0_225 = arith.constant 0 : index
    %c0_226 = arith.constant 0 : index
    %462 = vector.load %arg7[%c0_225, %c0_226] : memref<2x128xf32, #tpu.memory_space<vmem>>, vector<2x128xf32>
    %463 = arith.mulf %453, %462 : vector<2x128xf32>
    %464 = arith.mulf %447, %455 : vector<2x128xf32>
    %465 = arith.addf %463, %464 : vector<2x128xf32>
    %466 = math.tanh %465 : vector<2x128xf32>
    %467 = arith.mulf %461, %466 : vector<2x128xf32>
    %c0_227 = arith.constant 0 : index
    %c0_228 = arith.constant 0 : index
    %468 = vector.load %arg7[%c0_227, %c0_228] : memref<2x128xf32, #tpu.memory_space<vmem>>, vector<2x128xf32>
    tpu.vector_store %arg7[%c0_227, %c0_228], %465 {strides = array<i32>} : memref<2x128xf32, #tpu.memory_space<vmem>>, vector<2x128xf32>,
    %c0_229 = arith.constant 0 : index
    %c0_230 = arith.constant 0 : index
    %469 = vector.load %arg6[%c0_229, %c0_230] : memref<2x128xf32, #tpu.memory_space<vmem>>, vector<2x128xf32>
    tpu.vector_store %arg6[%c0_229, %c0_230], %467 {strides = array<i32>} : memref<2x128xf32, #tpu.memory_space<vmem>>, vector<2x128xf32>,
    %470 = vector.extract_strided_slice %467 {offsets = [0, 96], sizes = [2, 32], strides = [1, 1]} : vector<2x128xf32> to vector<2x32xf32>
    %c3_i32_231 = arith.constant 3 : i32
    %471 = arith.subi %c10_i32, %c3_i32_231 : i32
    %c0_i32_232 = arith.constant 0 : i32
    %472 = arith.maxsi %471, %c0_i32_232 : i32
    %473 = arith.index_cast %472 : i32 to index
    %c0_233 = arith.constant 0 : index
    %c0_234 = arith.constant 0 : index
    %474 = vector.load %arg8[%473, %c0_233, %c0_234] : memref<8x2x32xf32, #tpu.memory_space<vmem>>, vector<1x2x32xf32>
    %475 = vector.shape_cast %474 : vector<1x2x32xf32> to vector<2x32xf32>
    %476 = vector.shape_cast %470 : vector<2x32xf32> to vector<1x2x32xf32>
    tpu.vector_store %arg8[%473, %c0_233, %c0_234], %476 {strides = array<i32>} : memref<8x2x32xf32, #tpu.memory_space<vmem>>, vector<1x2x32xf32>,
    %c11_i32 = arith.constant 11 : i32
    %c0_235 = arith.constant 0 : index
    %c0_236 = arith.constant 0 : index
    %c0_237 = arith.constant 0 : index
    %477 = vector.load %arg8[%c0_235, %c0_236, %c0_237] : memref<8x2x32xf32, #tpu.memory_space<vmem>>, vector<8x2x32xf32>
    %478 = vector.shape_cast %477 : vector<8x2x32xf32> to vector<16x32xf32>
    %c0_238 = arith.constant 0 : index
    %c0_239 = arith.constant 0 : index
    %479 = vector.load %arg3[%c0_238, %c0_239] : memref<32x7xf32, #tpu.memory_space<vmem>>, vector<32x7xf32>
    %cst_240 = arith.constant dense<0.000000e+00> : vector<16x7xf32>
    %480 = tpu.matmul %478, %479, %cst_240 {dimension_numbers = #tpu.dot_dimension_numbers<[1], [0], [0], [1], [0, 0, 1, 1], [], []>} : vector<16x32xf32>, vector<32x7xf32>, vector<16x7xf32> -> vector<16x7xf32>
    %c0_241 = arith.constant 0 : index
    %c0_242 = arith.constant 0 : index
    %481 = vector.load %arg4[%c0_241, %c0_242] : memref<1x7xf32, #tpu.memory_space<vmem>>, vector<1x7xf32>
    %482 = vector.broadcast %481 : vector<1x7xf32> to vector<16x7xf32>
    %483 = arith.addf %480, %482 : vector<16x7xf32>
    %484 = vector.extract_strided_slice %483 {offsets = [0, 0], sizes = [16, 6], strides = [1, 1]} : vector<16x7xf32> to vector<16x6xf32>
    %cst_243 = arith.constant dense<0xFF800000> : vector<16xf32>
    %485 = vector.multi_reduction <maximumf>, %484, %cst_243 [1] : vector<16x6xf32> to vector<16xf32>
    %486 = vector.shape_cast %485 : vector<16xf32> to vector<16x1xf32>
    %487 = vector.broadcast %486 : vector<16x1xf32> to vector<16x6xf32>
    %488 = arith.subf %484, %487 : vector<16x6xf32>
    %489 = math.exp %488 : vector<16x6xf32>
    %cst_244 = arith.constant dense<0.000000e+00> : vector<16xf32>
    %490 = vector.multi_reduction <add>, %489, %cst_244 [1] : vector<16x6xf32> to vector<16xf32>
    %491 = vector.shape_cast %490 : vector<16xf32> to vector<16x1xf32>
    %492 = math.log %491 : vector<16x1xf32>
    %493 = arith.addf %486, %492 : vector<16x1xf32>
    %494 = tpu.iota {dimensions = array<i32: 1>} : vector<16x7xi32>
    %c6_i32_245 = arith.constant 6 : i32
    %495 = vector.broadcast %c6_i32_245 : i32 to vector<16x7xi32>
    %496 = arith.cmpi slt, %494, %495 : vector<16x7xi32>
    %497 = vector.broadcast %493 : vector<16x1xf32> to vector<16x7xf32>
    %498 = arith.subf %483, %497 : vector<16x7xf32>
    %499 = arith.negf %483 : vector<16x7xf32>
    %500 = math.exp %499 : vector<16x7xf32>
    %cst_246 = arith.constant 1.000000e+00 : f32
    %501 = vector.broadcast %cst_246 : f32 to vector<16x7xf32>
    %502 = arith.addf %501, %500 : vector<16x7xf32>
    %503 = arith.divf %501, %502 : vector<16x7xf32>
    %504 = arith.select %496, %498, %503 : vector<16x7xi1>, vector<16x7xf32>
    %c0_247 = arith.constant 0 : index
    %c0_248 = arith.constant 0 : index
    %505 = vector.load %arg5[%c0_247, %c0_248] : memref<16x7xf32, #tpu.memory_space<vmem>>, vector<16x7xf32>
    tpu.vector_store %arg5[%c0_247, %c0_248], %504 {strides = array<i32>} : memref<16x7xf32, #tpu.memory_space<vmem>>, vector<16x7xf32>,
    return
  }
  func.func @transform_0(%arg0: i32) -> (i32, i32, i32) {
    %c0_i32 = arith.constant 0 : i32
    %c0_i32_0 = arith.constant 0 : i32
    %c0_i32_1 = arith.constant 0 : i32
    %c0_i32_2 = arith.constant 0 : i32
    return %c0_i32, %c0_i32_0, %c0_i32_1 : i32, i32, i32
  }
  func.func @transform_1(%arg0: i32) -> (i32, i32) {
    %c0_i32 = arith.constant 0 : i32
    %c0_i32_0 = arith.constant 0 : i32
    %c0_i32_1 = arith.constant 0 : i32
    return %c0_i32, %c0_i32_0 : i32, i32
  }
  func.func @transform_2(%arg0: i32) -> (i32, i32) {
    %c0_i32 = arith.constant 0 : i32
    %c0_i32_0 = arith.constant 0 : i32
    %c0_i32_1 = arith.constant 0 : i32
    return %c0_i32, %c0_i32_0 : i32, i32
  }
  func.func @transform_3(%arg0: i32) -> (i32, i32) {
    %c0_i32 = arith.constant 0 : i32
    %c0_i32_0 = arith.constant 0 : i32
    %c0_i32_1 = arith.constant 0 : i32
    return %c0_i32, %c0_i32_0 : i32, i32
  }
  func.func @transform_4(%arg0: i32) -> (i32, i32) {
    %c0_i32 = arith.constant 0 : i32
    %c0_i32_0 = arith.constant 0 : i32
    %c0_i32_1 = arith.constant 0 : i32
    return %c0_i32, %c0_i32_0 : i32, i32
  }
}

</mosaic_0001>

<llo_original>
// kernel: early_rnn_forward.2
$region0: #{early_rnn_forward.2}
  #allocation0 [shape = 'u32[]', space=smem, size = 0x4, offset = 0x4, fixed_abs, tag = 'smem constant byte address 0x4 - core index']
  #allocation1 [shape = 'u32[144,128]{1,0:T(1,128)}', space=vmem, size = 0x12000, scoped, tag = 'internal scratch']
  %s0 = inlined_call_operand.vmem [shape: bf16[16,16,162], index: 0, kind: input, shape index: {}]
  %s1 = inlined_call_operand.vmem [shape: bf16[162,256], index: 1, kind: input, shape index: {}]
  %s2 = inlined_call_operand.vmem [shape: f32[1,256], index: 2, kind: input, shape index: {}]
  %s3 = inlined_call_operand.vmem [shape: f32[1,256], index: 3, kind: input, shape index: {}]
  %s4 = inlined_call_operand.vmem [shape: f32[240,32], index: 4, kind: input, shape index: {}]
  %s5 = inlined_call_operand.vmem [shape: f32[1,32], index: 5, kind: input, shape index: {}]
  %s6 = inlined_call_operand.vmem [shape: f32[1,32], index: 6, kind: input, shape index: {}]
  %s7 = inlined_call_operand.vmem [shape: f32[1,32], index: 7, kind: input, shape index: {}]
  %s8 = inlined_call_operand.vmem [shape: f32[32,512], index: 8, kind: input, shape index: {}]
  %s9 = inlined_call_operand.vmem [shape: f32[16,512], index: 9, kind: output, shape index: {}]
  %s10 = sld [smem:[#allocation0]]
  $region69: #{early_rnn_forward.2} parent=0
    _
  %s12 = ssub.s32 1, %s10
  %s13 = scalar_select 0, %s12, %s10
  loop: start=0, step=1, limit=4
  $region2: #{early_rnn_forward.2} parent=0 // loop_pre_header
    _
  $region3: #{early_rnn_forward.2} parent=0 // loop_header
    %s15 = sphi 0, %s19
    %p16 = scmp.ge.s32.totalorder %s15, 4
    %s25 = sphi 0, %s27
    %s28 = sphi 0, %s25
    %s29 = sphi 0, %s28
    %s45 = sphi 0, %s29
    %s49 = sphi 0, %s49
    %s51 = sphi 0, %s49
    %s52 = sphi 0, %s51
    %s66 = sphi 0, %s52
    %s70 = sphi 0, %s70
    %s72 = sphi 0, %s70
    %s73 = sphi 0, %s72
    %s87 = sphi 0, %s73
    %s91 = sphi 0, %s91
    %s93 = sphi 0, %s91
    %s94 = sphi 0, %s93
    %s108 = sphi 0, %s94
    %s112 = sphi 0, %s112
    %s114 = sphi 0, %s112
    %s115 = sphi 0, %s114
    %s129 = sphi 0, %s115
    %s133 = sphi 0, %s133
    %s135 = sphi 0, %s133
    %s136 = sphi 0, %s135
    %s150 = sphi 0, %s136
    %s154 = sphi 0, %s154
    %s156 = sphi 0, %s154
    %s157 = sphi 0, %s156
    %s171 = sphi 0, %s157
    %s175 = sphi 0, %s175
    %s177 = sphi 0, %s175
    %s178 = sphi 0, %s177
    %s192 = sphi 0, %s178
    %s196 = sphi 0, %s196
    %s198 = sphi 0, %s196
    %s199 = sphi 0, %s198
    %s213 = sphi 0, %s199
    %s219 = sphi 0, %s221
    %s222 = sphi 0, %s219
    %s223 = sphi 0, %s222
    %s239 = sphi 0, %s223
  $region4: #{early_rnn_forward.2} parent=0 // loop_header_branch
    %18 = sbr.rel (%p16) target = $region8
  $region5: #{early_rnn_forward.2} parent=0 // loop_body
    %s20 = ssub.s32 %s15, 1
    %s21 = ssub.s32 %s15, 2
    %s22 = sadd.s32 %s15, 1
    %s23 = ssub.s32 %s15, %s22
    %p24 = scmp.eq.s32.totalorder %s23, 0
    %s26 = sadd.s32 %s25, 1
    %s27 = scalar_select %p24, %s25, %s26
    %p30 = pneg %p24
    %p31 = scmp.eq.s32.totalorder %s15, 1
    %p32 = por %p30, %p31
    %p33 = scmp.ne.s32.totalorder %s25, %s28
    %p34 = scmp.eq.s32.totalorder %s15, 0
    %p35 = por %p33, %p34
    %p36 = scmp.ne.s32.totalorder %s25, %s28
    %p37 = scmp.eq.s32.totalorder %s20, 1
    %p38 = por %p36, %p37
    %p39 = scmp.ne.s32.totalorder %s28, %s29
    %p40 = scmp.eq.s32.totalorder %s20, 0
    %p41 = por %p39, %p40
    %p42 = scmp.ne.s32.totalorder %s28, %s29
    %p43 = scmp.eq.s32.totalorder %s21, 1
    %p44 = por %p42, %p43
    %p46 = scmp.ne.s32.totalorder %s29, %s45
    %p47 = scmp.eq.s32.totalorder %s21, 0
    %p48 = por %p46, %p47
    %s50 = sadd.s32 %s49, 1
    %p53 = scmp.eq.s32.totalorder %s15, 1
    %p54 = scmp.ne.s32.totalorder %s49, %s51
    %p55 = scmp.eq.s32.totalorder %s15, 0
    %p56 = por %p54, %p55
    %p57 = scmp.ne.s32.totalorder %s49, %s51
    %p58 = scmp.eq.s32.totalorder %s20, 1
    %p59 = por %p57, %p58
    %p60 = scmp.ne.s32.totalorder %s51, %s52
    %p61 = scmp.eq.s32.totalorder %s20, 0
    %p62 = por %p60, %p61
    %p63 = scmp.ne.s32.totalorder %s51, %s52
    %p64 = scmp.eq.s32.totalorder %s21, 1
    %p65 = por %p63, %p64
    %p67 = scmp.ne.s32.totalorder %s52, %s66
    %p68 = scmp.eq.s32.totalorder %s21, 0
    %p69 = por %p67, %p68
    %s71 = sadd.s32 %s70, 1
    %p74 = scmp.eq.s32.totalorder %s15, 1
    %p75 = scmp.ne.s32.totalorder %s70, %s72
    %p76 = scmp.eq.s32.totalorder %s15, 0
    %p77 = por %p75, %p76
    %p78 = scmp.ne.s32.totalorder %s70, %s72
    %p79 = scmp.eq.s32.totalorder %s20, 1
    %p80 = por %p78, %p79
    %p81 = scmp.ne.s32.totalorder %s72, %s73
    %p82 = scmp.eq.s32.totalorder %s20, 0
    %p83 = por %p81, %p82
    %p84 = scmp.ne.s32.totalorder %s72, %s73
    %p85 = scmp.eq.s32.totalorder %s21, 1
    %p86 = por %p84, %p85
    %p88 = scmp.ne.s32.totalorder %s73, %s87
    %p89 = scmp.eq.s32.totalorder %s21, 0
    %p90 = por %p88, %p89
    %s92 = sadd.s32 %s91, 1
    %p95 = scmp.eq.s32.totalorder %s15, 1
    %p96 = scmp.ne.s32.totalorder %s91, %s93
    %p97 = scmp.eq.s32.totalorder %s15, 0
    %p98 = por %p96, %p97
    %p99 = scmp.ne.s32.totalorder %s91, %s93
    %p100 = scmp.eq.s32.totalorder %s20, 1
    %p101 = por %p99, %p100
    %p102 = scmp.ne.s32.totalorder %s93, %s94
    %p103 = scmp.eq.s32.totalorder %s20, 0
    %p104 = por %p102, %p103
    %p105 = scmp.ne.s32.totalorder %s93, %s94
    %p106 = scmp.eq.s32.totalorder %s21, 1
    %p107 = por %p105, %p106
    %p109 = scmp.ne.s32.totalorder %s94, %s108
    %p110 = scmp.eq.s32.totalorder %s21, 0
    %p111 = por %p109, %p110
    %s113 = sadd.s32 %s112, 1
    %p116 = scmp.eq.s32.totalorder %s15, 1
    %p117 = scmp.ne.s32.totalorder %s112, %s114
    %p118 = scmp.eq.s32.totalorder %s15, 0
    %p119 = por %p117, %p118
    %p120 = scmp.ne.s32.totalorder %s112, %s114
    %p121 = scmp.eq.s32.totalorder %s20, 1
    %p122 = por %p120, %p121
    %p123 = scmp.ne.s32.totalorder %s114, %s115
    %p124 = scmp.eq.s32.totalorder %s20, 0
    %p125 = por %p123, %p124
    %p126 = scmp.ne.s32.totalorder %s114, %s115
    %p127 = scmp.eq.s32.totalorder %s21, 1
    %p128 = por %p126, %p127
    %p130 = scmp.ne.s32.totalorder %s115, %s129
    %p131 = scmp.eq.s32.totalorder %s21, 0
    %p132 = por %p130, %p131
    %s134 = sadd.s32 %s133, 1
    %p137 = scmp.eq.s32.totalorder %s15, 1
    %p138 = scmp.ne.s32.totalorder %s133, %s135
    %p139 = scmp.eq.s32.totalorder %s15, 0
    %p140 = por %p138, %p139
    %p141 = scmp.ne.s32.totalorder %s133, %s135
    %p142 = scmp.eq.s32.totalorder %s20, 1
    %p143 = por %p141, %p142
    %p144 = scmp.ne.s32.totalorder %s135, %s136
    %p145 = scmp.eq.s32.totalorder %s20, 0
    %p146 = por %p144, %p145
    %p147 = scmp.ne.s32.totalorder %s135, %s136
    %p148 = scmp.eq.s32.totalorder %s21, 1
    %p149 = por %p147, %p148
    %p151 = scmp.ne.s32.totalorder %s136, %s150
    %p152 = scmp.eq.s32.totalorder %s21, 0
    %p153 = por %p151, %p152
    %s155 = sadd.s32 %s154, 1
    %p158 = scmp.eq.s32.totalorder %s15, 1
    %p159 = scmp.ne.s32.totalorder %s154, %s156
    %p160 = scmp.eq.s32.totalorder %s15, 0
    %p161 = por %p159, %p160
    %p162 = scmp.ne.s32.totalorder %s154, %s156
    %p163 = scmp.eq.s32.totalorder %s20, 1
    %p164 = por %p162, %p163
    %p165 = scmp.ne.s32.totalorder %s156, %s157
    %p166 = scmp.eq.s32.totalorder %s20, 0
    %p167 = por %p165, %p166
    %p168 = scmp.ne.s32.totalorder %s156, %s157
    %p169 = scmp.eq.s32.totalorder %s21, 1
    %p170 = por %p168, %p169
    %p172 = scmp.ne.s32.totalorder %s157, %s171
    %p173 = scmp.eq.s32.totalorder %s21, 0
    %p174 = por %p172, %p173
    %s176 = sadd.s32 %s175, 1
    %p179 = scmp.eq.s32.totalorder %s15, 1
    %p180 = scmp.ne.s32.totalorder %s175, %s177
    %p181 = scmp.eq.s32.totalorder %s15, 0
    %p182 = por %p180, %p181
    %p183 = scmp.ne.s32.totalorder %s175, %s177
    %p184 = scmp.eq.s32.totalorder %s20, 1
    %p185 = por %p183, %p184
    %p186 = scmp.ne.s32.totalorder %s177, %s178
    %p187 = scmp.eq.s32.totalorder %s20, 0
    %p188 = por %p186, %p187
    %p189 = scmp.ne.s32.totalorder %s177, %s178
    %p190 = scmp.eq.s32.totalorder %s21, 1
    %p191 = por %p189, %p190
    %p193 = scmp.ne.s32.totalorder %s178, %s192
    %p194 = scmp.eq.s32.totalorder %s21, 0
    %p195 = por %p193, %p194
    %s197 = sadd.s32 %s196, 1
    %p200 = scmp.eq.s32.totalorder %s15, 1
    %p201 = scmp.ne.s32.totalorder %s196, %s198
    %p202 = scmp.eq.s32.totalorder %s15, 0
    %p203 = por %p201, %p202
    %p204 = scmp.ne.s32.totalorder %s196, %s198
    %p205 = scmp.eq.s32.totalorder %s20, 1
    %p206 = por %p204, %p205
    %p207 = scmp.ne.s32.totalorder %s198, %s199
    %p208 = scmp.eq.s32.totalorder %s20, 0
    %p209 = por %p207, %p208
    %p210 = scmp.ne.s32.totalorder %s198, %s199
    %p211 = scmp.eq.s32.totalorder %s21, 1
    %p212 = por %p210, %p211
    %p214 = scmp.ne.s32.totalorder %s199, %s213
    %p215 = scmp.eq.s32.totalorder %s21, 0
    %p216 = por %p214, %p215
    %s217 = ssub.s32 %s15, %s22
    %p218 = scmp.eq.s32.totalorder %s217, 0
    %s220 = sadd.s32 %s219, 1
    %s221 = scalar_select %p218, %s219, %s220
    %p224 = pneg %p218
    %p225 = scmp.eq.s32.totalorder %s15, 1
    %p226 = por %p224, %p225
    %p227 = scmp.ne.s32.totalorder %s219, %s222
    %p228 = scmp.eq.s32.totalorder %s15, 0
    %p229 = por %p227, %p228
    %p230 = scmp.ne.s32.totalorder %s219, %s222
    %p231 = scmp.eq.s32.totalorder %s20, 1
    %p232 = por %p230, %p231
    %p233 = scmp.ne.s32.totalorder %s222, %s223
    %p234 = scmp.eq.s32.totalorder %s20, 0
    %p235 = por %p233, %p234
    %p236 = scmp.ne.s32.totalorder %s222, %s223
    %p237 = scmp.eq.s32.totalorder %s21, 1
    %p238 = por %p236, %p237
    %p240 = scmp.ne.s32.totalorder %s223, %s239
    %p241 = scmp.eq.s32.totalorder %s21, 0
    %p242 = por %p240, %p241
    %p243 = scmp.le.s32.totalorder 1, %s15
    %p244 = scmp.lt.s32.totalorder %s15, 3
    %p245 = pnand %p243, %p244
    %p246 = pneg %p245
    // Predicated region
    $region9: #{early_rnn_forward.2} parent=5 // pred_check
      _
    $region10: #{early_rnn_forward.2} parent=5 // pred_check_branch
      %248 = sbr.rel (%p245) target = $region12
    $region11: #{early_rnn_forward.2} parent=5 // pred_region
      %s249 = ssub.s32 %s15, 1
      // Predicated region
      $region13: #{early_rnn_forward.2} parent=11 // pred_check
        %p250 = pneg %p62
      $region14: #{early_rnn_forward.2} parent=11 // pred_check_branch
        %252 = sbr.rel (%p250) target = $region16
      $region15: #{early_rnn_forward.2} parent=11 // pred_region
        _
      $region16: #{early_rnn_forward.2} parent=11 // pred_fallthru
        _
      // Predicated region
      $region17: #{early_rnn_forward.2} parent=11 // pred_check
        %p253 = pneg %p83
      $region18: #{early_rnn_forward.2} parent=11 // pred_check_branch
        %255 = sbr.rel (%p253) target = $region20
      $region19: #{early_rnn_forward.2} parent=11 // pred_region
        _
      $region20: #{early_rnn_forward.2} parent=11 // pred_fallthru
        _
      // Predicated region
      $region21: #{early_rnn_forward.2} parent=11 // pred_check
        %p256 = pneg %p104
      $region22: #{early_rnn_forward.2} parent=11 // pred_check_branch
        %258 = sbr.rel (%p256) target = $region24
      $region23: #{early_rnn_forward.2} parent=11 // pred_region
        _
      $region24: #{early_rnn_forward.2} parent=11 // pred_fallthru
        _
      // Predicated region
      $region25: #{early_rnn_forward.2} parent=11 // pred_check
        %p259 = pneg %p125
      $region26: #{early_rnn_forward.2} parent=11 // pred_check_branch
        %261 = sbr.rel (%p259) target = $region28
      $region27: #{early_rnn_forward.2} parent=11 // pred_region
        _
      $region28: #{early_rnn_forward.2} parent=11 // pred_fallthru
        _
      // Predicated region
      $region29: #{early_rnn_forward.2} parent=11 // pred_check
        %p262 = pneg %p146
      $region30: #{early_rnn_forward.2} parent=11 // pred_check_branch
        %264 = sbr.rel (%p262) target = $region32
      $region31: #{early_rnn_forward.2} parent=11 // pred_region
        _
      $region32: #{early_rnn_forward.2} parent=11 // pred_fallthru
        _
      // Predicated region
      $region33: #{early_rnn_forward.2} parent=11 // pred_check
        %p265 = pneg %p167
      $region34: #{early_rnn_forward.2} parent=11 // pred_check_branch
        %267 = sbr.rel (%p265) target = $region36
      $region35: #{early_rnn_forward.2} parent=11 // pred_region
        _
      $region36: #{early_rnn_forward.2} parent=11 // pred_fallthru
        _
      // Predicated region
      $region37: #{early_rnn_forward.2} parent=11 // pred_check
        %p268 = pneg %p188
      $region38: #{early_rnn_forward.2} parent=11 // pred_check_branch
        %270 = sbr.rel (%p268) target = $region40
      $region39: #{early_rnn_forward.2} parent=11 // pred_region
        _
      $region40: #{early_rnn_forward.2} parent=11 // pred_fallthru
        _
      // Predicated region
      $region41: #{early_rnn_forward.2} parent=11 // pred_check
        %p271 = pneg %p209
      $region42: #{early_rnn_forward.2} parent=11 // pred_check_branch
        %273 = sbr.rel (%p271) target = $region44
      $region43: #{early_rnn_forward.2} parent=11 // pred_region
        _
      $region44: #{early_rnn_forward.2} parent=11 // pred_fallthru
        _
    $region12: #{early_rnn_forward.2} parent=5 // pred_fallthru
      _
    %p274 = scmp.lt.s32.totalorder %s15, 2
    // Predicated region
    $region45: #{early_rnn_forward.2} parent=5 // pred_check
      %p275 = pneg %p274
    $region46: #{early_rnn_forward.2} parent=5 // pred_check_branch
      %277 = sbr.rel (%p275) target = $region48
    $region47: #{early_rnn_forward.2} parent=5 // pred_region
      // Predicated region
      $region49: #{early_rnn_forward.2} parent=47 // pred_check
        %p278 = pneg %p35
      $region50: #{early_rnn_forward.2} parent=47 // pred_check_branch
        %280 = sbr.rel (%p278) target = $region52
      $region51: #{early_rnn_forward.2} parent=47 // pred_region
        %s281 = smul.u32 8, %s15
        %p282 = scmp.lt.s32.totalorder %s281, 15
        %s283 = scalar_select %p282, %s281, 15
        %s284 = smul.addr %s283, 4
        %s285 = smul.addr %s284, 4
        %s286 = scalar_lea.vmem %s0, %s285
        %s287 = smul.u32 8, %s15
      $region52: #{early_rnn_forward.2} parent=47 // pred_fallthru
        _
    $region48: #{early_rnn_forward.2} parent=5 // pred_fallthru
      _
    %p288 = scmp.le.s32.totalorder 1, %s15
    %p289 = scmp.lt.s32.totalorder %s15, 3
    %p290 = pnand %p288, %p289
    %p291 = pneg %p290
    // Predicated region
    $region53: #{early_rnn_forward.2} parent=5 // pred_check
      _
    $region54: #{early_rnn_forward.2} parent=5 // pred_check_branch
      %293 = sbr.rel (%p290) target = $region56
    $region55: #{early_rnn_forward.2} parent=5 // pred_region
      %s294 = ssub.s32 %s15, 1
      %s295 = smul.u32 8, %s20
      %p296 = scmp.lt.s32.totalorder %s295, 15
      %s297 = scalar_select %p296, %s295, 15
      %s298 = smul.addr %s297, 4
      %s299 = smul.addr %s298, 4
      %s300 = scalar_lea.vmem %s0, %s299
      %p301 = pneg %p41
      %p302 = pneg %p38
      %p303 = pneg %p62
      %p304 = pneg %p59
      %p305 = pneg %p83
      %p306 = pneg %p80
      %p307 = pneg %p104
      %p308 = pneg %p101
      %p309 = pneg %p125
      %p310 = pneg %p122
      %p311 = pneg %p146
      %p312 = pneg %p143
      %p313 = pneg %p167
      %p314 = pneg %p164
      %p315 = pneg %p188
      %p316 = pneg %p185
      %p317 = pneg %p209
      %p318 = pneg %p206
      %p319 = pneg %p235
      %p320 = pneg %p232
      %p321 = scmp.lt.s32.totalorder %s20, 1
      %s322 = scalar_select %p321, %s20, 1
      %s323 = smul.addr %s322, 4
      %s324 = smul.addr %s323, 8
      %s325 = scalar_lea.vmem %s9, %s324
      %s326 = smul.u32 8, %s20
      %p327 = scmp.lt.s32.totalorder %s326, 15
      %s328 = scalar_select %p327, %s326, 15
      %s329 = smul.addr %s328, 4
      %s330 = smul.addr %s329, 4
      %s331 = scalar_lea.vmem %s0, %s330
      %s332 = smul.u32 8, %s20
      %p333 = scmp.lt.s32.totalorder %s20, 1
      %s334 = scalar_select %p333, %s20, 1
      %s335 = smul.addr %s334, 4
      %s336 = smul.addr %s335, 8
      %s337 = scalar_lea.vmem %s9, %s336
      %v339 = vld [vmem:[%s331] sm:$0xff]
      %v340 = vld [vmem:[%s331 + $0x8] sm:$0xff]
      %v341 = vld [vmem:[%s331 + $0x10] sm:$0xff]
      %v342 = vld [vmem:[%s331 + $0x18] sm:$0xff]
      %v343 = vld [vmem:[%s331 + $0x20] sm:$0xff]
      %v344 = vld [vmem:[%s331 + $0x28] sm:$0xff]
      %v345 = vld [vmem:[%s331 + $0x30] sm:$0xff]
      %v346 = vld [vmem:[%s331 + $0x38] sm:$0xff]
      %v347 = vld [vmem:[%s331 + $0x40] sm:$0xff]
      %v348 = vld [vmem:[%s331 + $0x48] sm:$0xff]
      %v349 = vld [vmem:[%s331 + $0x50] sm:$0xff]
      %v350 = vld [vmem:[%s331 + $0x58] sm:$0xff]
      %v351 = vld [vmem:[%s331 + $0x60] sm:$0xff]
      %v352 = vld [vmem:[%s331 + $0x68] sm:$0xff]
      %v353 = vld [vmem:[%s331 + $0x70] sm:$0xff]
      %v354 = vld [vmem:[%s331 + $0x78] sm:$0xff]
      %v355 = vld [vmem:[%s1] sm:$0xff]
      %v356 = vld [vmem:[%s1 + $0x8] sm:$0xff]
      %v357 = vld [vmem:[%s1 + $0x10] sm:$0xff]
      %v358 = vld [vmem:[%s1 + $0x18] sm:$0xff]
      %v359 = vld [vmem:[%s1 + $0x20] sm:$0xff]
      %v360 = vld [vmem:[%s1 + $0x28] sm:$0xff]
      %v361 = vld [vmem:[%s1 + $0x30] sm:$0xff]
      %v362 = vld [vmem:[%s1 + $0x38] sm:$0xff]
      %v363 = vld [vmem:[%s1 + $0x40] sm:$0xff]
      %v364 = vld [vmem:[%s1 + $0x48] sm:$0xff]
      %v365 = vld [vmem:[%s1 + $0x50] sm:$0xff]
      %v366 = vld [vmem:[%s1 + $0x58] sm:$0xff]
      %v367 = vld [vmem:[%s1 + $0x60] sm:$0xff]
      %v368 = vld [vmem:[%s1 + $0x68] sm:$0xff]
      %v369 = vld [vmem:[%s1 + $0x70] sm:$0xff]
      %v370 = vld [vmem:[%s1 + $0x78] sm:$0xff]
      %v371 = vld [vmem:[%s1 + $0x80] sm:$0xff]
      %v372 = vld [vmem:[%s1 + $0x88] sm:$0xff]
      %v373 = vld [vmem:[%s1 + $0x90] sm:$0xff]
      %v374 = vld [vmem:[%s1 + $0x98] sm:$0xff]
      %v375 = vld [vmem:[%s1 + $0xa0] sm:$0x11]
      %v392 = vunpack.c.l.b16 %v339
      %v393 = vunpack.c.h.b16 %v339
      %v394 = vunpack.c.l.b16 %v340
      %v395 = vunpack.c.h.b16 %v340
      %v396 = vunpack.c.l.b16 %v341
      %v397 = vunpack.c.h.b16 %v341
      %v398 = vunpack.c.l.b16 %v342
      %v399 = vunpack.c.h.b16 %v342
      %v400 = vunpack.c.l.b16 %v343
      %v401 = vunpack.c.h.b16 %v343
      %v402 = vunpack.c.l.b16 %v344
      %v403 = vunpack.c.h.b16 %v344
      %v404 = vunpack.c.l.b16 %v345
      %v405 = vunpack.c.h.b16 %v345
      %v406 = vunpack.c.l.b16 %v346
      %v407 = vunpack.c.h.b16 %v346
      %v408 = vunpack.c.l.b16 %v347
      %v409 = vunpack.c.h.b16 %v347
      %v410 = vunpack.c.l.b16 %v348
      %v411 = vunpack.c.h.b16 %v348
      %v412 = vunpack.c.l.b16 %v349
      %v413 = vunpack.c.h.b16 %v349
      %v414 = vunpack.c.l.b16 %v350
      %v415 = vunpack.c.h.b16 %v350
      %v416 = vunpack.c.l.b16 %v351
      %v417 = vunpack.c.h.b16 %v351
      %v418 = vunpack.c.l.b16 %v352
      %v419 = vunpack.c.h.b16 %v352
      %v420 = vunpack.c.l.b16 %v353
      %v421 = vunpack.c.h.b16 %v353
      %v422 = vunpack.c.l.b16 %v354
      %v423 = vunpack.c.h.b16 %v354
      %v424 = vpack.c.b16 %v394, %v392
      %v425 = vpack.c.b16 %v395, %v393
      %v426 = vpack.c.b16 %v398, %v396
      %v427 = vpack.c.b16 %v399, %v397
      %v428 = vpack.c.b16 %v402, %v400
      %v429 = vpack.c.b16 %v403, %v401
      %v430 = vpack.c.b16 %v406, %v404
      %v431 = vpack.c.b16 %v407, %v405
      %v432 = vpack.c.b16 %v410, %v408
      %v433 = vpack.c.b16 %v411, %v409
      %v434 = vpack.c.b16 %v414, %v412
      %v435 = vpack.c.b16 %v415, %v413
      %v436 = vpack.c.b16 %v418, %v416
      %v437 = vpack.c.b16 %v419, %v417
      %v438 = vpack.c.b16 %v422, %v420
      %v439 = vpack.c.b16 %v423, %v421
      %v469 = vunpack.c.l.b16 %v355
      %v470 = vunpack.c.h.b16 %v355
      %v471 = vunpack.c.l.b16 %v356
      %v472 = vunpack.c.h.b16 %v356
      %v473 = vunpack.c.l.b16 %v357
      %v474 = vunpack.c.h.b16 %v357
      %v475 = vunpack.c.l.b16 %v358
      %v476 = vunpack.c.h.b16 %v358
      %v477 = vunpack.c.l.b16 %v359
      %v478 = vunpack.c.h.b16 %v359
      %v479 = vunpack.c.l.b16 %v360
      %v480 = vunpack.c.h.b16 %v360
      %v481 = vunpack.c.l.b16 %v361
      %v482 = vunpack.c.h.b16 %v361
      %v483 = vunpack.c.l.b16 %v362
      %v484 = vunpack.c.h.b16 %v362
      %v485 = vunpack.c.l.b16 %v363
      %v486 = vunpack.c.h.b16 %v363
      %v487 = vunpack.c.l.b16 %v364
      %v488 = vunpack.c.h.b16 %v364
      %v489 = vunpack.c.l.b16 %v365
      %v490 = vunpack.c.h.b16 %v365
      %v491 = vunpack.c.l.b16 %v366
      %v492 = vunpack.c.h.b16 %v366
      %v493 = vunpack.c.l.b16 %v367
      %v494 = vunpack.c.h.b16 %v367
      %v495 = vunpack.c.l.b16 %v368
      %v496 = vunpack.c.h.b16 %v368
      %v497 = vunpack.c.l.b16 %v369
      %v498 = vunpack.c.h.b16 %v369
      %v499 = vunpack.c.l.b16 %v370
      %v500 = vunpack.c.h.b16 %v370
      %v501 = vunpack.c.l.b16 %v371
      %v502 = vunpack.c.h.b16 %v371
      %v503 = vunpack.c.l.b16 %v372
      %v504 = vunpack.c.h.b16 %v372
      %v505 = vunpack.c.l.b16 %v373
      %v506 = vunpack.c.h.b16 %v373
      %v507 = vunpack.c.l.b16 %v374
      %v508 = vunpack.c.h.b16 %v374
      %v509 = vunpack.c.l.b16 %v375
      %v510 = vunpack.c.h.b16 %v375
      %v511 = vpack.c.b16 %v471, %v469
      %v512 = vpack.c.b16 %v472, %v470
      %v513 = vpack.c.b16 %v475, %v473
      %v514 = vpack.c.b16 %v476, %v474
      %v515 = vpack.c.b16 %v479, %v477
      %v516 = vpack.c.b16 %v480, %v478
      %v517 = vpack.c.b16 %v483, %v481
      %v518 = vpack.c.b16 %v484, %v482
      %v519 = vpack.c.b16 %v487, %v485
      %v520 = vpack.c.b16 %v488, %v486
      %v521 = vpack.c.b16 %v491, %v489
      %v522 = vpack.c.b16 %v492, %v490
      %v523 = vpack.c.b16 %v495, %v493
      %v524 = vpack.c.b16 %v496, %v494
      %v525 = vpack.c.b16 %v499, %v497
      %v526 = vpack.c.b16 %v500, %v498
      %v527 = vpack.c.b16 %v503, %v501
      %v528 = vpack.c.b16 %v504, %v502
      %v529 = vpack.c.b16 %v507, %v505
      %v530 = vpack.c.b16 %v508, %v506
      %v531 = vpack.c.b16 %v509, %v509
      %v532 = vpack.c.b16 %v510, %v510
      %vm553 = vcmask 277504
      %v555 = vsel %vm553, %v425, 0
      %v558 = vsel %vm553, %v427, 0
      %v561 = vsel %vm553, %v429, 0
      %v564 = vsel %vm553, %v431, 0
      %v567 = vsel %vm553, %v433, 0
      %v570 = vsel %vm553, %v435, 0
      %v573 = vsel %vm553, %v437, 0
      %v576 = vsel %vm553, %v439, 0
      %vm578 = vcmask 1040384
      %v580 = vsel %vm578, %v531, 0
      %v583 = vsel %vm578, %v532, 0
      %585 = vmatprep.subr.bf16.mxu0 %v512
      %586 = vmatpush1.bf16.msra.mxu0 %v511
      %587 = vmatprep.subr.bf16.mxu0 %v514
      %588 = vmatpush1.bf16.msra.mxu0 %v513
      %589 = vmatprep.subr.bf16.mxu0 %v516
      %590 = vmatpush1.bf16.msra.mxu0 %v515
      %591 = vmatprep.subr.bf16.mxu0 %v518
      %592 = vmatpush1.bf16.msra.mxu0 %v517
      %593 = vmatprep.subr.bf16.mxu0 %v520
      %594 = vmatpush1.bf16.msra.mxu0 %v519
      %595 = vmatprep.subr.bf16.mxu0 %v522
      %596 = vmatpush1.bf16.msra.mxu0 %v521
      %597 = vmatprep.subr.bf16.mxu0 %v524
      %598 = vmatpush1.bf16.msra.mxu0 %v523
      %599 = vmatprep.subr.bf16.mxu0 %v526
      %600 = vmatpush1.bf16.msra.mxu0 %v525
      %601 = vmatprep.subr.bf16.mxu0 %v528
      %602 = vmatpush1.bf16.msra.mxu0 %v527
      %603 = vmatprep.subr.bf16.mxu0 %v530
      %604 = vmatpush1.bf16.msra.mxu0 %v529
      %605 = vmatprep.subr.bf16.mxu0 %v583
      %606 = vmatpush1.bf16.msra.mxu0 %v580
      %607 = vmatprep.subr.bf16.mxu0 0
      %608 = vmatpush1.bf16.msra.mxu0 0
      %609 = vmatprep.subr.bf16.mxu0 0
      %610 = vmatpush1.bf16.msra.mxu0 0
      %611 = vmatprep.subr.bf16.mxu0 0
      %612 = vmatpush1.bf16.msra.mxu0 0
      %613 = vmatprep.subr.bf16.mxu0 0
      %614 = vmatpush1.bf16.msra.mxu0 0
      %615 = vmatprep.subr.bf16.mxu0 0
      %616 = vmatpush1.bf16.msra.mxu0 0
      %617 = vmatprep.mubr.bf16.mxu0 %v555
      %618 = vmatmul.mubr.bf16.gmra.mrb[0].mxu0 %v424
      %v619 = vpop.f32.mrb[0].mxu0
      %v620 = vadd.f32 0.0, %v619
      %v621 = vpop.f32.mrb[0].mxu0
      %v622 = vadd.f32 0.0, %v621
      %v623 = vpop.f32.mrb[0].mxu0
      %v624 = vadd.f32 0.0, %v623
      %v625 = vpop.f32.mrb[0].mxu0
      %v626 = vadd.f32 0.0, %v625
      %627 = vmatprep.mubr.bf16.mxu0 %v558
      %628 = vmatmul.mubr.bf16.gmra.mrb[0].mxu0 %v426
      %v629 = vpop.f32.mrb[0].mxu0
      %v630 = vadd.f32 0.0, %v629
      %v631 = vpop.f32.mrb[0].mxu0
      %v632 = vadd.f32 0.0, %v631
      %v633 = vpop.f32.mrb[0].mxu0
      %v634 = vadd.f32 0.0, %v633
      %v635 = vpop.f32.mrb[0].mxu0
      %v636 = vadd.f32 0.0, %v635
      %637 = vmatprep.mubr.bf16.mxu0 %v561
      %638 = vmatmul.mubr.bf16.gmra.mrb[0].mxu0 %v428
      %v639 = vpop.f32.mrb[0].mxu0
      %v640 = vadd.f32 0.0, %v639
      %v641 = vpop.f32.mrb[0].mxu0
      %v642 = vadd.f32 0.0, %v641
      %v643 = vpop.f32.mrb[0].mxu0
      %v644 = vadd.f32 0.0, %v643
      %v645 = vpop.f32.mrb[0].mxu0
      %v646 = vadd.f32 0.0, %v645
      %647 = vmatprep.mubr.bf16.mxu0 %v564
      %648 = vmatmul.mubr.bf16.gmra.mrb[0].mxu0 %v430
      %v649 = vpop.f32.mrb[0].mxu0
      %v650 = vadd.f32 0.0, %v649
      %v651 = vpop.f32.mrb[0].mxu0
      %v652 = vadd.f32 0.0, %v651
      %v653 = vpop.f32.mrb[0].mxu0
      %v654 = vadd.f32 0.0, %v653
      %v655 = vpop.f32.mrb[0].mxu0
      %v656 = vadd.f32 0.0, %v655
      %657 = vmatprep.mubr.bf16.mxu0 %v567
      %658 = vmatmul.mubr.bf16.gmra.mrb[0].mxu0 %v432
      %v659 = vpop.f32.mrb[0].mxu0
      %v660 = vadd.f32 0.0, %v659
      %v661 = vpop.f32.mrb[0].mxu0
      %v662 = vadd.f32 0.0, %v661
      %v663 = vpop.f32.mrb[0].mxu0
      %v664 = vadd.f32 0.0, %v663
      %v665 = vpop.f32.mrb[0].mxu0
      %v666 = vadd.f32 0.0, %v665
      %667 = vmatprep.mubr.bf16.mxu0 %v570
      %668 = vmatmul.mubr.bf16.gmra.mrb[0].mxu0 %v434
      %v669 = vpop.f32.mrb[0].mxu0
      %v670 = vadd.f32 0.0, %v669
      %v671 = vpop.f32.mrb[0].mxu0
      %v672 = vadd.f32 0.0, %v671
      %v673 = vpop.f32.mrb[0].mxu0
      %v674 = vadd.f32 0.0, %v673
      %v675 = vpop.f32.mrb[0].mxu0
      %v676 = vadd.f32 0.0, %v675
      %677 = vmatprep.mubr.bf16.mxu0 %v573
      %678 = vmatmul.mubr.bf16.gmra.mrb[0].mxu0 %v436
      %v679 = vpop.f32.mrb[0].mxu0
      %v680 = vadd.f32 0.0, %v679
      %v681 = vpop.f32.mrb[0].mxu0
      %v682 = vadd.f32 0.0, %v681
      %v683 = vpop.f32.mrb[0].mxu0
      %v684 = vadd.f32 0.0, %v683
      %v685 = vpop.f32.mrb[0].mxu0
      %v686 = vadd.f32 0.0, %v685
      %687 = vmatprep.mubr.bf16.mxu0 %v576
      %688 = vmatmul.mubr.bf16.gmra.mrb[0].mxu0 %v438
      %v689 = vpop.f32.mrb[0].mxu0
      %v690 = vadd.f32 0.0, %v689
      %v691 = vpop.f32.mrb[0].mxu0
      %v692 = vadd.f32 0.0, %v691
      %v693 = vpop.f32.mrb[0].mxu0
      %v694 = vadd.f32 0.0, %v693
      %v695 = vpop.f32.mrb[0].mxu0
      %v696 = vadd.f32 0.0, %v695
      %697 = vdwg.mxu0
      %v698 = vld [vmem:[%s2] sm:$0x3]
      %v700 = vlaneseq
      %v701 = vshrl.u32 %v700, 7
      %v702 = vsub.s32 0, %v701
      %v703 = vrot.slane %v698, %v702
      %v704 = vlaneseq
      %v705 = vshrl.u32 %v704, 7
      %v706 = vsub.s32 1, %v705
      %v707 = vrot.slane %v698, %v706
      %v710 = vmul.f32 %v620, %v703
      %v711 = vmul.f32 %v622, %v707
      %v712 = vmul.f32 %v624, %v703
      %v713 = vmul.f32 %v626, %v707
      %v714 = vmul.f32 %v630, %v703
      %v715 = vmul.f32 %v632, %v707
      %v716 = vmul.f32 %v634, %v703
      %v717 = vmul.f32 %v636, %v707
      %v718 = vmul.f32 %v640, %v703
      %v719 = vmul.f32 %v642, %v707
      %v720 = vmul.f32 %v644, %v703
      %v721 = vmul.f32 %v646, %v707
      %v722 = vmul.f32 %v650, %v703
      %v723 = vmul.f32 %v652, %v707
      %v724 = vmul.f32 %v654, %v703
      %v725 = vmul.f32 %v656, %v707
      %v726 = vmul.f32 %v660, %v703
      %v727 = vmul.f32 %v662, %v707
      %v728 = vmul.f32 %v664, %v703
      %v729 = vmul.f32 %v666, %v707
      %v730 = vmul.f32 %v670, %v703
      %v731 = vmul.f32 %v672, %v707
      %v732 = vmul.f32 %v674, %v703
      %v733 = vmul.f32 %v676, %v707
      %v734 = vmul.f32 %v680, %v703
      %v735 = vmul.f32 %v682, %v707
      %v736 = vmul.f32 %v684, %v703
      %v737 = vmul.f32 %v686, %v707
      %v738 = vmul.f32 %v690, %v703
      %v739 = vmul.f32 %v692, %v707
      %v740 = vmul.f32 %v694, %v703
      %v741 = vmul.f32 %v696, %v707
      %v742 = vld [vmem:[%s3] sm:$0x3]
      %v744 = vlaneseq
      %v745 = vshrl.u32 %v744, 7
      %v746 = vsub.s32 0, %v745
      %v747 = vrot.slane %v742, %v746
      %v748 = vlaneseq
      %v749 = vshrl.u32 %v748, 7
      %v750 = vsub.s32 1, %v749
      %v751 = vrot.slane %v742, %v750
      %v754 = vadd.f32 %v710, %v747
      %v755 = vadd.f32 %v711, %v751
      %v756 = vadd.f32 %v712, %v747
      %v757 = vadd.f32 %v713, %v751
      %v758 = vadd.f32 %v714, %v747
      %v759 = vadd.f32 %v715, %v751
      %v760 = vadd.f32 %v716, %v747
      %v761 = vadd.f32 %v717, %v751
      %v762 = vadd.f32 %v718, %v747
      %v763 = vadd.f32 %v719, %v751
      %v764 = vadd.f32 %v720, %v747
      %v765 = vadd.f32 %v721, %v751
      %v766 = vadd.f32 %v722, %v747
      %v767 = vadd.f32 %v723, %v751
      %v768 = vadd.f32 %v724, %v747
      %v769 = vadd.f32 %v725, %v751
      %v770 = vadd.f32 %v726, %v747
      %v771 = vadd.f32 %v727, %v751
      %v772 = vadd.f32 %v728, %v747
      %v773 = vadd.f32 %v729, %v751
      %v774 = vadd.f32 %v730, %v747
      %v775 = vadd.f32 %v731, %v751
      %v776 = vadd.f32 %v732, %v747
      %v777 = vadd.f32 %v733, %v751
      %v778 = vadd.f32 %v734, %v747
      %v779 = vadd.f32 %v735, %v751
      %v780 = vadd.f32 %v736, %v747
      %v781 = vadd.f32 %v737, %v751
      %v782 = vadd.f32 %v738, %v747
      %v783 = vadd.f32 %v739, %v751
      %v784 = vadd.f32 %v740, %v747
      %v785 = vadd.f32 %v741, %v751
      %v786 = vmax.f32 %v754, 0.0
      %v787 = vmax.f32 %v755, 0.0
      %v788 = vmax.f32 %v756, 0.0
      %v789 = vmax.f32 %v757, 0.0
      %v790 = vmax.f32 %v758, 0.0
      %v791 = vmax.f32 %v759, 0.0
      %v792 = vmax.f32 %v760, 0.0
      %v793 = vmax.f32 %v761, 0.0
      %v794 = vmax.f32 %v762, 0.0
      %v795 = vmax.f32 %v763, 0.0
      %v796 = vmax.f32 %v764, 0.0
      %v797 = vmax.f32 %v765, 0.0
      %v798 = vmax.f32 %v766, 0.0
      %v799 = vmax.f32 %v767, 0.0
      %v800 = vmax.f32 %v768, 0.0
      %v801 = vmax.f32 %v769, 0.0
      %v802 = vmax.f32 %v770, 0.0
      %v803 = vmax.f32 %v771, 0.0
      %v804 = vmax.f32 %v772, 0.0
      %v805 = vmax.f32 %v773, 0.0
      %v806 = vmax.f32 %v774, 0.0
      %v807 = vmax.f32 %v775, 0.0
      %v808 = vmax.f32 %v776, 0.0
      %v809 = vmax.f32 %v777, 0.0
      %v810 = vmax.f32 %v778, 0.0
      %v811 = vmax.f32 %v779, 0.0
      %v812 = vmax.f32 %v780, 0.0
      %v813 = vmax.f32 %v781, 0.0
      %v814 = vmax.f32 %v782, 0.0
      %v815 = vmax.f32 %v783, 0.0
      %v816 = vmax.f32 %v784, 0.0
      %v817 = vmax.f32 %v785, 0.0
      %vm850 = vcmask 1046528
      %v851 = vrot.slane %v786, 1
      %v852 = vrot.slane %v788, 1
      %v853 = vsel %vm850, %v851, %v852
      %v854 = vrot.slane %v787, 1
      %v855 = vrot.slane %v789, 1
      %v856 = vsel %vm850, %v854, %v855
      %v857 = vrot.slane %v790, 1
      %v858 = vrot.slane %v792, 1
      %v859 = vsel %vm850, %v857, %v858
      %v860 = vrot.slane %v791, 1
      %v861 = vrot.slane %v793, 1
      %v862 = vsel %vm850, %v860, %v861
      %v863 = vrot.slane %v794, 1
      %v864 = vrot.slane %v796, 1
      %v865 = vsel %vm850, %v863, %v864
      %v866 = vrot.slane %v795, 1
      %v867 = vrot.slane %v797, 1
      %v868 = vsel %vm850, %v866, %v867
      %v869 = vrot.slane %v798, 1
      %v870 = vrot.slane %v800, 1
      %v871 = vsel %vm850, %v869, %v870
      %v872 = vrot.slane %v799, 1
      %v873 = vrot.slane %v801, 1
      %v874 = vsel %vm850, %v872, %v873
      %v875 = vrot.slane %v802, 1
      %v876 = vrot.slane %v804, 1
      %v877 = vsel %vm850, %v875, %v876
      %v878 = vrot.slane %v803, 1
      %v879 = vrot.slane %v805, 1
      %v880 = vsel %vm850, %v878, %v879
      %v881 = vrot.slane %v806, 1
      %v882 = vrot.slane %v808, 1
      %v883 = vsel %vm850, %v881, %v882
      %v884 = vrot.slane %v807, 1
      %v885 = vrot.slane %v809, 1
      %v886 = vsel %vm850, %v884, %v885
      %v887 = vrot.slane %v810, 1
      %v888 = vrot.slane %v812, 1
      %v889 = vsel %vm850, %v887, %v888
      %v890 = vrot.slane %v811, 1
      %v891 = vrot.slane %v813, 1
      %v892 = vsel %vm850, %v890, %v891
      %v893 = vrot.slane %v814, 1
      %v894 = vrot.slane %v816, 1
      %v895 = vsel %vm850, %v893, %v894
      %v896 = vrot.slane %v815, 1
      %v897 = vrot.slane %v817, 1
      %v898 = vsel %vm850, %v896, %v897
      %v931 = vmax.f32 %v786, %v853
      %v932 = vmax.f32 %v787, %v856
      %v933 = vmax.f32 %v788, %v852
      %v934 = vmax.f32 %v789, %v855
      %v935 = vmax.f32 %v790, %v859
      %v936 = vmax.f32 %v791, %v862
      %v937 = vmax.f32 %v792, %v858
      %v938 = vmax.f32 %v793, %v861
      %v939 = vmax.f32 %v794, %v865
      %v940 = vmax.f32 %v795, %v868
      %v941 = vmax.f32 %v796, %v864
      %v942 = vmax.f32 %v797, %v867
      %v943 = vmax.f32 %v798, %v871
      %v944 = vmax.f32 %v799, %v874
      %v945 = vmax.f32 %v800, %v870
      %v946 = vmax.f32 %v801, %v873
      %v947 = vmax.f32 %v802, %v877
      %v948 = vmax.f32 %v803, %v880
      %v949 = vmax.f32 %v804, %v876
      %v950 = vmax.f32 %v805, %v879
      %v951 = vmax.f32 %v806, %v883
      %v952 = vmax.f32 %v807, %v886
      %v953 = vmax.f32 %v808, %v882
      %v954 = vmax.f32 %v809, %v885
      %v955 = vmax.f32 %v810, %v889
      %v956 = vmax.f32 %v811, %v892
      %v957 = vmax.f32 %v812, %v888
      %v958 = vmax.f32 %v813, %v891
      %v959 = vmax.f32 %v814, %v895
      %v960 = vmax.f32 %v815, %v898
      %v961 = vmax.f32 %v816, %v894
      %v962 = vmax.f32 %v817, %v897
      %995 = vrot.lane.b32.xlu0 %v931, 112
      %v996 = vpop.permute.xlu0 %995
      %997 = vrot.lane.b32.xlu0 %v932, 112
      %v998 = vpop.permute.xlu0 %997
      %999 = vrot.lane.b32.xlu0 %v933, 112
      %v1000 = vpop.permute.xlu0 %999
      %1001 = vrot.lane.b32.xlu0 %v934, 112
      %v1002 = vpop.permute.xlu0 %1001
      %1003 = vrot.lane.b32.xlu0 %v935, 112
      %v1004 = vpop.permute.xlu0 %1003
      %1005 = vrot.lane.b32.xlu0 %v936, 112
      %v1006 = vpop.permute.xlu0 %1005
      %1007 = vrot.lane.b32.xlu0 %v937, 112
      %v1008 = vpop.permute.xlu0 %1007
      %1009 = vrot.lane.b32.xlu0 %v938, 112
      %v1010 = vpop.permute.xlu0 %1009
      %1011 = vrot.lane.b32.xlu0 %v939, 112
      %v1012 = vpop.permute.xlu0 %1011
      %1013 = vrot.lane.b32.xlu0 %v940, 112
      %v1014 = vpop.permute.xlu0 %1013
      %1015 = vrot.lane.b32.xlu0 %v941, 112
      %v1016 = vpop.permute.xlu0 %1015
      %1017 = vrot.lane.b32.xlu0 %v942, 112
      %v1018 = vpop.permute.xlu0 %1017
      %1019 = vrot.lane.b32.xlu0 %v943, 112
      %v1020 = vpop.permute.xlu0 %1019
      %1021 = vrot.lane.b32.xlu0 %v944, 112
      %v1022 = vpop.permute.xlu0 %1021
      %1023 = vrot.lane.b32.xlu0 %v945, 112
      %v1024 = vpop.permute.xlu0 %1023
      %1025 = vrot.lane.b32.xlu0 %v946, 112
      %v1026 = vpop.permute.xlu0 %1025
      %1027 = vrot.lane.b32.xlu0 %v947, 112
      %v1028 = vpop.permute.xlu0 %1027
      %1029 = vrot.lane.b32.xlu0 %v948, 112
      %v1030 = vpop.permute.xlu0 %1029
      %1031 = vrot.lane.b32.xlu0 %v949, 112
      %v1032 = vpop.permute.xlu0 %1031
      %1033 = vrot.lane.b32.xlu0 %v950, 112
      %v1034 = vpop.permute.xlu0 %1033
      %1035 = vrot.lane.b32.xlu0 %v951, 112
      %v1036 = vpop.permute.xlu0 %1035
      %1037 = vrot.lane.b32.xlu0 %v952, 112
      %v1038 = vpop.permute.xlu0 %1037
      %1039 = vrot.lane.b32.xlu0 %v953, 112
      %v1040 = vpop.permute.xlu0 %1039
      %1041 = vrot.lane.b32.xlu0 %v954, 112
      %v1042 = vpop.permute.xlu0 %1041
      %1043 = vrot.lane.b32.xlu0 %v955, 112
      %v1044 = vpop.permute.xlu0 %1043
      %1045 = vrot.lane.b32.xlu0 %v956, 112
      %v1046 = vpop.permute.xlu0 %1045
      %1047 = vrot.lane.b32.xlu0 %v957, 112
      %v1048 = vpop.permute.xlu0 %1047
      %1049 = vrot.lane.b32.xlu0 %v958, 112
      %v1050 = vpop.permute.xlu0 %1049
      %1051 = vrot.lane.b32.xlu0 %v959, 112
      %v1052 = vpop.permute.xlu0 %1051
      %1053 = vrot.lane.b32.xlu0 %v960, 112
      %v1054 = vpop.permute.xlu0 %1053
      %1055 = vrot.lane.b32.xlu0 %v961, 112
      %v1056 = vpop.permute.xlu0 %1055
      %1057 = vrot.lane.b32.xlu0 %v962, 112
      %v1058 = vpop.permute.xlu0 %1057
      %vm1059 = vcmask 916480
      %v1060 = vsel %vm1059, %v996, %v998
      %v1061 = vsel %vm1059, %v1000, %v1002
      %v1062 = vsel %vm1059, %v1004, %v1006
      %v1063 = vsel %vm1059, %v1008, %v1010
      %v1064 = vsel %vm1059, %v1012, %v1014
      %v1065 = vsel %vm1059, %v1016, %v1018
      %v1066 = vsel %vm1059, %v1020, %v1022
      %v1067 = vsel %vm1059, %v1024, %v1026
      %v1068 = vsel %vm1059, %v1028, %v1030
      %v1069 = vsel %vm1059, %v1032, %v1034
      %v1070 = vsel %vm1059, %v1036, %v1038
      %v1071 = vsel %vm1059, %v1040, %v1042
      %v1072 = vsel %vm1059, %v1044, %v1046
      %v1073 = vsel %vm1059, %v1048, %v1050
      %v1074 = vsel %vm1059, %v1052, %v1054
      %v1075 = vsel %vm1059, %v1056, %v1058
      %v1108 = vmax.f32 %v931, %v1060
      %v1109 = vmax.f32 %v932, %v998
      %v1110 = vmax.f32 %v933, %v1061
      %v1111 = vmax.f32 %v934, %v1002
      %v1112 = vmax.f32 %v935, %v1062
      %v1113 = vmax.f32 %v936, %v1006
      %v1114 = vmax.f32 %v937, %v1063
      %v1115 = vmax.f32 %v938, %v1010
      %v1116 = vmax.f32 %v939, %v1064
      %v1117 = vmax.f32 %v940, %v1014
      %v1118 = vmax.f32 %v941, %v1065
      %v1119 = vmax.f32 %v942, %v1018
      %v1120 = vmax.f32 %v943, %v1066
      %v1121 = vmax.f32 %v944, %v1022
      %v1122 = vmax.f32 %v945, %v1067
      %v1123 = vmax.f32 %v946, %v1026
      %v1124 = vmax.f32 %v947, %v1068
      %v1125 = vmax.f32 %v948, %v1030
      %v1126 = vmax.f32 %v949, %v1069
      %v1127 = vmax.f32 %v950, %v1034
      %v1128 = vmax.f32 %v951, %v1070
      %v1129 = vmax.f32 %v952, %v1038
      %v1130 = vmax.f32 %v953, %v1071
      %v1131 = vmax.f32 %v954, %v1042
      %v1132 = vmax.f32 %v955, %v1072
      %v1133 = vmax.f32 %v956, %v1046
      %v1134 = vmax.f32 %v957, %v1073
      %v1135 = vmax.f32 %v958, %v1050
      %v1136 = vmax.f32 %v959, %v1074
      %v1137 = vmax.f32 %v960, %v1054
      %v1138 = vmax.f32 %v961, %v1075
      %v1139 = vmax.f32 %v962, %v1058
      %v1140 = vlaneseq
      %v1141 = vshrl.u32 %v1140, 7
      %v1142 = vadd.s32 %v1141, 8
      %vm1143 = vcmp.lt.s32.totalorder %v1141, 0
      %v1144 = vsub.s32 0, %v1141
      %v1145 = vsel %vm1143, %v1144, %v1141
      %v1146 = vshrl.u32 %v1145, 1
      %v1147 = vand.u32 %v1145, 1
      %v1148 = vsub.s32 0, %v1147
      %v1149 = vsel %vm1143, %v1148, %v1147
      %vm1150 = vcmp.lt.s32.totalorder %v1142, 0
      %v1151 = vsub.s32 0, %v1142
      %v1152 = vsel %vm1150, %v1151, %v1142
      %v1153 = vshrl.u32 %v1152, 1
      %v1154 = vand.u32 %v1152, 1
      %v1155 = vsub.s32 0, %v1154
      %v1156 = vsel %vm1150, %v1155, %v1154
      %vm1157 = vcmp.ne.s32.totalorder %v1149, 0
      %vm1158 = vcmp.ne.s32.totalorder %v1156, 0
      %vm1159 = vcmp.lt.s32.totalorder %v1149, 0
      %vm1160 = vcmp.lt.s32.totalorder %v1156, 0
      %vm1161 = vmand %vm1159, %vm1157
      %vm1162 = vmand %vm1160, %vm1158
      %v1163 = vadd.s32 %v1149, 2
      %v1164 = vadd.s32 %v1156, 2
      %v1165 = vsel %vm1161, %v1163, %v1149
      %v1166 = vsel %vm1162, %v1164, %v1156
      %vm1167 = vcmp.eq.s32.totalorder %v1165, 0
      %vm1168 = vcmp.eq.s32.totalorder %v1166, 0
      %v1169 = vsel %vm1167, %v1108, 0.0
      %v1170 = vsel %vm1167, %v1109, 0.0
      %v1171 = vsel %vm1168, %v1110, 0.0
      %v1172 = vsel %vm1168, %v1111, 0.0
      %v1173 = vsel %vm1167, %v1112, 0.0
      %v1174 = vsel %vm1167, %v1113, 0.0
      %v1175 = vsel %vm1168, %v1114, 0.0
      %v1176 = vsel %vm1168, %v1115, 0.0
      %v1177 = vsel %vm1167, %v1116, 0.0
      %v1178 = vsel %vm1167, %v1117, 0.0
      %v1179 = vsel %vm1168, %v1118, 0.0
      %v1180 = vsel %vm1168, %v1119, 0.0
      %v1181 = vsel %vm1167, %v1120, 0.0
      %v1182 = vsel %vm1167, %v1121, 0.0
      %v1183 = vsel %vm1168, %v1122, 0.0
      %v1184 = vsel %vm1168, %v1123, 0.0
      %v1185 = vsel %vm1167, %v1124, 0.0
      %v1186 = vsel %vm1167, %v1125, 0.0
      %v1187 = vsel %vm1168, %v1126, 0.0
      %v1188 = vsel %vm1168, %v1127, 0.0
      %v1189 = vsel %vm1167, %v1128, 0.0
      %v1190 = vsel %vm1167, %v1129, 0.0
      %v1191 = vsel %vm1168, %v1130, 0.0
      %v1192 = vsel %vm1168, %v1131, 0.0
      %v1193 = vsel %vm1167, %v1132, 0.0
      %v1194 = vsel %vm1167, %v1133, 0.0
      %v1195 = vsel %vm1168, %v1134, 0.0
      %v1196 = vsel %vm1168, %v1135, 0.0
      %v1197 = vsel %vm1167, %v1136, 0.0
      %v1198 = vsel %vm1167, %v1137, 0.0
      %v1199 = vsel %vm1168, %v1138, 0.0
      %v1200 = vsel %vm1168, %v1139, 0.0
      %v1201 = vsel %vm850, %v1171, 0.0
      %v1202 = vadd.f32 %v1169, %v1201
      %v1203 = vrot.slane %v1202, 4
      %v1204 = vadd.f32 %v1202, %v1203
      %v1205 = vrot.slane %v1204, 2
      %v1206 = vadd.f32 %v1204, %v1205
      %v1207 = vrot.slane %v1206, 1
      %v1208 = vadd.f32 %v1206, %v1207
      %v1209 = vsel %vm1059, %v1170, 0.0
      %vm1210 = vcmask 915456
      %v1211 = vsel %vm1210, %v1172, 0.0
      %v1212 = vadd.f32 %v1209, %v1211
      %v1213 = vrot.slane %v1212, 4
      %v1214 = vadd.f32 %v1212, %v1213
      %v1215 = vrot.slane %v1214, 2
      %v1216 = vadd.f32 %v1214, %v1215
      %v1217 = vrot.slane %v1216, 1
      %v1218 = vadd.f32 %v1216, %v1217
      %v1219 = vsel %vm850, %v1175, 0.0
      %v1220 = vadd.f32 %v1173, %v1219
      %v1221 = vrot.slane %v1220, 4
      %v1222 = vadd.f32 %v1220, %v1221
      %v1223 = vrot.slane %v1222, 2
      %v1224 = vadd.f32 %v1222, %v1223
      %v1225 = vrot.slane %v1224, 1
      %v1226 = vadd.f32 %v1224, %v1225
      %v1227 = vsel %vm1059, %v1174, 0.0
      %v1228 = vsel %vm1210, %v1176, 0.0
      %v1229 = vadd.f32 %v1227, %v1228
      %v1230 = vrot.slane %v1229, 4
      %v1231 = vadd.f32 %v1229, %v1230
      %v1232 = vrot.slane %v1231, 2
      %v1233 = vadd.f32 %v1231, %v1232
      %v1234 = vrot.slane %v1233, 1
      %v1235 = vadd.f32 %v1233, %v1234
      %v1236 = vsel %vm850, %v1179, 0.0
      %v1237 = vadd.f32 %v1177, %v1236
      %v1238 = vrot.slane %v1237, 4
      %v1239 = vadd.f32 %v1237, %v1238
      %v1240 = vrot.slane %v1239, 2
      %v1241 = vadd.f32 %v1239, %v1240
      %v1242 = vrot.slane %v1241, 1
      %v1243 = vadd.f32 %v1241, %v1242
      %v1244 = vsel %vm1059, %v1178, 0.0
      %v1245 = vsel %vm1210, %v1180, 0.0
      %v1246 = vadd.f32 %v1244, %v1245
      %v1247 = vrot.slane %v1246, 4
      %v1248 = vadd.f32 %v1246, %v1247
      %v1249 = vrot.slane %v1248, 2
      %v1250 = vadd.f32 %v1248, %v1249
      %v1251 = vrot.slane %v1250, 1
      %v1252 = vadd.f32 %v1250, %v1251
      %v1253 = vsel %vm850, %v1183, 0.0
      %v1254 = vadd.f32 %v1181, %v1253
      %v1255 = vrot.slane %v1254, 4
      %v1256 = vadd.f32 %v1254, %v1255
      %v1257 = vrot.slane %v1256, 2
      %v1258 = vadd.f32 %v1256, %v1257
      %v1259 = vrot.slane %v1258, 1
      %v1260 = vadd.f32 %v1258, %v1259
      %v1261 = vsel %vm1059, %v1182, 0.0
      %v1262 = vsel %vm1210, %v1184, 0.0
      %v1263 = vadd.f32 %v1261, %v1262
      %v1264 = vrot.slane %v1263, 4
      %v1265 = vadd.f32 %v1263, %v1264
      %v1266 = vrot.slane %v1265, 2
      %v1267 = vadd.f32 %v1265, %v1266
      %v1268 = vrot.slane %v1267, 1
      %v1269 = vadd.f32 %v1267, %v1268
      %v1270 = vsel %vm850, %v1187, 0.0
      %v1271 = vadd.f32 %v1185, %v1270
      %v1272 = vrot.slane %v1271, 4
      %v1273 = vadd.f32 %v1271, %v1272
      %v1274 = vrot.slane %v1273, 2
      %v1275 = vadd.f32 %v1273, %v1274
      %v1276 = vrot.slane %v1275, 1
      %v1277 = vadd.f32 %v1275, %v1276
      %v1278 = vsel %vm1059, %v1186, 0.0
      %v1279 = vsel %vm1210, %v1188, 0.0
      %v1280 = vadd.f32 %v1278, %v1279
      %v1281 = vrot.slane %v1280, 4
      %v1282 = vadd.f32 %v1280, %v1281
      %v1283 = vrot.slane %v1282, 2
      %v1284 = vadd.f32 %v1282, %v1283
      %v1285 = vrot.slane %v1284, 1
      %v1286 = vadd.f32 %v1284, %v1285
      %v1287 = vsel %vm850, %v1191, 0.0
      %v1288 = vadd.f32 %v1189, %v1287
      %v1289 = vrot.slane %v1288, 4
      %v1290 = vadd.f32 %v1288, %v1289
      %v1291 = vrot.slane %v1290, 2
      %v1292 = vadd.f32 %v1290, %v1291
      %v1293 = vrot.slane %v1292, 1
      %v1294 = vadd.f32 %v1292, %v1293
      %v1295 = vsel %vm1059, %v1190, 0.0
      %v1296 = vsel %vm1210, %v1192, 0.0
      %v1297 = vadd.f32 %v1295, %v1296
      %v1298 = vrot.slane %v1297, 4
      %v1299 = vadd.f32 %v1297, %v1298
      %v1300 = vrot.slane %v1299, 2
      %v1301 = vadd.f32 %v1299, %v1300
      %v1302 = vrot.slane %v1301, 1
      %v1303 = vadd.f32 %v1301, %v1302
      %v1304 = vsel %vm850, %v1195, 0.0
      %v1305 = vadd.f32 %v1193, %v1304
      %v1306 = vrot.slane %v1305, 4
      %v1307 = vadd.f32 %v1305, %v1306
      %v1308 = vrot.slane %v1307, 2
      %v1309 = vadd.f32 %v1307, %v1308
      %v1310 = vrot.slane %v1309, 1
      %v1311 = vadd.f32 %v1309, %v1310
      %v1312 = vsel %vm1059, %v1194, 0.0
      %v1313 = vsel %vm1210, %v1196, 0.0
      %v1314 = vadd.f32 %v1312, %v1313
      %v1315 = vrot.slane %v1314, 4
      %v1316 = vadd.f32 %v1314, %v1315
      %v1317 = vrot.slane %v1316, 2
      %v1318 = vadd.f32 %v1316, %v1317
      %v1319 = vrot.slane %v1318, 1
      %v1320 = vadd.f32 %v1318, %v1319
      %v1321 = vsel %vm850, %v1199, 0.0
      %v1322 = vadd.f32 %v1197, %v1321
      %v1323 = vrot.slane %v1322, 4
      %v1324 = vadd.f32 %v1322, %v1323
      %v1325 = vrot.slane %v1324, 2
      %v1326 = vadd.f32 %v1324, %v1325
      %v1327 = vrot.slane %v1326, 1
      %v1328 = vadd.f32 %v1326, %v1327
      %v1329 = vsel %vm1059, %v1198, 0.0
      %v1330 = vsel %vm1210, %v1200, 0.0
      %v1331 = vadd.f32 %v1329, %v1330
      %v1332 = vrot.slane %v1331, 4
      %v1333 = vadd.f32 %v1331, %v1332
      %v1334 = vrot.slane %v1333, 2
      %v1335 = vadd.f32 %v1333, %v1334
      %v1336 = vrot.slane %v1335, 1
      %v1337 = vadd.f32 %v1335, %v1336
      %v1338 = vld [vmem:[%s4] sm:$0xff]
      %v1339 = vld [vmem:[%s4 + $0x8] sm:$0xff]
      %v1340 = vld [vmem:[%s4 + $0x10] sm:$0xff]
      %v1341 = vld [vmem:[%s4 + $0x18] sm:$0xff]
      %v1342 = vld [vmem:[%s4 + $0x20] sm:$0xff]
      %v1343 = vld [vmem:[%s4 + $0x28] sm:$0xff]
      %v1344 = vld [vmem:[%s4 + $0x30] sm:$0xff]
      %v1345 = vld [vmem:[%s4 + $0x38] sm:$0xff]
      %v1346 = vld [vmem:[%s4 + $0x40] sm:$0xff]
      %v1347 = vld [vmem:[%s4 + $0x48] sm:$0xff]
      %v1348 = vld [vmem:[%s4 + $0x50] sm:$0xff]
      %v1349 = vld [vmem:[%s4 + $0x58] sm:$0xff]
      %v1350 = vld [vmem:[%s4 + $0x60] sm:$0xff]
      %v1351 = vld [vmem:[%s4 + $0x68] sm:$0xff]
      %v1352 = vld [vmem:[%s4 + $0x70] sm:$0xff]
      %v1353 = vld [vmem:[%s4 + $0x78] sm:$0xff]
      %v1354 = vld [vmem:[%s4 + $0x80] sm:$0xff]
      %v1355 = vld [vmem:[%s4 + $0x88] sm:$0xff]
      %v1356 = vld [vmem:[%s4 + $0x90] sm:$0xff]
      %v1357 = vld [vmem:[%s4 + $0x98] sm:$0xff]
      %v1358 = vld [vmem:[%s4 + $0xa0] sm:$0xff]
      %v1359 = vld [vmem:[%s4 + $0xa8] sm:$0xff]
      %v1360 = vld [vmem:[%s4 + $0xb0] sm:$0xff]
      %v1361 = vld [vmem:[%s4 + $0xb8] sm:$0xff]
      %v1362 = vld [vmem:[%s4 + $0xc0] sm:$0xff]
      %v1363 = vld [vmem:[%s4 + $0xc8] sm:$0xff]
      %v1364 = vld [vmem:[%s4 + $0xd0] sm:$0xff]
      %v1365 = vld [vmem:[%s4 + $0xd8] sm:$0xff]
      %v1366 = vld [vmem:[%s4 + $0xe0] sm:$0xff]
      %v1367 = vld [vmem:[%s4 + $0xe8] sm:$0xff]
      %v1368 = vld [vmem:[%s5] sm:$0x1]
      %v1370 = vlaneseq
      %v1371 = vshrl.u32 %v1370, 7
      %v1372 = vsub.s32 0, %v1371
      %v1373 = vrot.slane %v1368, %v1372
      %vm1391 = vcmask 1041409
      %v1392 = vsel %vm1391, %v1226, %v1208
      %vm1393 = vcmask 1042434
      %v1394 = vsel %vm1393, %v1243, %v1392
      %vm1395 = vcmask 1043459
      %v1396 = vsel %vm1395, %v1260, %v1394
      %vm1397 = vcmask 1044484
      %v1398 = vsel %vm1397, %v1277, %v1396
      %vm1399 = vcmask 1045509
      %v1400 = vsel %vm1399, %v1294, %v1398
      %vm1401 = vcmask 1046534
      %v1402 = vsel %vm1401, %v1311, %v1400
      %vm1403 = vcmask 1047559
      %v1404 = vsel %vm1403, %v1328, %v1402
      %v1405 = vsel %vm1391, %v1235, %v1218
      %v1406 = vsel %vm1393, %v1252, %v1405
      %v1407 = vsel %vm1395, %v1269, %v1406
      %v1408 = vsel %vm1397, %v1286, %v1407
      %v1409 = vsel %vm1399, %v1303, %v1408
      %v1410 = vsel %vm1401, %v1320, %v1409
      %v1411 = vsel %vm1403, %v1337, %v1410
      %v1413 = vsel %vm1059, %v1411, 0
      %1415 = vmatprep.subr.mxu0 0.0
      %1416 = vmatpush1.msra.mxu0 %v1338
      %1417 = vmatprep.subr.mxu0 0.0
      %1418 = vmatpush1.msra.mxu0 %v1339
      %1419 = vmatprep.subr.mxu0 0.0
      %1420 = vmatpush1.msra.mxu0 %v1340
      %1421 = vmatprep.subr.mxu0 0.0
      %1422 = vmatpush1.msra.mxu0 %v1341
      %1423 = vmatprep.subr.mxu0 0.0
      %1424 = vmatpush1.msra.mxu0 %v1342
      %1425 = vmatprep.subr.mxu0 0.0
      %1426 = vmatpush1.msra.mxu0 %v1343
      %1427 = vmatprep.subr.mxu0 0.0
      %1428 = vmatpush1.msra.mxu0 %v1344
      %1429 = vmatprep.subr.mxu0 0.0
      %1430 = vmatpush1.msra.mxu0 %v1345
      %1431 = vmatprep.subr.mxu0 0.0
      %1432 = vmatpush1.msra.mxu0 %v1346
      %1433 = vmatprep.subr.mxu0 0.0
      %1434 = vmatpush1.msra.mxu0 %v1347
      %1435 = vmatprep.subr.mxu0 0.0
      %1436 = vmatpush1.msra.mxu0 %v1348
      %1437 = vmatprep.subr.mxu0 0.0
      %1438 = vmatpush1.msra.mxu0 %v1349
      %1439 = vmatprep.subr.mxu0 0.0
      %1440 = vmatpush1.msra.mxu0 %v1350
      %1441 = vmatprep.subr.mxu0 0.0
      %1442 = vmatpush1.msra.mxu0 %v1351
      %1443 = vmatprep.subr.mxu0 0.0
      %1444 = vmatpush1.msra.mxu0 %v1352
      %1445 = vmatprep.subr.mxu0 0.0
      %1446 = vmatpush1.msra.mxu0 %v1353
      %1447 = vmatprep.subr.mxu0 0.0
      %1448 = vmatpush1.msra.mxu0 %v1354
      %1449 = vmatprep.subr.mxu0 0.0
      %1450 = vmatpush1.msra.mxu0 %v1355
      %1451 = vmatprep.subr.mxu0 0.0
      %1452 = vmatpush1.msra.mxu0 %v1356
      %1453 = vmatprep.subr.mxu0 0.0
      %1454 = vmatpush1.msra.mxu0 %v1357
      %1455 = vmatprep.subr.mxu0 0.0
      %1456 = vmatpush1.msra.mxu0 %v1358
      %1457 = vmatprep.subr.mxu0 0.0
      %1458 = vmatpush1.msra.mxu0 %v1359
      %1459 = vmatprep.subr.mxu0 0.0
      %1460 = vmatpush1.msra.mxu0 %v1360
      %1461 = vmatprep.subr.mxu0 0.0
      %1462 = vmatpush1.msra.mxu0 %v1361
      %1463 = vmatprep.subr.mxu0 0.0
      %1464 = vmatpush1.msra.mxu0 %v1362
      %1465 = vmatprep.subr.mxu0 0.0
      %1466 = vmatpush1.msra.mxu0 %v1363
      %1467 = vmatprep.subr.mxu0 0.0
      %1468 = vmatpush1.msra.mxu0 %v1364
      %1469 = vmatprep.subr.mxu0 0.0
      %1470 = vmatpush1.msra.mxu0 %v1365
      %1471 = vmatprep.subr.mxu0 0.0
      %1472 = vmatpush1.msra.mxu0 %v1366
      %1473 = vmatprep.subr.mxu0 0.0
      %1474 = vmatpush1.msra.mxu0 %v1367
      %1475 = vmatprep.subr.mxu0 0.0
      %1476 = vmatpush1.msra.mxu0 0.0
      %1477 = vmatprep.subr.mxu0 0.0
      %1478 = vmatpush1.msra.mxu0 0.0
      %1479 = vmatprep.mubr.f32.mxu0 %v1413
      %1480 = vmatmul.mubr.f32.gmra.mrb[0].mxu0 %v1404
      %v1481 = vpop.f32.mrb[0].mxu0
      %v1482 = vadd.f32 %v1373, %v1481
      %v1483 = vpop.f32.mrb[0].mxu0
      %1484 = vdwg.mxu0
      %vm1485 = vcmask 261120
      %v1486 = vsel %vm1485, %v1482, 0.0
      %1487 = vadd.xlane.f32.xlu0 %v1486
      %v1488 = vpop.xlane.xlu0 %1487
      %v1489 = vrcp.pop 32.0
      %v1490 = vmul.f32 %v1488, %v1489
      %v1491 = vsub.f32 %v1482, %v1490
      %v1492 = vmul.f32 %v1491, %v1491
      %v1493 = vsel %vm1485, %v1492, 0.0
      %1494 = vadd.xlane.f32.xlu0 %v1493
      %v1495 = vpop.xlane.xlu0 %1494
      %v1496 = vmul.f32 %v1495, %v1489
      %v1497 = vadd.f32 %v1496, 1e-05
      %v1498 = vrsqrt.pop %v1497
      %v1499 = vmul.f32 %v1491, %v1498
      %v1500 = vld [vmem:[%s6] sm:$0x1]
      %v1502 = vlaneseq
      %v1503 = vshrl.u32 %v1502, 7
      %v1504 = vsub.s32 0, %v1503
      %v1505 = vrot.slane %v1500, %v1504
      %v1507 = vmul.f32 %v1499, %v1505
      %v1508 = vld [vmem:[%s7] sm:$0x1]
      %v1510 = vlaneseq
      %v1511 = vshrl.u32 %v1510, 7
      %v1512 = vsub.s32 0, %v1511
      %v1513 = vrot.slane %v1508, %v1512
      %v1515 = vadd.f32 %v1507, %v1513
      %v1516 = vld [vmem:[%s8] sm:$0xff]
      %v1517 = vld [vmem:[%s8 + $0x8] sm:$0xff]
      %v1518 = vld [vmem:[%s8 + $0x10] sm:$0xff]
      %v1519 = vld [vmem:[%s8 + $0x18] sm:$0xff]
      %v1520 = vld [vmem:[%s8 + $0x20] sm:$0xff]
      %v1521 = vld [vmem:[%s8 + $0x28] sm:$0xff]
      %v1522 = vld [vmem:[%s8 + $0x30] sm:$0xff]
      %v1523 = vld [vmem:[%s8 + $0x38] sm:$0xff]
      %v1524 = vld [vmem:[%s8 + $0x40] sm:$0xff]
      %v1525 = vld [vmem:[%s8 + $0x48] sm:$0xff]
      %v1526 = vld [vmem:[%s8 + $0x50] sm:$0xff]
      %v1527 = vld [vmem:[%s8 + $0x58] sm:$0xff]
      %v1528 = vld [vmem:[%s8 + $0x60] sm:$0xff]
      %v1529 = vld [vmem:[%s8 + $0x68] sm:$0xff]
      %v1530 = vld [vmem:[%s8 + $0x70] sm:$0xff]
      %v1531 = vld [vmem:[%s8 + $0x78] sm:$0xff]
      %v1533 = vsel %vm1485, %v1515, 0
      %1535 = vmatprep.subr.mxu0 %v1517
      %1536 = vmatpush1.msra.mxu0 %v1516
      %1537 = vmatprep.subr.mxu0 %v1521
      %1538 = vmatpush1.msra.mxu0 %v1520
      %1539 = vmatprep.subr.mxu0 %v1525
      %1540 = vmatpush1.msra.mxu0 %v1524
      %1541 = vmatprep.subr.mxu0 %v1529
      %1542 = vmatpush1.msra.mxu0 %v1528
      %1543 = vmatprep.subr.mxu0 0.0
      %1544 = vmatpush1.msra.mxu0 0.0
      %1545 = vmatprep.subr.mxu0 0.0
      %1546 = vmatpush1.msra.mxu0 0.0
      %1547 = vmatprep.subr.mxu0 0.0
      %1548 = vmatpush1.msra.mxu0 0.0
      %1549 = vmatprep.subr.mxu0 0.0
      %1550 = vmatpush1.msra.mxu0 0.0
      %1551 = vmatprep.subr.mxu0 0.0
      %1552 = vmatpush1.msra.mxu0 0.0
      %1553 = vmatprep.subr.mxu0 0.0
      %1554 = vmatpush1.msra.mxu0 0.0
      %1555 = vmatprep.subr.mxu0 0.0
      %1556 = vmatpush1.msra.mxu0 0.0
      %1557 = vmatprep.subr.mxu0 0.0
      %1558 = vmatpush1.msra.mxu0 0.0
      %1559 = vmatprep.subr.mxu0 0.0
      %1560 = vmatpush1.msra.mxu0 0.0
      %1561 = vmatprep.subr.mxu0 0.0
      %1562 = vmatpush1.msra.mxu0 0.0
      %1563 = vmatprep.subr.mxu0 0.0
      %1564 = vmatpush1.msra.mxu0 0.0
      %1565 = vmatprep.subr.mxu0 0.0
      %1566 = vmatpush1.msra.mxu0 0.0
      %1567 = vmatprep.subr.mxu0 0.0
      %1568 = vmatpush1.msra.mxu0 0.0
      %1569 = vmatprep.subr.mxu0 0.0
      %1570 = vmatpush1.msra.mxu0 0.0
      %1571 = vmatprep.subr.mxu0 0.0
      %1572 = vmatpush1.msra.mxu0 0.0
      %1573 = vmatprep.subr.mxu0 0.0
      %1574 = vmatpush1.msra.mxu0 0.0
      %1575 = vmatprep.subr.mxu0 0.0
      %1576 = vmatpush1.msra.mxu0 0.0
      %1577 = vmatprep.subr.mxu0 0.0
      %1578 = vmatpush1.msra.mxu0 0.0
      %1579 = vmatprep.subr.mxu0 0.0
      %1580 = vmatpush1.msra.mxu0 0.0
      %1581 = vmatprep.subr.mxu0 0.0
      %1582 = vmatpush1.msra.mxu0 0.0
      %1583 = vmatprep.subr.mxu0 0.0
      %1584 = vmatpush1.msra.mxu0 0.0
      %1585 = vmatprep.subr.mxu0 0.0
      %1586 = vmatpush1.msra.mxu0 0.0
      %1587 = vmatprep.subr.mxu0 0.0
      %1588 = vmatpush1.msra.mxu0 0.0
      %1589 = vmatprep.subr.mxu0 0.0
      %1590 = vmatpush1.msra.mxu0 0.0
      %1591 = vmatprep.subr.mxu0 0.0
      %1592 = vmatpush1.msra.mxu0 0.0
      %1593 = vmatprep.subr.mxu0 0.0
      %1594 = vmatpush1.msra.mxu0 0.0
      %1595 = vmatprep.subr.mxu0 0.0
      %1596 = vmatpush1.msra.mxu0 0.0
      %1597 = vmatprep.subr.mxu0 0.0
      %1598 = vmatpush1.msra.mxu0 0.0
      %1599 = vmatprep.mubr.f32.mxu0 0.0
      %1600 = vmatmul.mubr.f32.gmra.mrb[0].mxu0 %v1533
      %v1601 = vpop.f32.mrb[0].mxu0
      %v1602 = vadd.f32 0.0, %v1601
      %v1603 = vpop.f32.mrb[0].mxu0
      %v1604 = vadd.f32 0.0, %v1603
      %1605 = vdwg.mxu0
      %1606 = vmatprep.subr.mxu0 %v1519
      %1607 = vmatpush1.msra.mxu0 %v1518
      %1608 = vmatprep.subr.mxu0 %v1523
      %1609 = vmatpush1.msra.mxu0 %v1522
      %1610 = vmatprep.subr.mxu0 %v1527
      %1611 = vmatpush1.msra.mxu0 %v1526
      %1612 = vmatprep.subr.mxu0 %v1531
      %1613 = vmatpush1.msra.mxu0 %v1530
      %1614 = vmatprep.subr.mxu0 0.0
      %1615 = vmatpush1.msra.mxu0 0.0
      %1616 = vmatprep.subr.mxu0 0.0
      %1617 = vmatpush1.msra.mxu0 0.0
      %1618 = vmatprep.subr.mxu0 0.0
      %1619 = vmatpush1.msra.mxu0 0.0
      %1620 = vmatprep.subr.mxu0 0.0
      %1621 = vmatpush1.msra.mxu0 0.0
      %1622 = vmatprep.subr.mxu0 0.0
      %1623 = vmatpush1.msra.mxu0 0.0
      %1624 = vmatprep.subr.mxu0 0.0
      %1625 = vmatpush1.msra.mxu0 0.0
      %1626 = vmatprep.subr.mxu0 0.0
      %1627 = vmatpush1.msra.mxu0 0.0
      %1628 = vmatprep.subr.mxu0 0.0
      %1629 = vmatpush1.msra.mxu0 0.0
      %1630 = vmatprep.subr.mxu0 0.0
      %1631 = vmatpush1.msra.mxu0 0.0
      %1632 = vmatprep.subr.mxu0 0.0
      %1633 = vmatpush1.msra.mxu0 0.0
      %1634 = vmatprep.subr.mxu0 0.0
      %1635 = vmatpush1.msra.mxu0 0.0
      %1636 = vmatprep.subr.mxu0 0.0
      %1637 = vmatpush1.msra.mxu0 0.0
      %1638 = vmatprep.subr.mxu0 0.0
      %1639 = vmatpush1.msra.mxu0 0.0
      %1640 = vmatprep.subr.mxu0 0.0
      %1641 = vmatpush1.msra.mxu0 0.0
      %1642 = vmatprep.subr.mxu0 0.0
      %1643 = vmatpush1.msra.mxu0 0.0
      %1644 = vmatprep.subr.mxu0 0.0
      %1645 = vmatpush1.msra.mxu0 0.0
      %1646 = vmatprep.subr.mxu0 0.0
      %1647 = vmatpush1.msra.mxu0 0.0
      %1648 = vmatprep.subr.mxu0 0.0
      %1649 = vmatpush1.msra.mxu0 0.0
      %1650 = vmatprep.subr.mxu0 0.0
      %1651 = vmatpush1.msra.mxu0 0.0
      %1652 = vmatprep.subr.mxu0 0.0
      %1653 = vmatpush1.msra.mxu0 0.0
      %1654 = vmatprep.subr.mxu0 0.0
      %1655 = vmatpush1.msra.mxu0 0.0
      %1656 = vmatprep.subr.mxu0 0.0
      %1657 = vmatpush1.msra.mxu0 0.0
      %1658 = vmatprep.subr.mxu0 0.0
      %1659 = vmatpush1.msra.mxu0 0.0
      %1660 = vmatprep.subr.mxu0 0.0
      %1661 = vmatpush1.msra.mxu0 0.0
      %1662 = vmatprep.subr.mxu0 0.0
      %1663 = vmatpush1.msra.mxu0 0.0
      %1664 = vmatprep.subr.mxu0 0.0
      %1665 = vmatpush1.msra.mxu0 0.0
      %1666 = vmatprep.subr.mxu0 0.0
      %1667 = vmatpush1.msra.mxu0 0.0
      %1668 = vmatprep.subr.mxu0 0.0
      %1669 = vmatpush1.msra.mxu0 0.0
      %1670 = vmatprep.mubr.f32.mxu0 0.0
      %1671 = vmatmul.mubr.f32.gmra.mrb[0].mxu0 %v1533
      %v1672 = vpop.f32.mrb[0].mxu0
      %v1673 = vadd.f32 0.0, %v1672
      %v1674 = vpop.f32.mrb[0].mxu0
      %v1675 = vadd.f32 0.0, %v1674
      %1676 = vdwg.mxu0
      %1677 = vst [vmem:[%s337] sm:$0xff] %v1602
      %1678 = vst [vmem:[%s337 + $0x8] sm:$0xff] %v1604
      %1679 = vst [vmem:[%s337 + $0x10] sm:$0xff] %v1673
      %1680 = vst [vmem:[%s337 + $0x18] sm:$0xff] %v1675
      %p1681 = scmp.lt.s32.totalorder %s20, 1
      %s1682 = scalar_select %p1681, %s20, 1
      %s1683 = smul.addr %s1682, 4
      %s1684 = smul.addr %s1683, 8
      %s1685 = scalar_lea.vmem %s9, %s1684
      // Predicated region
      $region57: #{early_rnn_forward.2} parent=55 // pred_check
        %p1686 = pneg %p232
      $region58: #{early_rnn_forward.2} parent=55 // pred_check_branch
        %1688 = sbr.rel (%p1686) target = $region60
      $region59: #{early_rnn_forward.2} parent=55 // pred_region
        _
      $region60: #{early_rnn_forward.2} parent=55 // pred_fallthru
        _
    $region56: #{early_rnn_forward.2} parent=5 // pred_fallthru
      _
    %p1689 = scmp.le.s32.totalorder 2, %s15
    // Predicated region
    $region61: #{early_rnn_forward.2} parent=5 // pred_check
      %p1690 = pneg %p1689
    $region62: #{early_rnn_forward.2} parent=5 // pred_check_branch
      %1692 = sbr.rel (%p1690) target = $region64
    $region63: #{early_rnn_forward.2} parent=5 // pred_region
      %s1693 = ssub.s32 %s15, 2
      // Predicated region
      $region65: #{early_rnn_forward.2} parent=63 // pred_check
        %p1694 = pneg %p238
      $region66: #{early_rnn_forward.2} parent=63 // pred_check_branch
        %1696 = sbr.rel (%p1694) target = $region68
      $region67: #{early_rnn_forward.2} parent=63 // pred_region
        %p1697 = scmp.lt.s32.totalorder %s21, 1
        %s1698 = scalar_select %p1697, %s21, 1
        %s1699 = smul.addr %s1698, 4
        %s1700 = smul.addr %s1699, 8
        %s1701 = scalar_lea.vmem %s9, %s1700
      $region68: #{early_rnn_forward.2} parent=63 // pred_fallthru
        _
    $region64: #{early_rnn_forward.2} parent=5 // pred_fallthru
      _
  $region6: #{early_rnn_forward.2} parent=0 // loop_footer
    %s19 = sadd.s32 1, %s15
  $region7: #{early_rnn_forward.2} parent=0 // loop_footer_branch
    %14 = sbr.rel target = $region3
  $region8: #{early_rnn_forward.2} parent=0 // loop_exit
    _

// kernel: squeeze.1
$region0: #{squeeze.1}
  %s0 = inlined_call_operand.vmem [shape: f32[16], index: 0, kind: input, shape index: {}]
  %s1 = inlined_call_operand.vmem [shape: f32[8,2], index: 1, kind: output, shape index: {}]
  $region1: #{squeeze.1} parent=0
    #allocation0 [shape = 'u8[4096]{0}', space=vmem, size = 0x1000, scoped, tag = 'scoped mem for input reshape']
    %s3 = sshllo.u32 0, 1
    %v4 = vld [vmem:[%s0] sm:%s3]
    %5 = vst [vmem:[#allocation0] sm:%s3] %v4
    %v6 = vld [vmem:[#allocation0] sm:$0x1]
    %vm7 = vcmask 15360
    %8 = vst.msk [vmem:[%s1] sm:$0x1] %vm7, %v6
    %v9 = vld [vmem:[#allocation0] sm:$0x1]
    %10 = vrot.lane.b32.xlu0 %v9, 126
    %v11 = vpop.permute.xlu0 %10
    %vm12 = vcmask 15360
    %s13 = scalar_lea.vmem %s1, 1
    %14 = vst.msk [vmem:[%s13] sm:$0x1] %vm12, %v11
    %v15 = vld [vmem:[#allocation0] sm:$0x1]
    %16 = vrot.lane.b32.xlu0 %v15, 124
    %v17 = vpop.permute.xlu0 %16
    %vm18 = vcmask 15360
    %s19 = scalar_lea.vmem %s1, 2
    %20 = vst.msk [vmem:[%s19] sm:$0x1] %vm18, %v17
    %v21 = vld [vmem:[#allocation0] sm:$0x1]
    %22 = vrot.lane.b32.xlu0 %v21, 122
    %v23 = vpop.permute.xlu0 %22
    %vm24 = vcmask 15360
    %s25 = scalar_lea.vmem %s1, 3
    %26 = vst.msk [vmem:[%s25] sm:$0x1] %vm24, %v23
    %v27 = vld [vmem:[#allocation0] sm:$0x1]
    %28 = vrot.lane.b32.xlu0 %v27, 120
    %v29 = vpop.permute.xlu0 %28
    %vm30 = vcmask 15360
    %s31 = scalar_lea.vmem %s1, 4
    %32 = vst.msk [vmem:[%s31] sm:$0x1] %vm30, %v29
    %v33 = vld [vmem:[#allocation0] sm:$0x1]
    %34 = vrot.lane.b32.xlu0 %v33, 118
    %v35 = vpop.permute.xlu0 %34
    %vm36 = vcmask 15360
    %s37 = scalar_lea.vmem %s1, 5
    %38 = vst.msk [vmem:[%s37] sm:$0x1] %vm36, %v35
    %v39 = vld [vmem:[#allocation0] sm:$0x1]
    %40 = vrot.lane.b32.xlu0 %v39, 116
    %v41 = vpop.permute.xlu0 %40
    %vm42 = vcmask 15360
    %s43 = scalar_lea.vmem %s1, 6
    %44 = vst.msk [vmem:[%s43] sm:$0x1] %vm42, %v41
    %v45 = vld [vmem:[#allocation0] sm:$0x1]
    %46 = vrot.lane.b32.xlu0 %v45, 114
    %v47 = vpop.permute.xlu0 %46
    %vm48 = vcmask 15360
    %s49 = scalar_lea.vmem %s1, 7
    %50 = vst.msk [vmem:[%s49] sm:$0x1] %vm48, %v47

// kernel: early_rnn_forward.3
$region0: #{early_rnn_forward.3}
  #allocation0 [shape = 'u32[]', space=smem, size = 0x4, offset = 0x4, fixed_abs, tag = 'smem constant byte address 0x4 - core index']
  #allocation1 [shape = 'u32[144,128]{1,0:T(1,128)}', space=vmem, size = 0x12000, scoped, tag = 'internal scratch']
  #allocation2 [shape = 'f32[2,128]{1,0:T(2,128)}', space=vmem, size = 0x400, scoped, tag = 'scratch operand']
  #allocation3 [shape = 'f32[2,128]{1,0:T(2,128)}', space=vmem, size = 0x400, scoped, tag = 'scratch operand']
  #allocation4 [shape = 'f32[8,2,32]{2,1,0:T(2,128)}', space=vmem, size = 0x2000, scoped, tag = 'scratch operand']
  %s0 = inlined_call_operand.vmem [shape: f32[8,2,512], index: 0, kind: input, shape index: {}]
  %s1 = inlined_call_operand.vmem [shape: f32[128,512], index: 1, kind: input, shape index: {}]
  %s2 = inlined_call_operand.vmem [shape: f32[32,7], index: 2, kind: input, shape index: {}]
  %s3 = inlined_call_operand.vmem [shape: f32[1,7], index: 3, kind: input, shape index: {}]
  %s4 = inlined_call_operand.vmem [shape: f32[16,7], index: 4, kind: output, shape index: {}]
  %s5 = sld [smem:[#allocation0]]
  $region26: #{early_rnn_forward.3} parent=0
    _
  %s7 = ssub.s32 1, %s5
  %s8 = scalar_select 0, %s7, %s5
  // Predicated region
  $region2: #{early_rnn_forward.3} parent=0 // pred_check
    _
  $region3: #{early_rnn_forward.3} parent=0 // pred_check_branch
    %10 = sbr.rel (0) target = $region5
  $region4: #{early_rnn_forward.3} parent=0 // pred_region
    _
  $region5: #{early_rnn_forward.3} parent=0 // pred_fallthru
    _
  // Predicated region
  $region6: #{early_rnn_forward.3} parent=0 // pred_check
    _
  $region7: #{early_rnn_forward.3} parent=0 // pred_check_branch
    %12 = sbr.rel (0) target = $region9
  $region8: #{early_rnn_forward.3} parent=0 // pred_region
    _
  $region9: #{early_rnn_forward.3} parent=0 // pred_fallthru
    _
  // Predicated region
  $region10: #{early_rnn_forward.3} parent=0 // pred_check
    _
  $region11: #{early_rnn_forward.3} parent=0 // pred_check_branch
    %14 = sbr.rel (0) target = $region13
  $region12: #{early_rnn_forward.3} parent=0 // pred_region
    _
  $region13: #{early_rnn_forward.3} parent=0 // pred_fallthru
    _
  // Predicated region
  $region14: #{early_rnn_forward.3} parent=0 // pred_check
    _
  $region15: #{early_rnn_forward.3} parent=0 // pred_check_branch
    %16 = sbr.rel (0) target = $region17
  $region16: #{early_rnn_forward.3} parent=0 // pred_region
    _
  $region17: #{early_rnn_forward.3} parent=0 // pred_fallthru
    _
  %17 = vst [vmem:[#allocation2] sm:$0x3] 0.0
  %18 = vst [vmem:[#allocation3] sm:$0x3] 0.0
  %v19 = vld [vmem:[%s0] sm:$0xff]
  %v20 = vld [vmem:[#allocation2] sm:$0x3]
  %v21 = vld [vmem:[%s1] sm:$0xff]
  %v22 = vld [vmem:[%s1 + $0x8] sm:$0xff]
  %v23 = vld [vmem:[%s1 + $0x10] sm:$0xff]
  %v24 = vld [vmem:[%s1 + $0x18] sm:$0xff]
  %v25 = vld [vmem:[%s1 + $0x20] sm:$0xff]
  %v26 = vld [vmem:[%s1 + $0x28] sm:$0xff]
  %v27 = vld [vmem:[%s1 + $0x30] sm:$0xff]
  %v28 = vld [vmem:[%s1 + $0x38] sm:$0xff]
  %v29 = vld [vmem:[%s1 + $0x40] sm:$0xff]
  %v30 = vld [vmem:[%s1 + $0x48] sm:$0xff]
  %v31 = vld [vmem:[%s1 + $0x50] sm:$0xff]
  %v32 = vld [vmem:[%s1 + $0x58] sm:$0xff]
  %v33 = vld [vmem:[%s1 + $0x60] sm:$0xff]
  %v34 = vld [vmem:[%s1 + $0x68] sm:$0xff]
  %v35 = vld [vmem:[%s1 + $0x70] sm:$0xff]
  %v36 = vld [vmem:[%s1 + $0x78] sm:$0xff]
  %v37 = vld [vmem:[%s1 + $0x80] sm:$0xff]
  %v38 = vld [vmem:[%s1 + $0x88] sm:$0xff]
  %v39 = vld [vmem:[%s1 + $0x90] sm:$0xff]
  %v40 = vld [vmem:[%s1 + $0x98] sm:$0xff]
  %v41 = vld [vmem:[%s1 + $0xa0] sm:$0xff]
  %v42 = vld [vmem:[%s1 + $0xa8] sm:$0xff]
  %v43 = vld [vmem:[%s1 + $0xb0] sm:$0xff]
  %v44 = vld [vmem:[%s1 + $0xb8] sm:$0xff]
  %v45 = vld [vmem:[%s1 + $0xc0] sm:$0xff]
  %v46 = vld [vmem:[%s1 + $0xc8] sm:$0xff]
  %v47 = vld [vmem:[%s1 + $0xd0] sm:$0xff]
  %v48 = vld [vmem:[%s1 + $0xd8] sm:$0xff]
  %v49 = vld [vmem:[%s1 + $0xe0] sm:$0xff]
  %v50 = vld [vmem:[%s1 + $0xe8] sm:$0xff]
  %v51 = vld [vmem:[%s1 + $0xf0] sm:$0xff]
  %v52 = vld [vmem:[%s1 + $0xf8] sm:$0xff]
  %v53 = vld [vmem:[%s1 + $0x100] sm:$0xff]
  %v54 = vld [vmem:[%s1 + $0x108] sm:$0xff]
  %v55 = vld [vmem:[%s1 + $0x110] sm:$0xff]
  %v56 = vld [vmem:[%s1 + $0x118] sm:$0xff]
  %v57 = vld [vmem:[%s1 + $0x120] sm:$0xff]
  %v58 = vld [vmem:[%s1 + $0x128] sm:$0xff]
  %v59 = vld [vmem:[%s1 + $0x130] sm:$0xff]
  %v60 = vld [vmem:[%s1 + $0x138] sm:$0xff]
  %v61 = vld [vmem:[%s1 + $0x140] sm:$0xff]
  %v62 = vld [vmem:[%s1 + $0x148] sm:$0xff]
  %v63 = vld [vmem:[%s1 + $0x150] sm:$0xff]
  %v64 = vld [vmem:[%s1 + $0x158] sm:$0xff]
  %v65 = vld [vmem:[%s1 + $0x160] sm:$0xff]
  %v66 = vld [vmem:[%s1 + $0x168] sm:$0xff]
  %v67 = vld [vmem:[%s1 + $0x170] sm:$0xff]
  %v68 = vld [vmem:[%s1 + $0x178] sm:$0xff]
  %v69 = vld [vmem:[%s1 + $0x180] sm:$0xff]
  %v70 = vld [vmem:[%s1 + $0x188] sm:$0xff]
  %v71 = vld [vmem:[%s1 + $0x190] sm:$0xff]
  %v72 = vld [vmem:[%s1 + $0x198] sm:$0xff]
  %v73 = vld [vmem:[%s1 + $0x1a0] sm:$0xff]
  %v74 = vld [vmem:[%s1 + $0x1a8] sm:$0xff]
  %v75 = vld [vmem:[%s1 + $0x1b0] sm:$0xff]
  %v76 = vld [vmem:[%s1 + $0x1b8] sm:$0xff]
  %v77 = vld [vmem:[%s1 + $0x1c0] sm:$0xff]
  %v78 = vld [vmem:[%s1 + $0x1c8] sm:$0xff]
  %v79 = vld [vmem:[%s1 + $0x1d0] sm:$0xff]
  %v80 = vld [vmem:[%s1 + $0x1d8] sm:$0xff]
  %v81 = vld [vmem:[%s1 + $0x1e0] sm:$0xff]
  %v82 = vld [vmem:[%s1 + $0x1e8] sm:$0xff]
  %v83 = vld [vmem:[%s1 + $0x1f0] sm:$0xff]
  %v84 = vld [vmem:[%s1 + $0x1f8] sm:$0xff]
  %85 = vmatprep.subr.mxu0 %v22
  %86 = vmatpush1.msra.mxu0 %v21
  %87 = vmatprep.subr.mxu0 %v26
  %88 = vmatpush1.msra.mxu0 %v25
  %89 = vmatprep.subr.mxu0 %v30
  %90 = vmatpush1.msra.mxu0 %v29
  %91 = vmatprep.subr.mxu0 %v34
  %92 = vmatpush1.msra.mxu0 %v33
  %93 = vmatprep.subr.mxu0 %v38
  %94 = vmatpush1.msra.mxu0 %v37
  %95 = vmatprep.subr.mxu0 %v42
  %96 = vmatpush1.msra.mxu0 %v41
  %97 = vmatprep.subr.mxu0 %v46
  %98 = vmatpush1.msra.mxu0 %v45
  %99 = vmatprep.subr.mxu0 %v50
  %100 = vmatpush1.msra.mxu0 %v49
  %101 = vmatprep.subr.mxu0 %v54
  %102 = vmatpush1.msra.mxu0 %v53
  %103 = vmatprep.subr.mxu0 %v58
  %104 = vmatpush1.msra.mxu0 %v57
  %105 = vmatprep.subr.mxu0 %v62
  %106 = vmatpush1.msra.mxu0 %v61
  %107 = vmatprep.subr.mxu0 %v66
  %108 = vmatpush1.msra.mxu0 %v65
  %109 = vmatprep.subr.mxu0 %v70
  %110 = vmatpush1.msra.mxu0 %v69
  %111 = vmatprep.subr.mxu0 %v74
  %112 = vmatpush1.msra.mxu0 %v73
  %113 = vmatprep.subr.mxu0 %v78
  %114 = vmatpush1.msra.mxu0 %v77
  %115 = vmatprep.subr.mxu0 %v82
  %116 = vmatpush1.msra.mxu0 %v81
  %117 = vmatprep.subr.mxu0 0.0
  %118 = vmatpush1.msra.mxu0 0.0
  %119 = vmatprep.subr.mxu0 0.0
  %120 = vmatpush1.msra.mxu0 0.0
  %121 = vmatprep.subr.mxu0 0.0
  %122 = vmatpush1.msra.mxu0 0.0
  %123 = vmatprep.subr.mxu0 0.0
  %124 = vmatpush1.msra.mxu0 0.0
  %125 = vmatprep.subr.mxu0 0.0
  %126 = vmatpush1.msra.mxu0 0.0
  %127 = vmatprep.subr.mxu0 0.0
  %128 = vmatpush1.msra.mxu0 0.0
  %129 = vmatprep.subr.mxu0 0.0
  %130 = vmatpush1.msra.mxu0 0.0
  %131 = vmatprep.subr.mxu0 0.0
  %132 = vmatpush1.msra.mxu0 0.0
  %133 = vmatprep.subr.mxu0 0.0
  %134 = vmatpush1.msra.mxu0 0.0
  %135 = vmatprep.subr.mxu0 0.0
  %136 = vmatpush1.msra.mxu0 0.0
  %137 = vmatprep.subr.mxu0 0.0
  %138 = vmatpush1.msra.mxu0 0.0
  %139 = vmatprep.subr.mxu0 0.0
  %140 = vmatpush1.msra.mxu0 0.0
  %141 = vmatprep.subr.mxu0 0.0
  %142 = vmatpush1.msra.mxu0 0.0
  %143 = vmatprep.subr.mxu0 0.0
  %144 = vmatpush1.msra.mxu0 0.0
  %145 = vmatprep.subr.mxu0 0.0
  %146 = vmatpush1.msra.mxu0 0.0
  %147 = vmatprep.subr.mxu0 0.0
  %148 = vmatpush1.msra.mxu0 0.0
  %149 = vmatprep.mubr.f32.mxu0 0.0
  %150 = vmatmul.mubr.f32.gmra.mrb[0].mxu0 %v20
  %v151 = vpop.f32.mrb[0].mxu0
  %v152 = vadd.f32 0.0, %v151
  %v153 = vpop.f32.mrb[0].mxu0
  %v154 = vadd.f32 0.0, %v153
  %155 = vdwg.mxu0
  %156 = vmatprep.subr.mxu0 %v24
  %157 = vmatpush1.msra.mxu0 %v23
  %158 = vmatprep.subr.mxu0 %v28
  %159 = vmatpush1.msra.mxu0 %v27
  %160 = vmatprep.subr.mxu0 %v32
  %161 = vmatpush1.msra.mxu0 %v31
  %162 = vmatprep.subr.mxu0 %v36
  %163 = vmatpush1.msra.mxu0 %v35
  %164 = vmatprep.subr.mxu0 %v40
  %165 = vmatpush1.msra.mxu0 %v39
  %166 = vmatprep.subr.mxu0 %v44
  %167 = vmatpush1.msra.mxu0 %v43
  %168 = vmatprep.subr.mxu0 %v48
  %169 = vmatpush1.msra.mxu0 %v47
  %170 = vmatprep.subr.mxu0 %v52
  %171 = vmatpush1.msra.mxu0 %v51
  %172 = vmatprep.subr.mxu0 %v56
  %173 = vmatpush1.msra.mxu0 %v55
  %174 = vmatprep.subr.mxu0 %v60
  %175 = vmatpush1.msra.mxu0 %v59
  %176 = vmatprep.subr.mxu0 %v64
  %177 = vmatpush1.msra.mxu0 %v63
  %178 = vmatprep.subr.mxu0 %v68
  %179 = vmatpush1.msra.mxu0 %v67
  %180 = vmatprep.subr.mxu0 %v72
  %181 = vmatpush1.msra.mxu0 %v71
  %182 = vmatprep.subr.mxu0 %v76
  %183 = vmatpush1.msra.mxu0 %v75
  %184 = vmatprep.subr.mxu0 %v80
  %185 = vmatpush1.msra.mxu0 %v79
  %186 = vmatprep.subr.mxu0 %v84
  %187 = vmatpush1.msra.mxu0 %v83
  %188 = vmatprep.subr.mxu0 0.0
  %189 = vmatpush1.msra.mxu0 0.0
  %190 = vmatprep.subr.mxu0 0.0
  %191 = vmatpush1.msra.mxu0 0.0
  %192 = vmatprep.subr.mxu0 0.0
  %193 = vmatpush1.msra.mxu0 0.0
  %194 = vmatprep.subr.mxu0 0.0
  %195 = vmatpush1.msra.mxu0 0.0
  %196 = vmatprep.subr.mxu0 0.0
  %197 = vmatpush1.msra.mxu0 0.0
  %198 = vmatprep.subr.mxu0 0.0
  %199 = vmatpush1.msra.mxu0 0.0
  %200 = vmatprep.subr.mxu0 0.0
  %201 = vmatpush1.msra.mxu0 0.0
  %202 = vmatprep.subr.mxu0 0.0
  %203 = vmatpush1.msra.mxu0 0.0
  %204 = vmatprep.subr.mxu0 0.0
  %205 = vmatpush1.msra.mxu0 0.0
  %206 = vmatprep.subr.mxu0 0.0
  %207 = vmatpush1.msra.mxu0 0.0
  %208 = vmatprep.subr.mxu0 0.0
  %209 = vmatpush1.msra.mxu0 0.0
  %210 = vmatprep.subr.mxu0 0.0
  %211 = vmatpush1.msra.mxu0 0.0
  %212 = vmatprep.subr.mxu0 0.0
  %213 = vmatpush1.msra.mxu0 0.0
  %214 = vmatprep.subr.mxu0 0.0
  %215 = vmatpush1.msra.mxu0 0.0
  %216 = vmatprep.subr.mxu0 0.0
  %217 = vmatpush1.msra.mxu0 0.0
  %218 = vmatprep.subr.mxu0 0.0
  %219 = vmatpush1.msra.mxu0 0.0
  %220 = vmatprep.mubr.f32.mxu0 0.0
  %221 = vmatmul.mubr.f32.gmra.mrb[0].mxu0 %v20
  %v222 = vpop.f32.mrb[0].mxu0
  %v223 = vadd.f32 0.0, %v222
  %v224 = vpop.f32.mrb[0].mxu0
  %v225 = vadd.f32 0.0, %v224
  %226 = vdwg.mxu0
  %v231 = vcombine.low %v152, %v154
  %v232 = vcombine.low %v223, %v225
  %v234 = vunpack.c.l.s4 1983009808
  %v235 = vunpack.c.0.s8 %v234
  %v236 = vlaneseq
  %v237 = vshrl.u32 %v236, 7
  %v238 = vsub.s32 %v235, %v237
  %v239 = vrot.slane %v231, %v238
  %v241 = vunpack.c.l.s4 1983009808
  %v242 = vunpack.c.0.s8 %v241
  %v243 = vlaneseq
  %v244 = vshrl.u32 %v243, 7
  %v245 = vsub.s32 %v242, %v244
  %v246 = vrot.slane %v232, %v245
  %v247 = vcombine.low %v239, %v246
  %v249 = vadd.f32 %v19, %v247
  %v250 = vxor.u32 %v249, 2147483648
  %v251 = vmul.f32 %v250, 1.442695
  %v252 = vpow.pop %v251
  %v253 = vadd.f32 %v252, 1.0
  %v254 = vrcp.pop %v253
  %v255 = vmul.f32 1.0, %v254
  %v257 = vrot.slane %v249, 2
  %v259 = vxor.u32 %v257, 2147483648
  %v260 = vmul.f32 %v259, 1.442695
  %v261 = vpow.pop %v260
  %v262 = vadd.f32 %v261, 1.0
  %v263 = vrcp.pop %v262
  %v264 = vmul.f32 1.0, %v263
  %v265 = vrot.slane %v249, 4
  %v267 = vtanh.pop %v265
  %v268 = vrot.slane %v249, 6
  %v270 = vxor.u32 %v268, 2147483648
  %v271 = vmul.f32 %v270, 1.442695
  %v272 = vpow.pop %v271
  %v273 = vadd.f32 %v272, 1.0
  %v274 = vrcp.pop %v273
  %v275 = vmul.f32 1.0, %v274
  %v276 = vld [vmem:[#allocation3] sm:$0x3]
  %v277 = vmul.f32 %v264, %v276
  %v278 = vmul.f32 %v255, %v267
  %v279 = vadd.f32 %v277, %v278
  %v280 = vtanh.pop %v279
  %v281 = vmul.f32 %v275, %v280
  %282 = vst [vmem:[#allocation3] sm:$0x3] %v279
  %283 = vst [vmem:[#allocation2] sm:$0x3] %v281
  %v286 = vunpack.c.l.s4 1983009808
  %v287 = vunpack.c.0.s8 %v286
  %v288 = vlaneseq
  %v289 = vshrl.u32 %v288, 7
  %v290 = vsub.s32 %v287, %v289
  %v291 = vrot.slane %v281, %v290
  %292 = vrot.lane.b32.xlu0 %v291, 32
  %v293 = vpop.permute.xlu0 %292
  %vm295 = vcmask 254976
  %296 = vst.msk [vmem:[#allocation4] sm:$0x3] %vm295, %v293
  %s297 = scalar_lea.vmem %s0, 8
  %v298 = vld [vmem:[%s297] sm:$0xff]
  %v299 = vld [vmem:[#allocation2] sm:$0x3]
  %v300 = vld [vmem:[%s1] sm:$0xff]
  %v301 = vld [vmem:[%s1 + $0x8] sm:$0xff]
  %v302 = vld [vmem:[%s1 + $0x10] sm:$0xff]
  %v303 = vld [vmem:[%s1 + $0x18] sm:$0xff]
  %v304 = vld [vmem:[%s1 + $0x20] sm:$0xff]
  %v305 = vld [vmem:[%s1 + $0x28] sm:$0xff]
  %v306 = vld [vmem:[%s1 + $0x30] sm:$0xff]
  %v307 = vld [vmem:[%s1 + $0x38] sm:$0xff]
  %v308 = vld [vmem:[%s1 + $0x40] sm:$0xff]
  %v309 = vld [vmem:[%s1 + $0x48] sm:$0xff]
  %v310 = vld [vmem:[%s1 + $0x50] sm:$0xff]
  %v311 = vld [vmem:[%s1 + $0x58] sm:$0xff]
  %v312 = vld [vmem:[%s1 + $0x60] sm:$0xff]
  %v313 = vld [vmem:[%s1 + $0x68] sm:$0xff]
  %v314 = vld [vmem:[%s1 + $0x70] sm:$0xff]
  %v315 = vld [vmem:[%s1 + $0x78] sm:$0xff]
  %v316 = vld [vmem:[%s1 + $0x80] sm:$0xff]
  %v317 = vld [vmem:[%s1 + $0x88] sm:$0xff]
  %v318 = vld [vmem:[%s1 + $0x90] sm:$0xff]
  %v319 = vld [vmem:[%s1 + $0x98] sm:$0xff]
  %v320 = vld [vmem:[%s1 + $0xa0] sm:$0xff]
  %v321 = vld [vmem:[%s1 + $0xa8] sm:$0xff]
  %v322 = vld [vmem:[%s1 + $0xb0] sm:$0xff]
  %v323 = vld [vmem:[%s1 + $0xb8] sm:$0xff]
  %v324 = vld [vmem:[%s1 + $0xc0] sm:$0xff]
  %v325 = vld [vmem:[%s1 + $0xc8] sm:$0xff]
  %v326 = vld [vmem:[%s1 + $0xd0] sm:$0xff]
  %v327 = vld [vmem:[%s1 + $0xd8] sm:$0xff]
  %v328 = vld [vmem:[%s1 + $0xe0] sm:$0xff]
  %v329 = vld [vmem:[%s1 + $0xe8] sm:$0xff]
  %v330 = vld [vmem:[%s1 + $0xf0] sm:$0xff]
  %v331 = vld [vmem:[%s1 + $0xf8] sm:$0xff]
  %v332 = vld [vmem:[%s1 + $0x100] sm:$0xff]
  %v333 = vld [vmem:[%s1 + $0x108] sm:$0xff]
  %v334 = vld [vmem:[%s1 + $0x110] sm:$0xff]
  %v335 = vld [vmem:[%s1 + $0x118] sm:$0xff]
  %v336 = vld [vmem:[%s1 + $0x120] sm:$0xff]
  %v337 = vld [vmem:[%s1 + $0x128] sm:$0xff]
  %v338 = vld [vmem:[%s1 + $0x130] sm:$0xff]
  %v339 = vld [vmem:[%s1 + $0x138] sm:$0xff]
  %v340 = vld [vmem:[%s1 + $0x140] sm:$0xff]
  %v341 = vld [vmem:[%s1 + $0x148] sm:$0xff]
  %v342 = vld [vmem:[%s1 + $0x150] sm:$0xff]
  %v343 = vld [vmem:[%s1 + $0x158] sm:$0xff]
  %v344 = vld [vmem:[%s1 + $0x160] sm:$0xff]
  %v345 = vld [vmem:[%s1 + $0x168] sm:$0xff]
  %v346 = vld [vmem:[%s1 + $0x170] sm:$0xff]
  %v347 = vld [vmem:[%s1 + $0x178] sm:$0xff]
  %v348 = vld [vmem:[%s1 + $0x180] sm:$0xff]
  %v349 = vld [vmem:[%s1 + $0x188] sm:$0xff]
  %v350 = vld [vmem:[%s1 + $0x190] sm:$0xff]
  %v351 = vld [vmem:[%s1 + $0x198] sm:$0xff]
  %v352 = vld [vmem:[%s1 + $0x1a0] sm:$0xff]
  %v353 = vld [vmem:[%s1 + $0x1a8] sm:$0xff]
  %v354 = vld [vmem:[%s1 + $0x1b0] sm:$0xff]
  %v355 = vld [vmem:[%s1 + $0x1b8] sm:$0xff]
  %v356 = vld [vmem:[%s1 + $0x1c0] sm:$0xff]
  %v357 = vld [vmem:[%s1 + $0x1c8] sm:$0xff]
  %v358 = vld [vmem:[%s1 + $0x1d0] sm:$0xff]
  %v359 = vld [vmem:[%s1 + $0x1d8] sm:$0xff]
  %v360 = vld [vmem:[%s1 + $0x1e0] sm:$0xff]
  %v361 = vld [vmem:[%s1 + $0x1e8] sm:$0xff]
  %v362 = vld [vmem:[%s1 + $0x1f0] sm:$0xff]
  %v363 = vld [vmem:[%s1 + $0x1f8] sm:$0xff]
  %364 = vmatprep.subr.mxu0 %v301
  %365 = vmatpush1.msra.mxu0 %v300
  %366 = vmatprep.subr.mxu0 %v305
  %367 = vmatpush1.msra.mxu0 %v304
  %368 = vmatprep.subr.mxu0 %v309
  %369 = vmatpush1.msra.mxu0 %v308
  %370 = vmatprep.subr.mxu0 %v313
  %371 = vmatpush1.msra.mxu0 %v312
  %372 = vmatprep.subr.mxu0 %v317
  %373 = vmatpush1.msra.mxu0 %v316
  %374 = vmatprep.subr.mxu0 %v321
  %375 = vmatpush1.msra.mxu0 %v320
  %376 = vmatprep.subr.mxu0 %v325
  %377 = vmatpush1.msra.mxu0 %v324
  %378 = vmatprep.subr.mxu0 %v329
  %379 = vmatpush1.msra.mxu0 %v328
  %380 = vmatprep.subr.mxu0 %v333
  %381 = vmatpush1.msra.mxu0 %v332
  %382 = vmatprep.subr.mxu0 %v337
  %383 = vmatpush1.msra.mxu0 %v336
  %384 = vmatprep.subr.mxu0 %v341
  %385 = vmatpush1.msra.mxu0 %v340
  %386 = vmatprep.subr.mxu0 %v345
  %387 = vmatpush1.msra.mxu0 %v344
  %388 = vmatprep.subr.mxu0 %v349
  %389 = vmatpush1.msra.mxu0 %v348
  %390 = vmatprep.subr.mxu0 %v353
  %391 = vmatpush1.msra.mxu0 %v352
  %392 = vmatprep.subr.mxu0 %v357
  %393 = vmatpush1.msra.mxu0 %v356
  %394 = vmatprep.subr.mxu0 %v361
  %395 = vmatpush1.msra.mxu0 %v360
  %396 = vmatprep.subr.mxu0 0.0
  %397 = vmatpush1.msra.mxu0 0.0
  %398 = vmatprep.subr.mxu0 0.0
  %399 = vmatpush1.msra.mxu0 0.0
  %400 = vmatprep.subr.mxu0 0.0
  %401 = vmatpush1.msra.mxu0 0.0
  %402 = vmatprep.subr.mxu0 0.0
  %403 = vmatpush1.msra.mxu0 0.0
  %404 = vmatprep.subr.mxu0 0.0
  %405 = vmatpush1.msra.mxu0 0.0
  %406 = vmatprep.subr.mxu0 0.0
  %407 = vmatpush1.msra.mxu0 0.0
  %408 = vmatprep.subr.mxu0 0.0
  %409 = vmatpush1.msra.mxu0 0.0
  %410 = vmatprep.subr.mxu0 0.0
  %411 = vmatpush1.msra.mxu0 0.0
  %412 = vmatprep.subr.mxu0 0.0
  %413 = vmatpush1.msra.mxu0 0.0
  %414 = vmatprep.subr.mxu0 0.0
  %415 = vmatpush1.msra.mxu0 0.0
  %416 = vmatprep.subr.mxu0 0.0
  %417 = vmatpush1.msra.mxu0 0.0
  %418 = vmatprep.subr.mxu0 0.0
  %419 = vmatpush1.msra.mxu0 0.0
  %420 = vmatprep.subr.mxu0 0.0
  %421 = vmatpush1.msra.mxu0 0.0
  %422 = vmatprep.subr.mxu0 0.0
  %423 = vmatpush1.msra.mxu0 0.0
  %424 = vmatprep.subr.mxu0 0.0
  %425 = vmatpush1.msra.mxu0 0.0
  %426 = vmatprep.subr.mxu0 0.0
  %427 = vmatpush1.msra.mxu0 0.0
  %428 = vmatprep.mubr.f32.mxu0 0.0
  %429 = vmatmul.mubr.f32.gmra.mrb[0].mxu0 %v299
  %v430 = vpop.f32.mrb[0].mxu0
  %v431 = vadd.f32 0.0, %v430
  %v432 = vpop.f32.mrb[0].mxu0
  %v433 = vadd.f32 0.0, %v432
  %434 = vdwg.mxu0
  %435 = vmatprep.subr.mxu0 %v303
  %436 = vmatpush1.msra.mxu0 %v302
  %437 = vmatprep.subr.mxu0 %v307
  %438 = vmatpush1.msra.mxu0 %v306
  %439 = vmatprep.subr.mxu0 %v311
  %440 = vmatpush1.msra.mxu0 %v310
  %441 = vmatprep.subr.mxu0 %v315
  %442 = vmatpush1.msra.mxu0 %v314
  %443 = vmatprep.subr.mxu0 %v319
  %444 = vmatpush1.msra.mxu0 %v318
  %445 = vmatprep.subr.mxu0 %v323
  %446 = vmatpush1.msra.mxu0 %v322
  %447 = vmatprep.subr.mxu0 %v327
  %448 = vmatpush1.msra.mxu0 %v326
  %449 = vmatprep.subr.mxu0 %v331
  %450 = vmatpush1.msra.mxu0 %v330
  %451 = vmatprep.subr.mxu0 %v335
  %452 = vmatpush1.msra.mxu0 %v334
  %453 = vmatprep.subr.mxu0 %v339
  %454 = vmatpush1.msra.mxu0 %v338
  %455 = vmatprep.subr.mxu0 %v343
  %456 = vmatpush1.msra.mxu0 %v342
  %457 = vmatprep.subr.mxu0 %v347
  %458 = vmatpush1.msra.mxu0 %v346
  %459 = vmatprep.subr.mxu0 %v351
  %460 = vmatpush1.msra.mxu0 %v350
  %461 = vmatprep.subr.mxu0 %v355
  %462 = vmatpush1.msra.mxu0 %v354
  %463 = vmatprep.subr.mxu0 %v359
  %464 = vmatpush1.msra.mxu0 %v358
  %465 = vmatprep.subr.mxu0 %v363
  %466 = vmatpush1.msra.mxu0 %v362
  %467 = vmatprep.subr.mxu0 0.0
  %468 = vmatpush1.msra.mxu0 0.0
  %469 = vmatprep.subr.mxu0 0.0
  %470 = vmatpush1.msra.mxu0 0.0
  %471 = vmatprep.subr.mxu0 0.0
  %472 = vmatpush1.msra.mxu0 0.0
  %473 = vmatprep.subr.mxu0 0.0
  %474 = vmatpush1.msra.mxu0 0.0
  %475 = vmatprep.subr.mxu0 0.0
  %476 = vmatpush1.msra.mxu0 0.0
  %477 = vmatprep.subr.mxu0 0.0
  %478 = vmatpush1.msra.mxu0 0.0
  %479 = vmatprep.subr.mxu0 0.0
  %480 = vmatpush1.msra.mxu0 0.0
  %481 = vmatprep.subr.mxu0 0.0
  %482 = vmatpush1.msra.mxu0 0.0
  %483 = vmatprep.subr.mxu0 0.0
  %484 = vmatpush1.msra.mxu0 0.0
  %485 = vmatprep.subr.mxu0 0.0
  %486 = vmatpush1.msra.mxu0 0.0
  %487 = vmatprep.subr.mxu0 0.0
  %488 = vmatpush1.msra.mxu0 0.0
  %489 = vmatprep.subr.mxu0 0.0
  %490 = vmatpush1.msra.mxu0 0.0
  %491 = vmatprep.subr.mxu0 0.0
  %492 = vmatpush1.msra.mxu0 0.0
  %493 = vmatprep.subr.mxu0 0.0
  %494 = vmatpush1.msra.mxu0 0.0
  %495 = vmatprep.subr.mxu0 0.0
  %496 = vmatpush1.msra.mxu0 0.0
  %497 = vmatprep.subr.mxu0 0.0
  %498 = vmatpush1.msra.mxu0 0.0
  %499 = vmatprep.mubr.f32.mxu0 0.0
  %500 = vmatmul.mubr.f32.gmra.mrb[0].mxu0 %v299
  %v501 = vpop.f32.mrb[0].mxu0
  %v502 = vadd.f32 0.0, %v501
  %v503 = vpop.f32.mrb[0].mxu0
  %v504 = vadd.f32 0.0, %v503
  %505 = vdwg.mxu0
  %v510 = vcombine.low %v431, %v433
  %v511 = vcombine.low %v502, %v504
  %v513 = vunpack.c.l.s4 1983009808
  %v514 = vunpack.c.0.s8 %v513
  %v515 = vlaneseq
  %v516 = vshrl.u32 %v515, 7
  %v517 = vsub.s32 %v514, %v516
  %v518 = vrot.slane %v510, %v517
  %v520 = vunpack.c.l.s4 1983009808
  %v521 = vunpack.c.0.s8 %v520
  %v522 = vlaneseq
  %v523 = vshrl.u32 %v522, 7
  %v524 = vsub.s32 %v521, %v523
  %v525 = vrot.slane %v511, %v524
  %v526 = vcombine.low %v518, %v525
  %v528 = vadd.f32 %v298, %v526
  %v529 = vxor.u32 %v528, 2147483648
  %v530 = vmul.f32 %v529, 1.442695
  %v531 = vpow.pop %v530
  %v532 = vadd.f32 %v531, 1.0
  %v533 = vrcp.pop %v532
  %v534 = vmul.f32 1.0, %v533
  %v536 = vrot.slane %v528, 2
  %v538 = vxor.u32 %v536, 2147483648
  %v539 = vmul.f32 %v538, 1.442695
  %v540 = vpow.pop %v539
  %v541 = vadd.f32 %v540, 1.0
  %v542 = vrcp.pop %v541
  %v543 = vmul.f32 1.0, %v542
  %v544 = vrot.slane %v528, 4
  %v546 = vtanh.pop %v544
  %v547 = vrot.slane %v528, 6
  %v549 = vxor.u32 %v547, 2147483648
  %v550 = vmul.f32 %v549, 1.442695
  %v551 = vpow.pop %v550
  %v552 = vadd.f32 %v551, 1.0
  %v553 = vrcp.pop %v552
  %v554 = vmul.f32 1.0, %v553
  %v555 = vld [vmem:[#allocation3] sm:$0x3]
  %v556 = vmul.f32 %v543, %v555
  %v557 = vmul.f32 %v534, %v546
  %v558 = vadd.f32 %v556, %v557
  %v559 = vtanh.pop %v558
  %v560 = vmul.f32 %v554, %v559
  %561 = vst [vmem:[#allocation3] sm:$0x3] %v558
  %562 = vst [vmem:[#allocation2] sm:$0x3] %v560
  %v565 = vunpack.c.l.s4 1983009808
  %v566 = vunpack.c.0.s8 %v565
  %v567 = vlaneseq
  %v568 = vshrl.u32 %v567, 7
  %v569 = vsub.s32 %v566, %v568
  %v570 = vrot.slane %v560, %v569
  %571 = vrot.lane.b32.xlu0 %v570, 32
  %v572 = vpop.permute.xlu0 %571
  %574 = vst.msk [vmem:[#allocation4] sm:$0x3] %vm295, %v572
  %s575 = scalar_lea.vmem %s0, 16
  %v576 = vld [vmem:[%s575] sm:$0xff]
  %v577 = vld [vmem:[#allocation2] sm:$0x3]
  %v578 = vld [vmem:[%s1] sm:$0xff]
  %v579 = vld [vmem:[%s1 + $0x8] sm:$0xff]
  %v580 = vld [vmem:[%s1 + $0x10] sm:$0xff]
  %v581 = vld [vmem:[%s1 + $0x18] sm:$0xff]
  %v582 = vld [vmem:[%s1 + $0x20] sm:$0xff]
  %v583 = vld [vmem:[%s1 + $0x28] sm:$0xff]
  %v584 = vld [vmem:[%s1 + $0x30] sm:$0xff]
  %v585 = vld [vmem:[%s1 + $0x38] sm:$0xff]
  %v586 = vld [vmem:[%s1 + $0x40] sm:$0xff]
  %v587 = vld [vmem:[%s1 + $0x48] sm:$0xff]
  %v588 = vld [vmem:[%s1 + $0x50] sm:$0xff]
  %v589 = vld [vmem:[%s1 + $0x58] sm:$0xff]
  %v590 = vld [vmem:[%s1 + $0x60] sm:$0xff]
  %v591 = vld [vmem:[%s1 + $0x68] sm:$0xff]
  %v592 = vld [vmem:[%s1 + $0x70] sm:$0xff]
  %v593 = vld [vmem:[%s1 + $0x78] sm:$0xff]
  %v594 = vld [vmem:[%s1 + $0x80] sm:$0xff]
  %v595 = vld [vmem:[%s1 + $0x88] sm:$0xff]
  %v596 = vld [vmem:[%s1 + $0x90] sm:$0xff]
  %v597 = vld [vmem:[%s1 + $0x98] sm:$0xff]
  %v598 = vld [vmem:[%s1 + $0xa0] sm:$0xff]
  %v599 = vld [vmem:[%s1 + $0xa8] sm:$0xff]
  %v600 = vld [vmem:[%s1 + $0xb0] sm:$0xff]
  %v601 = vld [vmem:[%s1 + $0xb8] sm:$0xff]
  %v602 = vld [vmem:[%s1 + $0xc0] sm:$0xff]
  %v603 = vld [vmem:[%s1 + $0xc8] sm:$0xff]
  %v604 = vld [vmem:[%s1 + $0xd0] sm:$0xff]
  %v605 = vld [vmem:[%s1 + $0xd8] sm:$0xff]
  %v606 = vld [vmem:[%s1 + $0xe0] sm:$0xff]
  %v607 = vld [vmem:[%s1 + $0xe8] sm:$0xff]
  %v608 = vld [vmem:[%s1 + $0xf0] sm:$0xff]
  %v609 = vld [vmem:[%s1 + $0xf8] sm:$0xff]
  %v610 = vld [vmem:[%s1 + $0x100] sm:$0xff]
  %v611 = vld [vmem:[%s1 + $0x108] sm:$0xff]
  %v612 = vld [vmem:[%s1 + $0x110] sm:$0xff]
  %v613 = vld [vmem:[%s1 + $0x118] sm:$0xff]
  %v614 = vld [vmem:[%s1 + $0x120] sm:$0xff]
  %v615 = vld [vmem:[%s1 + $0x128] sm:$0xff]
  %v616 = vld [vmem:[%s1 + $0x130] sm:$0xff]
  %v617 = vld [vmem:[%s1 + $0x138] sm:$0xff]
  %v618 = vld [vmem:[%s1 + $0x140] sm:$0xff]
  %v619 = vld [vmem:[%s1 + $0x148] sm:$0xff]
  %v620 = vld [vmem:[%s1 + $0x150] sm:$0xff]
  %v621 = vld [vmem:[%s1 + $0x158] sm:$0xff]
  %v622 = vld [vmem:[%s1 + $0x160] sm:$0xff]
  %v623 = vld [vmem:[%s1 + $0x168] sm:$0xff]
  %v624 = vld [vmem:[%s1 + $0x170] sm:$0xff]
  %v625 = vld [vmem:[%s1 + $0x178] sm:$0xff]
  %v626 = vld [vmem:[%s1 + $0x180] sm:$0xff]
  %v627 = vld [vmem:[%s1 + $0x188] sm:$0xff]
  %v628 = vld [vmem:[%s1 + $0x190] sm:$0xff]
  %v629 = vld [vmem:[%s1 + $0x198] sm:$0xff]
  %v630 = vld [vmem:[%s1 + $0x1a0] sm:$0xff]
  %v631 = vld [vmem:[%s1 + $0x1a8] sm:$0xff]
  %v632 = vld [vmem:[%s1 + $0x1b0] sm:$0xff]
  %v633 = vld [vmem:[%s1 + $0x1b8] sm:$0xff]
  %v634 = vld [vmem:[%s1 + $0x1c0] sm:$0xff]
  %v635 = vld [vmem:[%s1 + $0x1c8] sm:$0xff]
  %v636 = vld [vmem:[%s1 + $0x1d0] sm:$0xff]
  %v637 = vld [vmem:[%s1 + $0x1d8] sm:$0xff]
  %v638 = vld [vmem:[%s1 + $0x1e0] sm:$0xff]
  %v639 = vld [vmem:[%s1 + $0x1e8] sm:$0xff]
  %v640 = vld [vmem:[%s1 + $0x1f0] sm:$0xff]
  %v641 = vld [vmem:[%s1 + $0x1f8] sm:$0xff]
  %642 = vmatprep.subr.mxu0 %v579
  %643 = vmatpush1.msra.mxu0 %v578
  %644 = vmatprep.subr.mxu0 %v583
  %645 = vmatpush1.msra.mxu0 %v582
  %646 = vmatprep.subr.mxu0 %v587
  %647 = vmatpush1.msra.mxu0 %v586
  %648 = vmatprep.subr.mxu0 %v591
  %649 = vmatpush1.msra.mxu0 %v590
  %650 = vmatprep.subr.mxu0 %v595
  %651 = vmatpush1.msra.mxu0 %v594
  %652 = vmatprep.subr.mxu0 %v599
  %653 = vmatpush1.msra.mxu0 %v598
  %654 = vmatprep.subr.mxu0 %v603
  %655 = vmatpush1.msra.mxu0 %v602
  %656 = vmatprep.subr.mxu0 %v607
  %657 = vmatpush1.msra.mxu0 %v606
  %658 = vmatprep.subr.mxu0 %v611
  %659 = vmatpush1.msra.mxu0 %v610
  %660 = vmatprep.subr.mxu0 %v615
  %661 = vmatpush1.msra.mxu0 %v614
  %662 = vmatprep.subr.mxu0 %v619
  %663 = vmatpush1.msra.mxu0 %v618
  %664 = vmatprep.subr.mxu0 %v623
  %665 = vmatpush1.msra.mxu0 %v622
  %666 = vmatprep.subr.mxu0 %v627
  %667 = vmatpush1.msra.mxu0 %v626
  %668 = vmatprep.subr.mxu0 %v631
  %669 = vmatpush1.msra.mxu0 %v630
  %670 = vmatprep.subr.mxu0 %v635
  %671 = vmatpush1.msra.mxu0 %v634
  %672 = vmatprep.subr.mxu0 %v639
  %673 = vmatpush1.msra.mxu0 %v638
  %674 = vmatprep.subr.mxu0 0.0
  %675 = vmatpush1.msra.mxu0 0.0
  %676 = vmatprep.subr.mxu0 0.0
  %677 = vmatpush1.msra.mxu0 0.0
  %678 = vmatprep.subr.mxu0 0.0
  %679 = vmatpush1.msra.mxu0 0.0
  %680 = vmatprep.subr.mxu0 0.0
  %681 = vmatpush1.msra.mxu0 0.0
  %682 = vmatprep.subr.mxu0 0.0
  %683 = vmatpush1.msra.mxu0 0.0
  %684 = vmatprep.subr.mxu0 0.0
  %685 = vmatpush1.msra.mxu0 0.0
  %686 = vmatprep.subr.mxu0 0.0
  %687 = vmatpush1.msra.mxu0 0.0
  %688 = vmatprep.subr.mxu0 0.0
  %689 = vmatpush1.msra.mxu0 0.0
  %690 = vmatprep.subr.mxu0 0.0
  %691 = vmatpush1.msra.mxu0 0.0
  %692 = vmatprep.subr.mxu0 0.0
  %693 = vmatpush1.msra.mxu0 0.0
  %694 = vmatprep.subr.mxu0 0.0
  %695 = vmatpush1.msra.mxu0 0.0
  %696 = vmatprep.subr.mxu0 0.0
  %697 = vmatpush1.msra.mxu0 0.0
  %698 = vmatprep.subr.mxu0 0.0
  %699 = vmatpush1.msra.mxu0 0.0
  %700 = vmatprep.subr.mxu0 0.0
  %701 = vmatpush1.msra.mxu0 0.0
  %702 = vmatprep.subr.mxu0 0.0
  %703 = vmatpush1.msra.mxu0 0.0
  %704 = vmatprep.subr.mxu0 0.0
  %705 = vmatpush1.msra.mxu0 0.0
  %706 = vmatprep.mubr.f32.mxu0 0.0
  %707 = vmatmul.mubr.f32.gmra.mrb[0].mxu0 %v577
  %v708 = vpop.f32.mrb[0].mxu0
  %v709 = vadd.f32 0.0, %v708
  %v710 = vpop.f32.mrb[0].mxu0
  %v711 = vadd.f32 0.0, %v710
  %712 = vdwg.mxu0
  %713 = vmatprep.subr.mxu0 %v581
  %714 = vmatpush1.msra.mxu0 %v580
  %715 = vmatprep.subr.mxu0 %v585
  %716 = vmatpush1.msra.mxu0 %v584
  %717 = vmatprep.subr.mxu0 %v589
  %718 = vmatpush1.msra.mxu0 %v588
  %719 = vmatprep.subr.mxu0 %v593
  %720 = vmatpush1.msra.mxu0 %v592
  %721 = vmatprep.subr.mxu0 %v597
  %722 = vmatpush1.msra.mxu0 %v596
  %723 = vmatprep.subr.mxu0 %v601
  %724 = vmatpush1.msra.mxu0 %v600
  %725 = vmatprep.subr.mxu0 %v605
  %726 = vmatpush1.msra.mxu0 %v604
  %727 = vmatprep.subr.mxu0 %v609
  %728 = vmatpush1.msra.mxu0 %v608
  %729 = vmatprep.subr.mxu0 %v613
  %730 = vmatpush1.msra.mxu0 %v612
  %731 = vmatprep.subr.mxu0 %v617
  %732 = vmatpush1.msra.mxu0 %v616
  %733 = vmatprep.subr.mxu0 %v621
  %734 = vmatpush1.msra.mxu0 %v620
  %735 = vmatprep.subr.mxu0 %v625
  %736 = vmatpush1.msra.mxu0 %v624
  %737 = vmatprep.subr.mxu0 %v629
  %738 = vmatpush1.msra.mxu0 %v628
  %739 = vmatprep.subr.mxu0 %v633
  %740 = vmatpush1.msra.mxu0 %v632
  %741 = vmatprep.subr.mxu0 %v637
  %742 = vmatpush1.msra.mxu0 %v636
  %743 = vmatprep.subr.mxu0 %v641
  %744 = vmatpush1.msra.mxu0 %v640
  %745 = vmatprep.subr.mxu0 0.0
  %746 = vmatpush1.msra.mxu0 0.0
  %747 = vmatprep.subr.mxu0 0.0
  %748 = vmatpush1.msra.mxu0 0.0
  %749 = vmatprep.subr.mxu0 0.0
  %750 = vmatpush1.msra.mxu0 0.0
  %751 = vmatprep.subr.mxu0 0.0
  %752 = vmatpush1.msra.mxu0 0.0
  %753 = vmatprep.subr.mxu0 0.0
  %754 = vmatpush1.msra.mxu0 0.0
  %755 = vmatprep.subr.mxu0 0.0
  %756 = vmatpush1.msra.mxu0 0.0
  %757 = vmatprep.subr.mxu0 0.0
  %758 = vmatpush1.msra.mxu0 0.0
  %759 = vmatprep.subr.mxu0 0.0
  %760 = vmatpush1.msra.mxu0 0.0
  %761 = vmatprep.subr.mxu0 0.0
  %762 = vmatpush1.msra.mxu0 0.0
  %763 = vmatprep.subr.mxu0 0.0
  %764 = vmatpush1.msra.mxu0 0.0
  %765 = vmatprep.subr.mxu0 0.0
  %766 = vmatpush1.msra.mxu0 0.0
  %767 = vmatprep.subr.mxu0 0.0
  %768 = vmatpush1.msra.mxu0 0.0
  %769 = vmatprep.subr.mxu0 0.0
  %770 = vmatpush1.msra.mxu0 0.0
  %771 = vmatprep.subr.mxu0 0.0
  %772 = vmatpush1.msra.mxu0 0.0
  %773 = vmatprep.subr.mxu0 0.0
  %774 = vmatpush1.msra.mxu0 0.0
  %775 = vmatprep.subr.mxu0 0.0
  %776 = vmatpush1.msra.mxu0 0.0
  %777 = vmatprep.mubr.f32.mxu0 0.0
  %778 = vmatmul.mubr.f32.gmra.mrb[0].mxu0 %v577
  %v779 = vpop.f32.mrb[0].mxu0
  %v780 = vadd.f32 0.0, %v779
  %v781 = vpop.f32.mrb[0].mxu0
  %v782 = vadd.f32 0.0, %v781
  %783 = vdwg.mxu0
  %v788 = vcombine.low %v709, %v711
  %v789 = vcombine.low %v780, %v782
  %v791 = vunpack.c.l.s4 1983009808
  %v792 = vunpack.c.0.s8 %v791
  %v793 = vlaneseq
  %v794 = vshrl.u32 %v793, 7
  %v795 = vsub.s32 %v792, %v794
  %v796 = vrot.slane %v788, %v795
  %v798 = vunpack.c.l.s4 1983009808
  %v799 = vunpack.c.0.s8 %v798
  %v800 = vlaneseq
  %v801 = vshrl.u32 %v800, 7
  %v802 = vsub.s32 %v799, %v801
  %v803 = vrot.slane %v789, %v802
  %v804 = vcombine.low %v796, %v803
  %v806 = vadd.f32 %v576, %v804
  %v807 = vxor.u32 %v806, 2147483648
  %v808 = vmul.f32 %v807, 1.442695
  %v809 = vpow.pop %v808
  %v810 = vadd.f32 %v809, 1.0
  %v811 = vrcp.pop %v810
  %v812 = vmul.f32 1.0, %v811
  %v814 = vrot.slane %v806, 2
  %v816 = vxor.u32 %v814, 2147483648
  %v817 = vmul.f32 %v816, 1.442695
  %v818 = vpow.pop %v817
  %v819 = vadd.f32 %v818, 1.0
  %v820 = vrcp.pop %v819
  %v821 = vmul.f32 1.0, %v820
  %v822 = vrot.slane %v806, 4
  %v824 = vtanh.pop %v822
  %v825 = vrot.slane %v806, 6
  %v827 = vxor.u32 %v825, 2147483648
  %v828 = vmul.f32 %v827, 1.442695
  %v829 = vpow.pop %v828
  %v830 = vadd.f32 %v829, 1.0
  %v831 = vrcp.pop %v830
  %v832 = vmul.f32 1.0, %v831
  %v833 = vld [vmem:[#allocation3] sm:$0x3]
  %v834 = vmul.f32 %v821, %v833
  %v835 = vmul.f32 %v812, %v824
  %v836 = vadd.f32 %v834, %v835
  %v837 = vtanh.pop %v836
  %v838 = vmul.f32 %v832, %v837
  %839 = vst [vmem:[#allocation3] sm:$0x3] %v836
  %840 = vst [vmem:[#allocation2] sm:$0x3] %v838
  %v843 = vunpack.c.l.s4 1983009808
  %v844 = vunpack.c.0.s8 %v843
  %v845 = vlaneseq
  %v846 = vshrl.u32 %v845, 7
  %v847 = vsub.s32 %v844, %v846
  %v848 = vrot.slane %v838, %v847
  %849 = vrot.lane.b32.xlu0 %v848, 32
  %v850 = vpop.permute.xlu0 %849
  %852 = vst.msk [vmem:[#allocation4] sm:$0x3] %vm295, %v850
  %s853 = scalar_lea.vmem %s0, 24
  %v854 = vld [vmem:[%s853] sm:$0xff]
  %v855 = vld [vmem:[#allocation2] sm:$0x3]
  %v856 = vld [vmem:[%s1] sm:$0xff]
  %v857 = vld [vmem:[%s1 + $0x8] sm:$0xff]
  %v858 = vld [vmem:[%s1 + $0x10] sm:$0xff]
  %v859 = vld [vmem:[%s1 + $0x18] sm:$0xff]
  %v860 = vld [vmem:[%s1 + $0x20] sm:$0xff]
  %v861 = vld [vmem:[%s1 + $0x28] sm:$0xff]
  %v862 = vld [vmem:[%s1 + $0x30] sm:$0xff]
  %v863 = vld [vmem:[%s1 + $0x38] sm:$0xff]
  %v864 = vld [vmem:[%s1 + $0x40] sm:$0xff]
  %v865 = vld [vmem:[%s1 + $0x48] sm:$0xff]
  %v866 = vld [vmem:[%s1 + $0x50] sm:$0xff]
  %v867 = vld [vmem:[%s1 + $0x58] sm:$0xff]
  %v868 = vld [vmem:[%s1 + $0x60] sm:$0xff]
  %v869 = vld [vmem:[%s1 + $0x68] sm:$0xff]
  %v870 = vld [vmem:[%s1 + $0x70] sm:$0xff]
  %v871 = vld [vmem:[%s1 + $0x78] sm:$0xff]
  %v872 = vld [vmem:[%s1 + $0x80] sm:$0xff]
  %v873 = vld [vmem:[%s1 + $0x88] sm:$0xff]
  %v874 = vld [vmem:[%s1 + $0x90] sm:$0xff]
  %v875 = vld [vmem:[%s1 + $0x98] sm:$0xff]
  %v876 = vld [vmem:[%s1 + $0xa0] sm:$0xff]
  %v877 = vld [vmem:[%s1 + $0xa8] sm:$0xff]
  %v878 = vld [vmem:[%s1 + $0xb0] sm:$0xff]
  %v879 = vld [vmem:[%s1 + $0xb8] sm:$0xff]
  %v880 = vld [vmem:[%s1 + $0xc0] sm:$0xff]
  %v881 = vld [vmem:[%s1 + $0xc8] sm:$0xff]
  %v882 = vld [vmem:[%s1 + $0xd0] sm:$0xff]
  %v883 = vld [vmem:[%s1 + $0xd8] sm:$0xff]
  %v884 = vld [vmem:[%s1 + $0xe0] sm:$0xff]
  %v885 = vld [vmem:[%s1 + $0xe8] sm:$0xff]
  %v886 = vld [vmem:[%s1 + $0xf0] sm:$0xff]
  %v887 = vld [vmem:[%s1 + $0xf8] sm:$0xff]
  %v888 = vld [vmem:[%s1 + $0x100] sm:$0xff]
  %v889 = vld [vmem:[%s1 + $0x108] sm:$0xff]
  %v890 = vld [vmem:[%s1 + $0x110] sm:$0xff]
  %v891 = vld [vmem:[%s1 + $0x118] sm:$0xff]
  %v892 = vld [vmem:[%s1 + $0x120] sm:$0xff]
  %v893 = vld [vmem:[%s1 + $0x128] sm:$0xff]
  %v894 = vld [vmem:[%s1 + $0x130] sm:$0xff]
  %v895 = vld [vmem:[%s1 + $0x138] sm:$0xff]
  %v896 = vld [vmem:[%s1 + $0x140] sm:$0xff]
  %v897 = vld [vmem:[%s1 + $0x148] sm:$0xff]
  %v898 = vld [vmem:[%s1 + $0x150] sm:$0xff]
  %v899 = vld [vmem:[%s1 + $0x158] sm:$0xff]
  %v900 = vld [vmem:[%s1 + $0x160] sm:$0xff]
  %v901 = vld [vmem:[%s1 + $0x168] sm:$0xff]
  %v902 = vld [vmem:[%s1 + $0x170] sm:$0xff]
  %v903 = vld [vmem:[%s1 + $0x178] sm:$0xff]
  %v904 = vld [vmem:[%s1 + $0x180] sm:$0xff]
  %v905 = vld [vmem:[%s1 + $0x188] sm:$0xff]
  %v906 = vld [vmem:[%s1 + $0x190] sm:$0xff]
  %v907 = vld [vmem:[%s1 + $0x198] sm:$0xff]
  %v908 = vld [vmem:[%s1 + $0x1a0] sm:$0xff]
  %v909 = vld [vmem:[%s1 + $0x1a8] sm:$0xff]
  %v910 = vld [vmem:[%s1 + $0x1b0] sm:$0xff]
  %v911 = vld [vmem:[%s1 + $0x1b8] sm:$0xff]
  %v912 = vld [vmem:[%s1 + $0x1c0] sm:$0xff]
  %v913 = vld [vmem:[%s1 + $0x1c8] sm:$0xff]
  %v914 = vld [vmem:[%s1 + $0x1d0] sm:$0xff]
  %v915 = vld [vmem:[%s1 + $0x1d8] sm:$0xff]
  %v916 = vld [vmem:[%s1 + $0x1e0] sm:$0xff]
  %v917 = vld [vmem:[%s1 + $0x1e8] sm:$0xff]
  %v918 = vld [vmem:[%s1 + $0x1f0] sm:$0xff]
  %v919 = vld [vmem:[%s1 + $0x1f8] sm:$0xff]
  %920 = vmatprep.subr.mxu0 %v857
  %921 = vmatpush1.msra.mxu0 %v856
  %922 = vmatprep.subr.mxu0 %v861
  %923 = vmatpush1.msra.mxu0 %v860
  %924 = vmatprep.subr.mxu0 %v865
  %925 = vmatpush1.msra.mxu0 %v864
  %926 = vmatprep.subr.mxu0 %v869
  %927 = vmatpush1.msra.mxu0 %v868
  %928 = vmatprep.subr.mxu0 %v873
  %929 = vmatpush1.msra.mxu0 %v872
  %930 = vmatprep.subr.mxu0 %v877
  %931 = vmatpush1.msra.mxu0 %v876
  %932 = vmatprep.subr.mxu0 %v881
  %933 = vmatpush1.msra.mxu0 %v880
  %934 = vmatprep.subr.mxu0 %v885
  %935 = vmatpush1.msra.mxu0 %v884
  %936 = vmatprep.subr.mxu0 %v889
  %937 = vmatpush1.msra.mxu0 %v888
  %938 = vmatprep.subr.mxu0 %v893
  %939 = vmatpush1.msra.mxu0 %v892
  %940 = vmatprep.subr.mxu0 %v897
  %941 = vmatpush1.msra.mxu0 %v896
  %942 = vmatprep.subr.mxu0 %v901
  %943 = vmatpush1.msra.mxu0 %v900
  %944 = vmatprep.subr.mxu0 %v905
  %945 = vmatpush1.msra.mxu0 %v904
  %946 = vmatprep.subr.mxu0 %v909
  %947 = vmatpush1.msra.mxu0 %v908
  %948 = vmatprep.subr.mxu0 %v913
  %949 = vmatpush1.msra.mxu0 %v912
  %950 = vmatprep.subr.mxu0 %v917
  %951 = vmatpush1.msra.mxu0 %v916
  %952 = vmatprep.subr.mxu0 0.0
  %953 = vmatpush1.msra.mxu0 0.0
  %954 = vmatprep.subr.mxu0 0.0
  %955 = vmatpush1.msra.mxu0 0.0
  %956 = vmatprep.subr.mxu0 0.0
  %957 = vmatpush1.msra.mxu0 0.0
  %958 = vmatprep.subr.mxu0 0.0
  %959 = vmatpush1.msra.mxu0 0.0
  %960 = vmatprep.subr.mxu0 0.0
  %961 = vmatpush1.msra.mxu0 0.0
  %962 = vmatprep.subr.mxu0 0.0
  %963 = vmatpush1.msra.mxu0 0.0
  %964 = vmatprep.subr.mxu0 0.0
  %965 = vmatpush1.msra.mxu0 0.0
  %966 = vmatprep.subr.mxu0 0.0
  %967 = vmatpush1.msra.mxu0 0.0
  %968 = vmatprep.subr.mxu0 0.0
  %969 = vmatpush1.msra.mxu0 0.0
  %970 = vmatprep.subr.mxu0 0.0
  %971 = vmatpush1.msra.mxu0 0.0
  %972 = vmatprep.subr.mxu0 0.0
  %973 = vmatpush1.msra.mxu0 0.0
  %974 = vmatprep.subr.mxu0 0.0
  %975 = vmatpush1.msra.mxu0 0.0
  %976 = vmatprep.subr.mxu0 0.0
  %977 = vmatpush1.msra.mxu0 0.0
  %978 = vmatprep.subr.mxu0 0.0
  %979 = vmatpush1.msra.mxu0 0.0
  %980 = vmatprep.subr.mxu0 0.0
  %981 = vmatpush1.msra.mxu0 0.0
  %982 = vmatprep.subr.mxu0 0.0
  %983 = vmatpush1.msra.mxu0 0.0
  %984 = vmatprep.mubr.f32.mxu0 0.0
  %985 = vmatmul.mubr.f32.gmra.mrb[0].mxu0 %v855
  %v986 = vpop.f32.mrb[0].mxu0
  %v987 = vadd.f32 0.0, %v986
  %v988 = vpop.f32.mrb[0].mxu0
  %v989 = vadd.f32 0.0, %v988
  %990 = vdwg.mxu0
  %991 = vmatprep.subr.mxu0 %v859
  %992 = vmatpush1.msra.mxu0 %v858
  %993 = vmatprep.subr.mxu0 %v863
  %994 = vmatpush1.msra.mxu0 %v862
  %995 = vmatprep.subr.mxu0 %v867
  %996 = vmatpush1.msra.mxu0 %v866
  %997 = vmatprep.subr.mxu0 %v871
  %998 = vmatpush1.msra.mxu0 %v870
  %999 = vmatprep.subr.mxu0 %v875
  %1000 = vmatpush1.msra.mxu0 %v874
  %1001 = vmatprep.subr.mxu0 %v879
  %1002 = vmatpush1.msra.mxu0 %v878
  %1003 = vmatprep.subr.mxu0 %v883
  %1004 = vmatpush1.msra.mxu0 %v882
  %1005 = vmatprep.subr.mxu0 %v887
  %1006 = vmatpush1.msra.mxu0 %v886
  %1007 = vmatprep.subr.mxu0 %v891
  %1008 = vmatpush1.msra.mxu0 %v890
  %1009 = vmatprep.subr.mxu0 %v895
  %1010 = vmatpush1.msra.mxu0 %v894
  %1011 = vmatprep.subr.mxu0 %v899
  %1012 = vmatpush1.msra.mxu0 %v898
  %1013 = vmatprep.subr.mxu0 %v903
  %1014 = vmatpush1.msra.mxu0 %v902
  %1015 = vmatprep.subr.mxu0 %v907
  %1016 = vmatpush1.msra.mxu0 %v906
  %1017 = vmatprep.subr.mxu0 %v911
  %1018 = vmatpush1.msra.mxu0 %v910
  %1019 = vmatprep.subr.mxu0 %v915
  %1020 = vmatpush1.msra.mxu0 %v914
  %1021 = vmatprep.subr.mxu0 %v919
  %1022 = vmatpush1.msra.mxu0 %v918
  %1023 = vmatprep.subr.mxu0 0.0
  %1024 = vmatpush1.msra.mxu0 0.0
  %1025 = vmatprep.subr.mxu0 0.0
  %1026 = vmatpush1.msra.mxu0 0.0
  %1027 = vmatprep.subr.mxu0 0.0
  %1028 = vmatpush1.msra.mxu0 0.0
  %1029 = vmatprep.subr.mxu0 0.0
  %1030 = vmatpush1.msra.mxu0 0.0
  %1031 = vmatprep.subr.mxu0 0.0
  %1032 = vmatpush1.msra.mxu0 0.0
  %1033 = vmatprep.subr.mxu0 0.0
  %1034 = vmatpush1.msra.mxu0 0.0
  %1035 = vmatprep.subr.mxu0 0.0
  %1036 = vmatpush1.msra.mxu0 0.0
  %1037 = vmatprep.subr.mxu0 0.0
  %1038 = vmatpush1.msra.mxu0 0.0
  %1039 = vmatprep.subr.mxu0 0.0
  %1040 = vmatpush1.msra.mxu0 0.0
  %1041 = vmatprep.subr.mxu0 0.0
  %1042 = vmatpush1.msra.mxu0 0.0
  %1043 = vmatprep.subr.mxu0 0.0
  %1044 = vmatpush1.msra.mxu0 0.0
  %1045 = vmatprep.subr.mxu0 0.0
  %1046 = vmatpush1.msra.mxu0 0.0
  %1047 = vmatprep.subr.mxu0 0.0
  %1048 = vmatpush1.msra.mxu0 0.0
  %1049 = vmatprep.subr.mxu0 0.0
  %1050 = vmatpush1.msra.mxu0 0.0
  %1051 = vmatprep.subr.mxu0 0.0
  %1052 = vmatpush1.msra.mxu0 0.0
  %1053 = vmatprep.subr.mxu0 0.0
  %1054 = vmatpush1.msra.mxu0 0.0
  %1055 = vmatprep.mubr.f32.mxu0 0.0
  %1056 = vmatmul.mubr.f32.gmra.mrb[0].mxu0 %v855
  %v1057 = vpop.f32.mrb[0].mxu0
  %v1058 = vadd.f32 0.0, %v1057
  %v1059 = vpop.f32.mrb[0].mxu0
  %v1060 = vadd.f32 0.0, %v1059
  %1061 = vdwg.mxu0
  %v1066 = vcombine.low %v987, %v989
  %v1067 = vcombine.low %v1058, %v1060
  %v1069 = vunpack.c.l.s4 1983009808
  %v1070 = vunpack.c.0.s8 %v1069
  %v1071 = vlaneseq
  %v1072 = vshrl.u32 %v1071, 7
  %v1073 = vsub.s32 %v1070, %v1072
  %v1074 = vrot.slane %v1066, %v1073
  %v1076 = vunpack.c.l.s4 1983009808
  %v1077 = vunpack.c.0.s8 %v1076
  %v1078 = vlaneseq
  %v1079 = vshrl.u32 %v1078, 7
  %v1080 = vsub.s32 %v1077, %v1079
  %v1081 = vrot.slane %v1067, %v1080
  %v1082 = vcombine.low %v1074, %v1081
  %v1084 = vadd.f32 %v854, %v1082
  %v1085 = vxor.u32 %v1084, 2147483648
  %v1086 = vmul.f32 %v1085, 1.442695
  %v1087 = vpow.pop %v1086
  %v1088 = vadd.f32 %v1087, 1.0
  %v1089 = vrcp.pop %v1088
  %v1090 = vmul.f32 1.0, %v1089
  %v1092 = vrot.slane %v1084, 2
  %v1094 = vxor.u32 %v1092, 2147483648
  %v1095 = vmul.f32 %v1094, 1.442695
  %v1096 = vpow.pop %v1095
  %v1097 = vadd.f32 %v1096, 1.0
  %v1098 = vrcp.pop %v1097
  %v1099 = vmul.f32 1.0, %v1098
  %v1100 = vrot.slane %v1084, 4
  %v1102 = vtanh.pop %v1100
  %v1103 = vrot.slane %v1084, 6
  %v1105 = vxor.u32 %v1103, 2147483648
  %v1106 = vmul.f32 %v1105, 1.442695
  %v1107 = vpow.pop %v1106
  %v1108 = vadd.f32 %v1107, 1.0
  %v1109 = vrcp.pop %v1108
  %v1110 = vmul.f32 1.0, %v1109
  %v1111 = vld [vmem:[#allocation3] sm:$0x3]
  %v1112 = vmul.f32 %v1099, %v1111
  %v1113 = vmul.f32 %v1090, %v1102
  %v1114 = vadd.f32 %v1112, %v1113
  %v1115 = vtanh.pop %v1114
  %v1116 = vmul.f32 %v1110, %v1115
  %1117 = vst [vmem:[#allocation3] sm:$0x3] %v1114
  %1118 = vst [vmem:[#allocation2] sm:$0x3] %v1116
  %v1121 = vunpack.c.l.s4 1983009808
  %v1122 = vunpack.c.0.s8 %v1121
  %v1123 = vlaneseq
  %v1124 = vshrl.u32 %v1123, 7
  %v1125 = vsub.s32 %v1122, %v1124
  %v1126 = vrot.slane %v1116, %v1125
  %1127 = vrot.lane.b32.xlu0 %v1126, 32
  %v1128 = vpop.permute.xlu0 %1127
  %1130 = vst.msk [vmem:[#allocation4] sm:$0x3] %vm295, %v1128
  %s1131 = scalar_lea.vmem %s0, 32
  %v1132 = vld [vmem:[%s1131] sm:$0xff]
  %v1133 = vld [vmem:[#allocation2] sm:$0x3]
  %v1134 = vld [vmem:[%s1] sm:$0xff]
  %v1135 = vld [vmem:[%s1 + $0x8] sm:$0xff]
  %v1136 = vld [vmem:[%s1 + $0x10] sm:$0xff]
  %v1137 = vld [vmem:[%s1 + $0x18] sm:$0xff]
  %v1138 = vld [vmem:[%s1 + $0x20] sm:$0xff]
  %v1139 = vld [vmem:[%s1 + $0x28] sm:$0xff]
  %v1140 = vld [vmem:[%s1 + $0x30] sm:$0xff]
  %v1141 = vld [vmem:[%s1 + $0x38] sm:$0xff]
  %v1142 = vld [vmem:[%s1 + $0x40] sm:$0xff]
  %v1143 = vld [vmem:[%s1 + $0x48] sm:$0xff]
  %v1144 = vld [vmem:[%s1 + $0x50] sm:$0xff]
  %v1145 = vld [vmem:[%s1 + $0x58] sm:$0xff]
  %v1146 = vld [vmem:[%s1 + $0x60] sm:$0xff]
  %v1147 = vld [vmem:[%s1 + $0x68] sm:$0xff]
  %v1148 = vld [vmem:[%s1 + $0x70] sm:$0xff]
  %v1149 = vld [vmem:[%s1 + $0x78] sm:$0xff]
  %v1150 = vld [vmem:[%s1 + $0x80] sm:$0xff]
  %v1151 = vld [vmem:[%s1 + $0x88] sm:$0xff]
  %v1152 = vld [vmem:[%s1 + $0x90] sm:$0xff]
  %v1153 = vld [vmem:[%s1 + $0x98] sm:$0xff]
  %v1154 = vld [vmem:[%s1 + $0xa0] sm:$0xff]
  %v1155 = vld [vmem:[%s1 + $0xa8] sm:$0xff]
  %v1156 = vld [vmem:[%s1 + $0xb0] sm:$0xff]
  %v1157 = vld [vmem:[%s1 + $0xb8] sm:$0xff]
  %v1158 = vld [vmem:[%s1 + $0xc0] sm:$0xff]
  %v1159 = vld [vmem:[%s1 + $0xc8] sm:$0xff]
  %v1160 = vld [vmem:[%s1 + $0xd0] sm:$0xff]
  %v1161 = vld [vmem:[%s1 + $0xd8] sm:$0xff]
  %v1162 = vld [vmem:[%s1 + $0xe0] sm:$0xff]
  %v1163 = vld [vmem:[%s1 + $0xe8] sm:$0xff]
  %v1164 = vld [vmem:[%s1 + $0xf0] sm:$0xff]
  %v1165 = vld [vmem:[%s1 + $0xf8] sm:$0xff]
  %v1166 = vld [vmem:[%s1 + $0x100] sm:$0xff]
  %v1167 = vld [vmem:[%s1 + $0x108] sm:$0xff]
  %v1168 = vld [vmem:[%s1 + $0x110] sm:$0xff]
  %v1169 = vld [vmem:[%s1 + $0x118] sm:$0xff]
  %v1170 = vld [vmem:[%s1 + $0x120] sm:$0xff]
  %v1171 = vld [vmem:[%s1 + $0x128] sm:$0xff]
  %v1172 = vld [vmem:[%s1 + $0x130] sm:$0xff]
  %v1173 = vld [vmem:[%s1 + $0x138] sm:$0xff]
  %v1174 = vld [vmem:[%s1 + $0x140] sm:$0xff]
  %v1175 = vld [vmem:[%s1 + $0x148] sm:$0xff]
  %v1176 = vld [vmem:[%s1 + $0x150] sm:$0xff]
  %v1177 = vld [vmem:[%s1 + $0x158] sm:$0xff]
  %v1178 = vld [vmem:[%s1 + $0x160] sm:$0xff]
  %v1179 = vld [vmem:[%s1 + $0x168] sm:$0xff]
  %v1180 = vld [vmem:[%s1 + $0x170] sm:$0xff]
  %v1181 = vld [vmem:[%s1 + $0x178] sm:$0xff]
  %v1182 = vld [vmem:[%s1 + $0x180] sm:$0xff]
  %v1183 = vld [vmem:[%s1 + $0x188] sm:$0xff]
  %v1184 = vld [vmem:[%s1 + $0x190] sm:$0xff]
  %v1185 = vld [vmem:[%s1 + $0x198] sm:$0xff]
  %v1186 = vld [vmem:[%s1 + $0x1a0] sm:$0xff]
  %v1187 = vld [vmem:[%s1 + $0x1a8] sm:$0xff]
  %v1188 = vld [vmem:[%s1 + $0x1b0] sm:$0xff]
  %v1189 = vld [vmem:[%s1 + $0x1b8] sm:$0xff]
  %v1190 = vld [vmem:[%s1 + $0x1c0] sm:$0xff]
  %v1191 = vld [vmem:[%s1 + $0x1c8] sm:$0xff]
  %v1192 = vld [vmem:[%s1 + $0x1d0] sm:$0xff]
  %v1193 = vld [vmem:[%s1 + $0x1d8] sm:$0xff]
  %v1194 = vld [vmem:[%s1 + $0x1e0] sm:$0xff]
  %v1195 = vld [vmem:[%s1 + $0x1e8] sm:$0xff]
  %v1196 = vld [vmem:[%s1 + $0x1f0] sm:$0xff]
  %v1197 = vld [vmem:[%s1 + $0x1f8] sm:$0xff]
  %1198 = vmatprep.subr.mxu0 %v1135
  %1199 = vmatpush1.msra.mxu0 %v1134
  %1200 = vmatprep.subr.mxu0 %v1139
  %1201 = vmatpush1.msra.mxu0 %v1138
  %1202 = vmatprep.subr.mxu0 %v1143
  %1203 = vmatpush1.msra.mxu0 %v1142
  %1204 = vmatprep.subr.mxu0 %v1147
  %1205 = vmatpush1.msra.mxu0 %v1146
  %1206 = vmatprep.subr.mxu0 %v1151
  %1207 = vmatpush1.msra.mxu0 %v1150
  %1208 = vmatprep.subr.mxu0 %v1155
  %1209 = vmatpush1.msra.mxu0 %v1154
  %1210 = vmatprep.subr.mxu0 %v1159
  %1211 = vmatpush1.msra.mxu0 %v1158
  %1212 = vmatprep.subr.mxu0 %v1163
  %1213 = vmatpush1.msra.mxu0 %v1162
  %1214 = vmatprep.subr.mxu0 %v1167
  %1215 = vmatpush1.msra.mxu0 %v1166
  %1216 = vmatprep.subr.mxu0 %v1171
  %1217 = vmatpush1.msra.mxu0 %v1170
  %1218 = vmatprep.subr.mxu0 %v1175
  %1219 = vmatpush1.msra.mxu0 %v1174
  %1220 = vmatprep.subr.mxu0 %v1179
  %1221 = vmatpush1.msra.mxu0 %v1178
  %1222 = vmatprep.subr.mxu0 %v1183
  %1223 = vmatpush1.msra.mxu0 %v1182
  %1224 = vmatprep.subr.mxu0 %v1187
  %1225 = vmatpush1.msra.mxu0 %v1186
  %1226 = vmatprep.subr.mxu0 %v1191
  %1227 = vmatpush1.msra.mxu0 %v1190
  %1228 = vmatprep.subr.mxu0 %v1195
  %1229 = vmatpush1.msra.mxu0 %v1194
  %1230 = vmatprep.subr.mxu0 0.0
  %1231 = vmatpush1.msra.mxu0 0.0
  %1232 = vmatprep.subr.mxu0 0.0
  %1233 = vmatpush1.msra.mxu0 0.0
  %1234 = vmatprep.subr.mxu0 0.0
  %1235 = vmatpush1.msra.mxu0 0.0
  %1236 = vmatprep.subr.mxu0 0.0
  %1237 = vmatpush1.msra.mxu0 0.0
  %1238 = vmatprep.subr.mxu0 0.0
  %1239 = vmatpush1.msra.mxu0 0.0
  %1240 = vmatprep.subr.mxu0 0.0
  %1241 = vmatpush1.msra.mxu0 0.0
  %1242 = vmatprep.subr.mxu0 0.0
  %1243 = vmatpush1.msra.mxu0 0.0
  %1244 = vmatprep.subr.mxu0 0.0
  %1245 = vmatpush1.msra.mxu0 0.0
  %1246 = vmatprep.subr.mxu0 0.0
  %1247 = vmatpush1.msra.mxu0 0.0
  %1248 = vmatprep.subr.mxu0 0.0
  %1249 = vmatpush1.msra.mxu0 0.0
  %1250 = vmatprep.subr.mxu0 0.0
  %1251 = vmatpush1.msra.mxu0 0.0
  %1252 = vmatprep.subr.mxu0 0.0
  %1253 = vmatpush1.msra.mxu0 0.0
  %1254 = vmatprep.subr.mxu0 0.0
  %1255 = vmatpush1.msra.mxu0 0.0
  %1256 = vmatprep.subr.mxu0 0.0
  %1257 = vmatpush1.msra.mxu0 0.0
  %1258 = vmatprep.subr.mxu0 0.0
  %1259 = vmatpush1.msra.mxu0 0.0
  %1260 = vmatprep.subr.mxu0 0.0
  %1261 = vmatpush1.msra.mxu0 0.0
  %1262 = vmatprep.mubr.f32.mxu0 0.0
  %1263 = vmatmul.mubr.f32.gmra.mrb[0].mxu0 %v1133
  %v1264 = vpop.f32.mrb[0].mxu0
  %v1265 = vadd.f32 0.0, %v1264
  %v1266 = vpop.f32.mrb[0].mxu0
  %v1267 = vadd.f32 0.0, %v1266
  %1268 = vdwg.mxu0
  %1269 = vmatprep.subr.mxu0 %v1137
  %1270 = vmatpush1.msra.mxu0 %v1136
  %1271 = vmatprep.subr.mxu0 %v1141
  %1272 = vmatpush1.msra.mxu0 %v1140
  %1273 = vmatprep.subr.mxu0 %v1145
  %1274 = vmatpush1.msra.mxu0 %v1144
  %1275 = vmatprep.subr.mxu0 %v1149
  %1276 = vmatpush1.msra.mxu0 %v1148
  %1277 = vmatprep.subr.mxu0 %v1153
  %1278 = vmatpush1.msra.mxu0 %v1152
  %1279 = vmatprep.subr.mxu0 %v1157
  %1280 = vmatpush1.msra.mxu0 %v1156
  %1281 = vmatprep.subr.mxu0 %v1161
  %1282 = vmatpush1.msra.mxu0 %v1160
  %1283 = vmatprep.subr.mxu0 %v1165
  %1284 = vmatpush1.msra.mxu0 %v1164
  %1285 = vmatprep.subr.mxu0 %v1169
  %1286 = vmatpush1.msra.mxu0 %v1168
  %1287 = vmatprep.subr.mxu0 %v1173
  %1288 = vmatpush1.msra.mxu0 %v1172
  %1289 = vmatprep.subr.mxu0 %v1177
  %1290 = vmatpush1.msra.mxu0 %v1176
  %1291 = vmatprep.subr.mxu0 %v1181
  %1292 = vmatpush1.msra.mxu0 %v1180
  %1293 = vmatprep.subr.mxu0 %v1185
  %1294 = vmatpush1.msra.mxu0 %v1184
  %1295 = vmatprep.subr.mxu0 %v1189
  %1296 = vmatpush1.msra.mxu0 %v1188
  %1297 = vmatprep.subr.mxu0 %v1193
  %1298 = vmatpush1.msra.mxu0 %v1192
  %1299 = vmatprep.subr.mxu0 %v1197
  %1300 = vmatpush1.msra.mxu0 %v1196
  %1301 = vmatprep.subr.mxu0 0.0
  %1302 = vmatpush1.msra.mxu0 0.0
  %1303 = vmatprep.subr.mxu0 0.0
  %1304 = vmatpush1.msra.mxu0 0.0
  %1305 = vmatprep.subr.mxu0 0.0
  %1306 = vmatpush1.msra.mxu0 0.0
  %1307 = vmatprep.subr.mxu0 0.0
  %1308 = vmatpush1.msra.mxu0 0.0
  %1309 = vmatprep.subr.mxu0 0.0
  %1310 = vmatpush1.msra.mxu0 0.0
  %1311 = vmatprep.subr.mxu0 0.0
  %1312 = vmatpush1.msra.mxu0 0.0
  %1313 = vmatprep.subr.mxu0 0.0
  %1314 = vmatpush1.msra.mxu0 0.0
  %1315 = vmatprep.subr.mxu0 0.0
  %1316 = vmatpush1.msra.mxu0 0.0
  %1317 = vmatprep.subr.mxu0 0.0
  %1318 = vmatpush1.msra.mxu0 0.0
  %1319 = vmatprep.subr.mxu0 0.0
  %1320 = vmatpush1.msra.mxu0 0.0
  %1321 = vmatprep.subr.mxu0 0.0
  %1322 = vmatpush1.msra.mxu0 0.0
  %1323 = vmatprep.subr.mxu0 0.0
  %1324 = vmatpush1.msra.mxu0 0.0
  %1325 = vmatprep.subr.mxu0 0.0
  %1326 = vmatpush1.msra.mxu0 0.0
  %1327 = vmatprep.subr.mxu0 0.0
  %1328 = vmatpush1.msra.mxu0 0.0
  %1329 = vmatprep.subr.mxu0 0.0
  %1330 = vmatpush1.msra.mxu0 0.0
  %1331 = vmatprep.subr.mxu0 0.0
  %1332 = vmatpush1.msra.mxu0 0.0
  %1333 = vmatprep.mubr.f32.mxu0 0.0
  %1334 = vmatmul.mubr.f32.gmra.mrb[0].mxu0 %v1133
  %v1335 = vpop.f32.mrb[0].mxu0
  %v1336 = vadd.f32 0.0, %v1335
  %v1337 = vpop.f32.mrb[0].mxu0
  %v1338 = vadd.f32 0.0, %v1337
  %1339 = vdwg.mxu0
  %v1344 = vcombine.low %v1265, %v1267
  %v1345 = vcombine.low %v1336, %v1338
  %v1347 = vunpack.c.l.s4 1983009808
  %v1348 = vunpack.c.0.s8 %v1347
  %v1349 = vlaneseq
  %v1350 = vshrl.u32 %v1349, 7
  %v1351 = vsub.s32 %v1348, %v1350
  %v1352 = vrot.slane %v1344, %v1351
  %v1354 = vunpack.c.l.s4 1983009808
  %v1355 = vunpack.c.0.s8 %v1354
  %v1356 = vlaneseq
  %v1357 = vshrl.u32 %v1356, 7
  %v1358 = vsub.s32 %v1355, %v1357
  %v1359 = vrot.slane %v1345, %v1358
  %v1360 = vcombine.low %v1352, %v1359
  %v1362 = vadd.f32 %v1132, %v1360
  %v1363 = vxor.u32 %v1362, 2147483648
  %v1364 = vmul.f32 %v1363, 1.442695
  %v1365 = vpow.pop %v1364
  %v1366 = vadd.f32 %v1365, 1.0
  %v1367 = vrcp.pop %v1366
  %v1368 = vmul.f32 1.0, %v1367
  %v1370 = vrot.slane %v1362, 2
  %v1372 = vxor.u32 %v1370, 2147483648
  %v1373 = vmul.f32 %v1372, 1.442695
  %v1374 = vpow.pop %v1373
  %v1375 = vadd.f32 %v1374, 1.0
  %v1376 = vrcp.pop %v1375
  %v1377 = vmul.f32 1.0, %v1376
  %v1378 = vrot.slane %v1362, 4
  %v1380 = vtanh.pop %v1378
  %v1381 = vrot.slane %v1362, 6
  %v1383 = vxor.u32 %v1381, 2147483648
  %v1384 = vmul.f32 %v1383, 1.442695
  %v1385 = vpow.pop %v1384
  %v1386 = vadd.f32 %v1385, 1.0
  %v1387 = vrcp.pop %v1386
  %v1388 = vmul.f32 1.0, %v1387
  %v1389 = vld [vmem:[#allocation3] sm:$0x3]
  %v1390 = vmul.f32 %v1377, %v1389
  %v1391 = vmul.f32 %v1368, %v1380
  %v1392 = vadd.f32 %v1390, %v1391
  %v1393 = vtanh.pop %v1392
  %v1394 = vmul.f32 %v1388, %v1393
  %1395 = vst [vmem:[#allocation3] sm:$0x3] %v1392
  %1396 = vst [vmem:[#allocation2] sm:$0x3] %v1394
  %v1399 = vunpack.c.l.s4 1983009808
  %v1400 = vunpack.c.0.s8 %v1399
  %v1401 = vlaneseq
  %v1402 = vshrl.u32 %v1401, 7
  %v1403 = vsub.s32 %v1400, %v1402
  %v1404 = vrot.slane %v1394, %v1403
  %1405 = vrot.lane.b32.xlu0 %v1404, 32
  %v1406 = vpop.permute.xlu0 %1405
  %s1408 = scalar_lea.vmem [#allocation4], 2
  %1409 = vst.msk [vmem:[%s1408] sm:$0x3] %vm295, %v1406
  %s1410 = scalar_lea.vmem %s0, 40
  %v1411 = vld [vmem:[%s1410] sm:$0xff]
  %v1412 = vld [vmem:[#allocation2] sm:$0x3]
  %v1413 = vld [vmem:[%s1] sm:$0xff]
  %v1414 = vld [vmem:[%s1 + $0x8] sm:$0xff]
  %v1415 = vld [vmem:[%s1 + $0x10] sm:$0xff]
  %v1416 = vld [vmem:[%s1 + $0x18] sm:$0xff]
  %v1417 = vld [vmem:[%s1 + $0x20] sm:$0xff]
  %v1418 = vld [vmem:[%s1 + $0x28] sm:$0xff]
  %v1419 = vld [vmem:[%s1 + $0x30] sm:$0xff]
  %v1420 = vld [vmem:[%s1 + $0x38] sm:$0xff]
  %v1421 = vld [vmem:[%s1 + $0x40] sm:$0xff]
  %v1422 = vld [vmem:[%s1 + $0x48] sm:$0xff]
  %v1423 = vld [vmem:[%s1 + $0x50] sm:$0xff]
  %v1424 = vld [vmem:[%s1 + $0x58] sm:$0xff]
  %v1425 = vld [vmem:[%s1 + $0x60] sm:$0xff]
  %v1426 = vld [vmem:[%s1 + $0x68] sm:$0xff]
  %v1427 = vld [vmem:[%s1 + $0x70] sm:$0xff]
  %v1428 = vld [vmem:[%s1 + $0x78] sm:$0xff]
  %v1429 = vld [vmem:[%s1 + $0x80] sm:$0xff]
  %v1430 = vld [vmem:[%s1 + $0x88] sm:$0xff]
  %v1431 = vld [vmem:[%s1 + $0x90] sm:$0xff]
  %v1432 = vld [vmem:[%s1 + $0x98] sm:$0xff]
  %v1433 = vld [vmem:[%s1 + $0xa0] sm:$0xff]
  %v1434 = vld [vmem:[%s1 + $0xa8] sm:$0xff]
  %v1435 = vld [vmem:[%s1 + $0xb0] sm:$0xff]
  %v1436 = vld [vmem:[%s1 + $0xb8] sm:$0xff]
  %v1437 = vld [vmem:[%s1 + $0xc0] sm:$0xff]
  %v1438 = vld [vmem:[%s1 + $0xc8] sm:$0xff]
  %v1439 = vld [vmem:[%s1 + $0xd0] sm:$0xff]
  %v1440 = vld [vmem:[%s1 + $0xd8] sm:$0xff]
  %v1441 = vld [vmem:[%s1 + $0xe0] sm:$0xff]
  %v1442 = vld [vmem:[%s1 + $0xe8] sm:$0xff]
  %v1443 = vld [vmem:[%s1 + $0xf0] sm:$0xff]
  %v1444 = vld [vmem:[%s1 + $0xf8] sm:$0xff]
  %v1445 = vld [vmem:[%s1 + $0x100] sm:$0xff]
  %v1446 = vld [vmem:[%s1 + $0x108] sm:$0xff]
  %v1447 = vld [vmem:[%s1 + $0x110] sm:$0xff]
  %v1448 = vld [vmem:[%s1 + $0x118] sm:$0xff]
  %v1449 = vld [vmem:[%s1 + $0x120] sm:$0xff]
  %v1450 = vld [vmem:[%s1 + $0x128] sm:$0xff]
  %v1451 = vld [vmem:[%s1 + $0x130] sm:$0xff]
  %v1452 = vld [vmem:[%s1 + $0x138] sm:$0xff]
  %v1453 = vld [vmem:[%s1 + $0x140] sm:$0xff]
  %v1454 = vld [vmem:[%s1 + $0x148] sm:$0xff]
  %v1455 = vld [vmem:[%s1 + $0x150] sm:$0xff]
  %v1456 = vld [vmem:[%s1 + $0x158] sm:$0xff]
  %v1457 = vld [vmem:[%s1 + $0x160] sm:$0xff]
  %v1458 = vld [vmem:[%s1 + $0x168] sm:$0xff]
  %v1459 = vld [vmem:[%s1 + $0x170] sm:$0xff]
  %v1460 = vld [vmem:[%s1 + $0x178] sm:$0xff]
  %v1461 = vld [vmem:[%s1 + $0x180] sm:$0xff]
  %v1462 = vld [vmem:[%s1 + $0x188] sm:$0xff]
  %v1463 = vld [vmem:[%s1 + $0x190] sm:$0xff]
  %v1464 = vld [vmem:[%s1 + $0x198] sm:$0xff]
  %v1465 = vld [vmem:[%s1 + $0x1a0] sm:$0xff]
  %v1466 = vld [vmem:[%s1 + $0x1a8] sm:$0xff]
  %v1467 = vld [vmem:[%s1 + $0x1b0] sm:$0xff]
  %v1468 = vld [vmem:[%s1 + $0x1b8] sm:$0xff]
  %v1469 = vld [vmem:[%s1 + $0x1c0] sm:$0xff]
  %v1470 = vld [vmem:[%s1 + $0x1c8] sm:$0xff]
  %v1471 = vld [vmem:[%s1 + $0x1d0] sm:$0xff]
  %v1472 = vld [vmem:[%s1 + $0x1d8] sm:$0xff]
  %v1473 = vld [vmem:[%s1 + $0x1e0] sm:$0xff]
  %v1474 = vld [vmem:[%s1 + $0x1e8] sm:$0xff]
  %v1475 = vld [vmem:[%s1 + $0x1f0] sm:$0xff]
  %v1476 = vld [vmem:[%s1 + $0x1f8] sm:$0xff]
  %1477 = vmatprep.subr.mxu0 %v1414
  %1478 = vmatpush1.msra.mxu0 %v1413
  %1479 = vmatprep.subr.mxu0 %v1418
  %1480 = vmatpush1.msra.mxu0 %v1417
  %1481 = vmatprep.subr.mxu0 %v1422
  %1482 = vmatpush1.msra.mxu0 %v1421
  %1483 = vmatprep.subr.mxu0 %v1426
  %1484 = vmatpush1.msra.mxu0 %v1425
  %1485 = vmatprep.subr.mxu0 %v1430
  %1486 = vmatpush1.msra.mxu0 %v1429
  %1487 = vmatprep.subr.mxu0 %v1434
  %1488 = vmatpush1.msra.mxu0 %v1433
  %1489 = vmatprep.subr.mxu0 %v1438
  %1490 = vmatpush1.msra.mxu0 %v1437
  %1491 = vmatprep.subr.mxu0 %v1442
  %1492 = vmatpush1.msra.mxu0 %v1441
  %1493 = vmatprep.subr.mxu0 %v1446
  %1494 = vmatpush1.msra.mxu0 %v1445
  %1495 = vmatprep.subr.mxu0 %v1450
  %1496 = vmatpush1.msra.mxu0 %v1449
  %1497 = vmatprep.subr.mxu0 %v1454
  %1498 = vmatpush1.msra.mxu0 %v1453
  %1499 = vmatprep.subr.mxu0 %v1458
  %1500 = vmatpush1.msra.mxu0 %v1457
  %1501 = vmatprep.subr.mxu0 %v1462
  %1502 = vmatpush1.msra.mxu0 %v1461
  %1503 = vmatprep.subr.mxu0 %v1466
  %1504 = vmatpush1.msra.mxu0 %v1465
  %1505 = vmatprep.subr.mxu0 %v1470
  %1506 = vmatpush1.msra.mxu0 %v1469
  %1507 = vmatprep.subr.mxu0 %v1474
  %1508 = vmatpush1.msra.mxu0 %v1473
  %1509 = vmatprep.subr.mxu0 0.0
  %1510 = vmatpush1.msra.mxu0 0.0
  %1511 = vmatprep.subr.mxu0 0.0
  %1512 = vmatpush1.msra.mxu0 0.0
  %1513 = vmatprep.subr.mxu0 0.0
  %1514 = vmatpush1.msra.mxu0 0.0
  %1515 = vmatprep.subr.mxu0 0.0
  %1516 = vmatpush1.msra.mxu0 0.0
  %1517 = vmatprep.subr.mxu0 0.0
  %1518 = vmatpush1.msra.mxu0 0.0
  %1519 = vmatprep.subr.mxu0 0.0
  %1520 = vmatpush1.msra.mxu0 0.0
  %1521 = vmatprep.subr.mxu0 0.0
  %1522 = vmatpush1.msra.mxu0 0.0
  %1523 = vmatprep.subr.mxu0 0.0
  %1524 = vmatpush1.msra.mxu0 0.0
  %1525 = vmatprep.subr.mxu0 0.0
  %1526 = vmatpush1.msra.mxu0 0.0
  %1527 = vmatprep.subr.mxu0 0.0
  %1528 = vmatpush1.msra.mxu0 0.0
  %1529 = vmatprep.subr.mxu0 0.0
  %1530 = vmatpush1.msra.mxu0 0.0
  %1531 = vmatprep.subr.mxu0 0.0
  %1532 = vmatpush1.msra.mxu0 0.0
  %1533 = vmatprep.subr.mxu0 0.0
  %1534 = vmatpush1.msra.mxu0 0.0
  %1535 = vmatprep.subr.mxu0 0.0
  %1536 = vmatpush1.msra.mxu0 0.0
  %1537 = vmatprep.subr.mxu0 0.0
  %1538 = vmatpush1.msra.mxu0 0.0
  %1539 = vmatprep.subr.mxu0 0.0
  %1540 = vmatpush1.msra.mxu0 0.0
  %1541 = vmatprep.mubr.f32.mxu0 0.0
  %1542 = vmatmul.mubr.f32.gmra.mrb[0].mxu0 %v1412
  %v1543 = vpop.f32.mrb[0].mxu0
  %v1544 = vadd.f32 0.0, %v1543
  %v1545 = vpop.f32.mrb[0].mxu0
  %v1546 = vadd.f32 0.0, %v1545
  %1547 = vdwg.mxu0
  %1548 = vmatprep.subr.mxu0 %v1416
  %1549 = vmatpush1.msra.mxu0 %v1415
  %1550 = vmatprep.subr.mxu0 %v1420
  %1551 = vmatpush1.msra.mxu0 %v1419
  %1552 = vmatprep.subr.mxu0 %v1424
  %1553 = vmatpush1.msra.mxu0 %v1423
  %1554 = vmatprep.subr.mxu0 %v1428
  %1555 = vmatpush1.msra.mxu0 %v1427
  %1556 = vmatprep.subr.mxu0 %v1432
  %1557 = vmatpush1.msra.mxu0 %v1431
  %1558 = vmatprep.subr.mxu0 %v1436
  %1559 = vmatpush1.msra.mxu0 %v1435
  %1560 = vmatprep.subr.mxu0 %v1440
  %1561 = vmatpush1.msra.mxu0 %v1439
  %1562 = vmatprep.subr.mxu0 %v1444
  %1563 = vmatpush1.msra.mxu0 %v1443
  %1564 = vmatprep.subr.mxu0 %v1448
  %1565 = vmatpush1.msra.mxu0 %v1447
  %1566 = vmatprep.subr.mxu0 %v1452
  %1567 = vmatpush1.msra.mxu0 %v1451
  %1568 = vmatprep.subr.mxu0 %v1456
  %1569 = vmatpush1.msra.mxu0 %v1455
  %1570 = vmatprep.subr.mxu0 %v1460
  %1571 = vmatpush1.msra.mxu0 %v1459
  %1572 = vmatprep.subr.mxu0 %v1464
  %1573 = vmatpush1.msra.mxu0 %v1463
  %1574 = vmatprep.subr.mxu0 %v1468
  %1575 = vmatpush1.msra.mxu0 %v1467
  %1576 = vmatprep.subr.mxu0 %v1472
  %1577 = vmatpush1.msra.mxu0 %v1471
  %1578 = vmatprep.subr.mxu0 %v1476
  %1579 = vmatpush1.msra.mxu0 %v1475
  %1580 = vmatprep.subr.mxu0 0.0
  %1581 = vmatpush1.msra.mxu0 0.0
  %1582 = vmatprep.subr.mxu0 0.0
  %1583 = vmatpush1.msra.mxu0 0.0
  %1584 = vmatprep.subr.mxu0 0.0
  %1585 = vmatpush1.msra.mxu0 0.0
  %1586 = vmatprep.subr.mxu0 0.0
  %1587 = vmatpush1.msra.mxu0 0.0
  %1588 = vmatprep.subr.mxu0 0.0
  %1589 = vmatpush1.msra.mxu0 0.0
  %1590 = vmatprep.subr.mxu0 0.0
  %1591 = vmatpush1.msra.mxu0 0.0
  %1592 = vmatprep.subr.mxu0 0.0
  %1593 = vmatpush1.msra.mxu0 0.0
  %1594 = vmatprep.subr.mxu0 0.0
  %1595 = vmatpush1.msra.mxu0 0.0
  %1596 = vmatprep.subr.mxu0 0.0
  %1597 = vmatpush1.msra.mxu0 0.0
  %1598 = vmatprep.subr.mxu0 0.0
  %1599 = vmatpush1.msra.mxu0 0.0
  %1600 = vmatprep.subr.mxu0 0.0
  %1601 = vmatpush1.msra.mxu0 0.0
  %1602 = vmatprep.subr.mxu0 0.0
  %1603 = vmatpush1.msra.mxu0 0.0
  %1604 = vmatprep.subr.mxu0 0.0
  %1605 = vmatpush1.msra.mxu0 0.0
  %1606 = vmatprep.subr.mxu0 0.0
  %1607 = vmatpush1.msra.mxu0 0.0
  %1608 = vmatprep.subr.mxu0 0.0
  %1609 = vmatpush1.msra.mxu0 0.0
  %1610 = vmatprep.subr.mxu0 0.0
  %1611 = vmatpush1.msra.mxu0 0.0
  %1612 = vmatprep.mubr.f32.mxu0 0.0
  %1613 = vmatmul.mubr.f32.gmra.mrb[0].mxu0 %v1412
  %v1614 = vpop.f32.mrb[0].mxu0
  %v1615 = vadd.f32 0.0, %v1614
  %v1616 = vpop.f32.mrb[0].mxu0
  %v1617 = vadd.f32 0.0, %v1616
  %1618 = vdwg.mxu0
  %v1623 = vcombine.low %v1544, %v1546
  %v1624 = vcombine.low %v1615, %v1617
  %v1626 = vunpack.c.l.s4 1983009808
  %v1627 = vunpack.c.0.s8 %v1626
  %v1628 = vlaneseq
  %v1629 = vshrl.u32 %v1628, 7
  %v1630 = vsub.s32 %v1627, %v1629
  %v1631 = vrot.slane %v1623, %v1630
  %v1633 = vunpack.c.l.s4 1983009808
  %v1634 = vunpack.c.0.s8 %v1633
  %v1635 = vlaneseq
  %v1636 = vshrl.u32 %v1635, 7
  %v1637 = vsub.s32 %v1634, %v1636
  %v1638 = vrot.slane %v1624, %v1637
  %v1639 = vcombine.low %v1631, %v1638
  %v1641 = vadd.f32 %v1411, %v1639
  %v1642 = vxor.u32 %v1641, 2147483648
  %v1643 = vmul.f32 %v1642, 1.442695
  %v1644 = vpow.pop %v1643
  %v1645 = vadd.f32 %v1644, 1.0
  %v1646 = vrcp.pop %v1645
  %v1647 = vmul.f32 1.0, %v1646
  %v1649 = vrot.slane %v1641, 2
  %v1651 = vxor.u32 %v1649, 2147483648
  %v1652 = vmul.f32 %v1651, 1.442695
  %v1653 = vpow.pop %v1652
  %v1654 = vadd.f32 %v1653, 1.0
  %v1655 = vrcp.pop %v1654
  %v1656 = vmul.f32 1.0, %v1655
  %v1657 = vrot.slane %v1641, 4
  %v1659 = vtanh.pop %v1657
  %v1660 = vrot.slane %v1641, 6
  %v1662 = vxor.u32 %v1660, 2147483648
  %v1663 = vmul.f32 %v1662, 1.442695
  %v1664 = vpow.pop %v1663
  %v1665 = vadd.f32 %v1664, 1.0
  %v1666 = vrcp.pop %v1665
  %v1667 = vmul.f32 1.0, %v1666
  %v1668 = vld [vmem:[#allocation3] sm:$0x3]
  %v1669 = vmul.f32 %v1656, %v1668
  %v1670 = vmul.f32 %v1647, %v1659
  %v1671 = vadd.f32 %v1669, %v1670
  %v1672 = vtanh.pop %v1671
  %v1673 = vmul.f32 %v1667, %v1672
  %1674 = vst [vmem:[#allocation3] sm:$0x3] %v1671
  %1675 = vst [vmem:[#allocation2] sm:$0x3] %v1673
  %v1678 = vunpack.c.l.s4 1983009808
  %v1679 = vunpack.c.0.s8 %v1678
  %v1680 = vlaneseq
  %v1681 = vshrl.u32 %v1680, 7
  %v1682 = vsub.s32 %v1679, %v1681
  %v1683 = vrot.slane %v1673, %v1682
  %1684 = vrot.lane.b32.xlu0 %v1683, 32
  %v1685 = vpop.permute.xlu0 %1684
  %s1687 = scalar_lea.vmem [#allocation4], 4
  %1688 = vst.msk [vmem:[%s1687] sm:$0x3] %vm295, %v1685
  %s1689 = scalar_lea.vmem %s0, 48
  %v1690 = vld [vmem:[%s1689] sm:$0xff]
  %v1691 = vld [vmem:[#allocation2] sm:$0x3]
  %v1692 = vld [vmem:[%s1] sm:$0xff]
  %v1693 = vld [vmem:[%s1 + $0x8] sm:$0xff]
  %v1694 = vld [vmem:[%s1 + $0x10] sm:$0xff]
  %v1695 = vld [vmem:[%s1 + $0x18] sm:$0xff]
  %v1696 = vld [vmem:[%s1 + $0x20] sm:$0xff]
  %v1697 = vld [vmem:[%s1 + $0x28] sm:$0xff]
  %v1698 = vld [vmem:[%s1 + $0x30] sm:$0xff]
  %v1699 = vld [vmem:[%s1 + $0x38] sm:$0xff]
  %v1700 = vld [vmem:[%s1 + $0x40] sm:$0xff]
  %v1701 = vld [vmem:[%s1 + $0x48] sm:$0xff]
  %v1702 = vld [vmem:[%s1 + $0x50] sm:$0xff]
  %v1703 = vld [vmem:[%s1 + $0x58] sm:$0xff]
  %v1704 = vld [vmem:[%s1 + $0x60] sm:$0xff]
  %v1705 = vld [vmem:[%s1 + $0x68] sm:$0xff]
  %v1706 = vld [vmem:[%s1 + $0x70] sm:$0xff]
  %v1707 = vld [vmem:[%s1 + $0x78] sm:$0xff]
  %v1708 = vld [vmem:[%s1 + $0x80] sm:$0xff]
  %v1709 = vld [vmem:[%s1 + $0x88] sm:$0xff]
  %v1710 = vld [vmem:[%s1 + $0x90] sm:$0xff]
  %v1711 = vld [vmem:[%s1 + $0x98] sm:$0xff]
  %v1712 = vld [vmem:[%s1 + $0xa0] sm:$0xff]
  %v1713 = vld [vmem:[%s1 + $0xa8] sm:$0xff]
  %v1714 = vld [vmem:[%s1 + $0xb0] sm:$0xff]
  %v1715 = vld [vmem:[%s1 + $0xb8] sm:$0xff]
  %v1716 = vld [vmem:[%s1 + $0xc0] sm:$0xff]
  %v1717 = vld [vmem:[%s1 + $0xc8] sm:$0xff]
  %v1718 = vld [vmem:[%s1 + $0xd0] sm:$0xff]
  %v1719 = vld [vmem:[%s1 + $0xd8] sm:$0xff]
  %v1720 = vld [vmem:[%s1 + $0xe0] sm:$0xff]
  %v1721 = vld [vmem:[%s1 + $0xe8] sm:$0xff]
  %v1722 = vld [vmem:[%s1 + $0xf0] sm:$0xff]
  %v1723 = vld [vmem:[%s1 + $0xf8] sm:$0xff]
  %v1724 = vld [vmem:[%s1 + $0x100] sm:$0xff]
  %v1725 = vld [vmem:[%s1 + $0x108] sm:$0xff]
  %v1726 = vld [vmem:[%s1 + $0x110] sm:$0xff]
  %v1727 = vld [vmem:[%s1 + $0x118] sm:$0xff]
  %v1728 = vld [vmem:[%s1 + $0x120] sm:$0xff]
  %v1729 = vld [vmem:[%s1 + $0x128] sm:$0xff]
  %v1730 = vld [vmem:[%s1 + $0x130] sm:$0xff]
  %v1731 = vld [vmem:[%s1 + $0x138] sm:$0xff]
  %v1732 = vld [vmem:[%s1 + $0x140] sm:$0xff]
  %v1733 = vld [vmem:[%s1 + $0x148] sm:$0xff]
  %v1734 = vld [vmem:[%s1 + $0x150] sm:$0xff]
  %v1735 = vld [vmem:[%s1 + $0x158] sm:$0xff]
  %v1736 = vld [vmem:[%s1 + $0x160] sm:$0xff]
  %v1737 = vld [vmem:[%s1 + $0x168] sm:$0xff]
  %v1738 = vld [vmem:[%s1 + $0x170] sm:$0xff]
  %v1739 = vld [vmem:[%s1 + $0x178] sm:$0xff]
  %v1740 = vld [vmem:[%s1 + $0x180] sm:$0xff]
  %v1741 = vld [vmem:[%s1 + $0x188] sm:$0xff]
  %v1742 = vld [vmem:[%s1 + $0x190] sm:$0xff]
  %v1743 = vld [vmem:[%s1 + $0x198] sm:$0xff]
  %v1744 = vld [vmem:[%s1 + $0x1a0] sm:$0xff]
  %v1745 = vld [vmem:[%s1 + $0x1a8] sm:$0xff]
  %v1746 = vld [vmem:[%s1 + $0x1b0] sm:$0xff]
  %v1747 = vld [vmem:[%s1 + $0x1b8] sm:$0xff]
  %v1748 = vld [vmem:[%s1 + $0x1c0] sm:$0xff]
  %v1749 = vld [vmem:[%s1 + $0x1c8] sm:$0xff]
  %v1750 = vld [vmem:[%s1 + $0x1d0] sm:$0xff]
  %v1751 = vld [vmem:[%s1 + $0x1d8] sm:$0xff]
  %v1752 = vld [vmem:[%s1 + $0x1e0] sm:$0xff]
  %v1753 = vld [vmem:[%s1 + $0x1e8] sm:$0xff]
  %v1754 = vld [vmem:[%s1 + $0x1f0] sm:$0xff]
  %v1755 = vld [vmem:[%s1 + $0x1f8] sm:$0xff]
  %1756 = vmatprep.subr.mxu0 %v1693
  %1757 = vmatpush1.msra.mxu0 %v1692
  %1758 = vmatprep.subr.mxu0 %v1697
  %1759 = vmatpush1.msra.mxu0 %v1696
  %1760 = vmatprep.subr.mxu0 %v1701
  %1761 = vmatpush1.msra.mxu0 %v1700
  %1762 = vmatprep.subr.mxu0 %v1705
  %1763 = vmatpush1.msra.mxu0 %v1704
  %1764 = vmatprep.subr.mxu0 %v1709
  %1765 = vmatpush1.msra.mxu0 %v1708
  %1766 = vmatprep.subr.mxu0 %v1713
  %1767 = vmatpush1.msra.mxu0 %v1712
  %1768 = vmatprep.subr.mxu0 %v1717
  %1769 = vmatpush1.msra.mxu0 %v1716
  %1770 = vmatprep.subr.mxu0 %v1721
  %1771 = vmatpush1.msra.mxu0 %v1720
  %1772 = vmatprep.subr.mxu0 %v1725
  %1773 = vmatpush1.msra.mxu0 %v1724
  %1774 = vmatprep.subr.mxu0 %v1729
  %1775 = vmatpush1.msra.mxu0 %v1728
  %1776 = vmatprep.subr.mxu0 %v1733
  %1777 = vmatpush1.msra.mxu0 %v1732
  %1778 = vmatprep.subr.mxu0 %v1737
  %1779 = vmatpush1.msra.mxu0 %v1736
  %1780 = vmatprep.subr.mxu0 %v1741
  %1781 = vmatpush1.msra.mxu0 %v1740
  %1782 = vmatprep.subr.mxu0 %v1745
  %1783 = vmatpush1.msra.mxu0 %v1744
  %1784 = vmatprep.subr.mxu0 %v1749
  %1785 = vmatpush1.msra.mxu0 %v1748
  %1786 = vmatprep.subr.mxu0 %v1753
  %1787 = vmatpush1.msra.mxu0 %v1752
  %1788 = vmatprep.subr.mxu0 0.0
  %1789 = vmatpush1.msra.mxu0 0.0
  %1790 = vmatprep.subr.mxu0 0.0
  %1791 = vmatpush1.msra.mxu0 0.0
  %1792 = vmatprep.subr.mxu0 0.0
  %1793 = vmatpush1.msra.mxu0 0.0
  %1794 = vmatprep.subr.mxu0 0.0
  %1795 = vmatpush1.msra.mxu0 0.0
  %1796 = vmatprep.subr.mxu0 0.0
  %1797 = vmatpush1.msra.mxu0 0.0
  %1798 = vmatprep.subr.mxu0 0.0
  %1799 = vmatpush1.msra.mxu0 0.0
  %1800 = vmatprep.subr.mxu0 0.0
  %1801 = vmatpush1.msra.mxu0 0.0
  %1802 = vmatprep.subr.mxu0 0.0
  %1803 = vmatpush1.msra.mxu0 0.0
  %1804 = vmatprep.subr.mxu0 0.0
  %1805 = vmatpush1.msra.mxu0 0.0
  %1806 = vmatprep.subr.mxu0 0.0
  %1807 = vmatpush1.msra.mxu0 0.0
  %1808 = vmatprep.subr.mxu0 0.0
  %1809 = vmatpush1.msra.mxu0 0.0
  %1810 = vmatprep.subr.mxu0 0.0
  %1811 = vmatpush1.msra.mxu0 0.0
  %1812 = vmatprep.subr.mxu0 0.0
  %1813 = vmatpush1.msra.mxu0 0.0
  %1814 = vmatprep.subr.mxu0 0.0
  %1815 = vmatpush1.msra.mxu0 0.0
  %1816 = vmatprep.subr.mxu0 0.0
  %1817 = vmatpush1.msra.mxu0 0.0
  %1818 = vmatprep.subr.mxu0 0.0
  %1819 = vmatpush1.msra.mxu0 0.0
  %1820 = vmatprep.mubr.f32.mxu0 0.0
  %1821 = vmatmul.mubr.f32.gmra.mrb[0].mxu0 %v1691
  %v1822 = vpop.f32.mrb[0].mxu0
  %v1823 = vadd.f32 0.0, %v1822
  %v1824 = vpop.f32.mrb[0].mxu0
  %v1825 = vadd.f32 0.0, %v1824
  %1826 = vdwg.mxu0
  %1827 = vmatprep.subr.mxu0 %v1695
  %1828 = vmatpush1.msra.mxu0 %v1694
  %1829 = vmatprep.subr.mxu0 %v1699
  %1830 = vmatpush1.msra.mxu0 %v1698
  %1831 = vmatprep.subr.mxu0 %v1703
  %1832 = vmatpush1.msra.mxu0 %v1702
  %1833 = vmatprep.subr.mxu0 %v1707
  %1834 = vmatpush1.msra.mxu0 %v1706
  %1835 = vmatprep.subr.mxu0 %v1711
  %1836 = vmatpush1.msra.mxu0 %v1710
  %1837 = vmatprep.subr.mxu0 %v1715
  %1838 = vmatpush1.msra.mxu0 %v1714
  %1839 = vmatprep.subr.mxu0 %v1719
  %1840 = vmatpush1.msra.mxu0 %v1718
  %1841 = vmatprep.subr.mxu0 %v1723
  %1842 = vmatpush1.msra.mxu0 %v1722
  %1843 = vmatprep.subr.mxu0 %v1727
  %1844 = vmatpush1.msra.mxu0 %v1726
  %1845 = vmatprep.subr.mxu0 %v1731
  %1846 = vmatpush1.msra.mxu0 %v1730
  %1847 = vmatprep.subr.mxu0 %v1735
  %1848 = vmatpush1.msra.mxu0 %v1734
  %1849 = vmatprep.subr.mxu0 %v1739
  %1850 = vmatpush1.msra.mxu0 %v1738
  %1851 = vmatprep.subr.mxu0 %v1743
  %1852 = vmatpush1.msra.mxu0 %v1742
  %1853 = vmatprep.subr.mxu0 %v1747
  %1854 = vmatpush1.msra.mxu0 %v1746
  %1855 = vmatprep.subr.mxu0 %v1751
  %1856 = vmatpush1.msra.mxu0 %v1750
  %1857 = vmatprep.subr.mxu0 %v1755
  %1858 = vmatpush1.msra.mxu0 %v1754
  %1859 = vmatprep.subr.mxu0 0.0
  %1860 = vmatpush1.msra.mxu0 0.0
  %1861 = vmatprep.subr.mxu0 0.0
  %1862 = vmatpush1.msra.mxu0 0.0
  %1863 = vmatprep.subr.mxu0 0.0
  %1864 = vmatpush1.msra.mxu0 0.0
  %1865 = vmatprep.subr.mxu0 0.0
  %1866 = vmatpush1.msra.mxu0 0.0
  %1867 = vmatprep.subr.mxu0 0.0
  %1868 = vmatpush1.msra.mxu0 0.0
  %1869 = vmatprep.subr.mxu0 0.0
  %1870 = vmatpush1.msra.mxu0 0.0
  %1871 = vmatprep.subr.mxu0 0.0
  %1872 = vmatpush1.msra.mxu0 0.0
  %1873 = vmatprep.subr.mxu0 0.0
  %1874 = vmatpush1.msra.mxu0 0.0
  %1875 = vmatprep.subr.mxu0 0.0
  %1876 = vmatpush1.msra.mxu0 0.0
  %1877 = vmatprep.subr.mxu0 0.0
  %1878 = vmatpush1.msra.mxu0 0.0
  %1879 = vmatprep.subr.mxu0 0.0
  %1880 = vmatpush1.msra.mxu0 0.0
  %1881 = vmatprep.subr.mxu0 0.0
  %1882 = vmatpush1.msra.mxu0 0.0
  %1883 = vmatprep.subr.mxu0 0.0
  %1884 = vmatpush1.msra.mxu0 0.0
  %1885 = vmatprep.subr.mxu0 0.0
  %1886 = vmatpush1.msra.mxu0 0.0
  %1887 = vmatprep.subr.mxu0 0.0
  %1888 = vmatpush1.msra.mxu0 0.0
  %1889 = vmatprep.subr.mxu0 0.0
  %1890 = vmatpush1.msra.mxu0 0.0
  %1891 = vmatprep.mubr.f32.mxu0 0.0
  %1892 = vmatmul.mubr.f32.gmra.mrb[0].mxu0 %v1691
  %v1893 = vpop.f32.mrb[0].mxu0
  %v1894 = vadd.f32 0.0, %v1893
  %v1895 = vpop.f32.mrb[0].mxu0
  %v1896 = vadd.f32 0.0, %v1895
  %1897 = vdwg.mxu0
  %v1902 = vcombine.low %v1823, %v1825
  %v1903 = vcombine.low %v1894, %v1896
  %v1905 = vunpack.c.l.s4 1983009808
  %v1906 = vunpack.c.0.s8 %v1905
  %v1907 = vlaneseq
  %v1908 = vshrl.u32 %v1907, 7
  %v1909 = vsub.s32 %v1906, %v1908
  %v1910 = vrot.slane %v1902, %v1909
  %v1912 = vunpack.c.l.s4 1983009808
  %v1913 = vunpack.c.0.s8 %v1912
  %v1914 = vlaneseq
  %v1915 = vshrl.u32 %v1914, 7
  %v1916 = vsub.s32 %v1913, %v1915
  %v1917 = vrot.slane %v1903, %v1916
  %v1918 = vcombine.low %v1910, %v1917
  %v1920 = vadd.f32 %v1690, %v1918
  %v1921 = vxor.u32 %v1920, 2147483648
  %v1922 = vmul.f32 %v1921, 1.442695
  %v1923 = vpow.pop %v1922
  %v1924 = vadd.f32 %v1923, 1.0
  %v1925 = vrcp.pop %v1924
  %v1926 = vmul.f32 1.0, %v1925
  %v1928 = vrot.slane %v1920, 2
  %v1930 = vxor.u32 %v1928, 2147483648
  %v1931 = vmul.f32 %v1930, 1.442695
  %v1932 = vpow.pop %v1931
  %v1933 = vadd.f32 %v1932, 1.0
  %v1934 = vrcp.pop %v1933
  %v1935 = vmul.f32 1.0, %v1934
  %v1936 = vrot.slane %v1920, 4
  %v1938 = vtanh.pop %v1936
  %v1939 = vrot.slane %v1920, 6
  %v1941 = vxor.u32 %v1939, 2147483648
  %v1942 = vmul.f32 %v1941, 1.442695
  %v1943 = vpow.pop %v1942
  %v1944 = vadd.f32 %v1943, 1.0
  %v1945 = vrcp.pop %v1944
  %v1946 = vmul.f32 1.0, %v1945
  %v1947 = vld [vmem:[#allocation3] sm:$0x3]
  %v1948 = vmul.f32 %v1935, %v1947
  %v1949 = vmul.f32 %v1926, %v1938
  %v1950 = vadd.f32 %v1948, %v1949
  %v1951 = vtanh.pop %v1950
  %v1952 = vmul.f32 %v1946, %v1951
  %1953 = vst [vmem:[#allocation3] sm:$0x3] %v1950
  %1954 = vst [vmem:[#allocation2] sm:$0x3] %v1952
  %v1957 = vunpack.c.l.s4 1983009808
  %v1958 = vunpack.c.0.s8 %v1957
  %v1959 = vlaneseq
  %v1960 = vshrl.u32 %v1959, 7
  %v1961 = vsub.s32 %v1958, %v1960
  %v1962 = vrot.slane %v1952, %v1961
  %1963 = vrot.lane.b32.xlu0 %v1962, 32
  %v1964 = vpop.permute.xlu0 %1963
  %s1966 = scalar_lea.vmem [#allocation4], 6
  %1967 = vst.msk [vmem:[%s1966] sm:$0x3] %vm295, %v1964
  %s1968 = scalar_lea.vmem %s0, 56
  %v1969 = vld [vmem:[%s1968] sm:$0xff]
  %v1970 = vld [vmem:[#allocation2] sm:$0x3]
  %v1971 = vld [vmem:[%s1] sm:$0xff]
  %v1972 = vld [vmem:[%s1 + $0x8] sm:$0xff]
  %v1973 = vld [vmem:[%s1 + $0x10] sm:$0xff]
  %v1974 = vld [vmem:[%s1 + $0x18] sm:$0xff]
  %v1975 = vld [vmem:[%s1 + $0x20] sm:$0xff]
  %v1976 = vld [vmem:[%s1 + $0x28] sm:$0xff]
  %v1977 = vld [vmem:[%s1 + $0x30] sm:$0xff]
  %v1978 = vld [vmem:[%s1 + $0x38] sm:$0xff]
  %v1979 = vld [vmem:[%s1 + $0x40] sm:$0xff]
  %v1980 = vld [vmem:[%s1 + $0x48] sm:$0xff]
  %v1981 = vld [vmem:[%s1 + $0x50] sm:$0xff]
  %v1982 = vld [vmem:[%s1 + $0x58] sm:$0xff]
  %v1983 = vld [vmem:[%s1 + $0x60] sm:$0xff]
  %v1984 = vld [vmem:[%s1 + $0x68] sm:$0xff]
  %v1985 = vld [vmem:[%s1 + $0x70] sm:$0xff]
  %v1986 = vld [vmem:[%s1 + $0x78] sm:$0xff]
  %v1987 = vld [vmem:[%s1 + $0x80] sm:$0xff]
  %v1988 = vld [vmem:[%s1 + $0x88] sm:$0xff]
  %v1989 = vld [vmem:[%s1 + $0x90] sm:$0xff]
  %v1990 = vld [vmem:[%s1 + $0x98] sm:$0xff]
  %v1991 = vld [vmem:[%s1 + $0xa0] sm:$0xff]
  %v1992 = vld [vmem:[%s1 + $0xa8] sm:$0xff]
  %v1993 = vld [vmem:[%s1 + $0xb0] sm:$0xff]
  %v1994 = vld [vmem:[%s1 + $0xb8] sm:$0xff]
  %v1995 = vld [vmem:[%s1 + $0xc0] sm:$0xff]
  %v1996 = vld [vmem:[%s1 + $0xc8] sm:$0xff]
  %v1997 = vld [vmem:[%s1 + $0xd0] sm:$0xff]
  %v1998 = vld [vmem:[%s1 + $0xd8] sm:$0xff]
  %v1999 = vld [vmem:[%s1 + $0xe0] sm:$0xff]
  %v2000 = vld [vmem:[%s1 + $0xe8] sm:$0xff]
  %v2001 = vld [vmem:[%s1 + $0xf0] sm:$0xff]
  %v2002 = vld [vmem:[%s1 + $0xf8] sm:$0xff]
  %v2003 = vld [vmem:[%s1 + $0x100] sm:$0xff]
  %v2004 = vld [vmem:[%s1 + $0x108] sm:$0xff]
  %v2005 = vld [vmem:[%s1 + $0x110] sm:$0xff]
  %v2006 = vld [vmem:[%s1 + $0x118] sm:$0xff]
  %v2007 = vld [vmem:[%s1 + $0x120] sm:$0xff]
  %v2008 = vld [vmem:[%s1 + $0x128] sm:$0xff]
  %v2009 = vld [vmem:[%s1 + $0x130] sm:$0xff]
  %v2010 = vld [vmem:[%s1 + $0x138] sm:$0xff]
  %v2011 = vld [vmem:[%s1 + $0x140] sm:$0xff]
  %v2012 = vld [vmem:[%s1 + $0x148] sm:$0xff]
  %v2013 = vld [vmem:[%s1 + $0x150] sm:$0xff]
  %v2014 = vld [vmem:[%s1 + $0x158] sm:$0xff]
  %v2015 = vld [vmem:[%s1 + $0x160] sm:$0xff]
  %v2016 = vld [vmem:[%s1 + $0x168] sm:$0xff]
  %v2017 = vld [vmem:[%s1 + $0x170] sm:$0xff]
  %v2018 = vld [vmem:[%s1 + $0x178] sm:$0xff]
  %v2019 = vld [vmem:[%s1 + $0x180] sm:$0xff]
  %v2020 = vld [vmem:[%s1 + $0x188] sm:$0xff]
  %v2021 = vld [vmem:[%s1 + $0x190] sm:$0xff]
  %v2022 = vld [vmem:[%s1 + $0x198] sm:$0xff]
  %v2023 = vld [vmem:[%s1 + $0x1a0] sm:$0xff]
  %v2024 = vld [vmem:[%s1 + $0x1a8] sm:$0xff]
  %v2025 = vld [vmem:[%s1 + $0x1b0] sm:$0xff]
  %v2026 = vld [vmem:[%s1 + $0x1b8] sm:$0xff]
  %v2027 = vld [vmem:[%s1 + $0x1c0] sm:$0xff]
  %v2028 = vld [vmem:[%s1 + $0x1c8] sm:$0xff]
  %v2029 = vld [vmem:[%s1 + $0x1d0] sm:$0xff]
  %v2030 = vld [vmem:[%s1 + $0x1d8] sm:$0xff]
  %v2031 = vld [vmem:[%s1 + $0x1e0] sm:$0xff]
  %v2032 = vld [vmem:[%s1 + $0x1e8] sm:$0xff]
  %v2033 = vld [vmem:[%s1 + $0x1f0] sm:$0xff]
  %v2034 = vld [vmem:[%s1 + $0x1f8] sm:$0xff]
  %2035 = vmatprep.subr.mxu0 %v1972
  %2036 = vmatpush1.msra.mxu0 %v1971
  %2037 = vmatprep.subr.mxu0 %v1976
  %2038 = vmatpush1.msra.mxu0 %v1975
  %2039 = vmatprep.subr.mxu0 %v1980
  %2040 = vmatpush1.msra.mxu0 %v1979
  %2041 = vmatprep.subr.mxu0 %v1984
  %2042 = vmatpush1.msra.mxu0 %v1983
  %2043 = vmatprep.subr.mxu0 %v1988
  %2044 = vmatpush1.msra.mxu0 %v1987
  %2045 = vmatprep.subr.mxu0 %v1992
  %2046 = vmatpush1.msra.mxu0 %v1991
  %2047 = vmatprep.subr.mxu0 %v1996
  %2048 = vmatpush1.msra.mxu0 %v1995
  %2049 = vmatprep.subr.mxu0 %v2000
  %2050 = vmatpush1.msra.mxu0 %v1999
  %2051 = vmatprep.subr.mxu0 %v2004
  %2052 = vmatpush1.msra.mxu0 %v2003
  %2053 = vmatprep.subr.mxu0 %v2008
  %2054 = vmatpush1.msra.mxu0 %v2007
  %2055 = vmatprep.subr.mxu0 %v2012
  %2056 = vmatpush1.msra.mxu0 %v2011
  %2057 = vmatprep.subr.mxu0 %v2016
  %2058 = vmatpush1.msra.mxu0 %v2015
  %2059 = vmatprep.subr.mxu0 %v2020
  %2060 = vmatpush1.msra.mxu0 %v2019
  %2061 = vmatprep.subr.mxu0 %v2024
  %2062 = vmatpush1.msra.mxu0 %v2023
  %2063 = vmatprep.subr.mxu0 %v2028
  %2064 = vmatpush1.msra.mxu0 %v2027
  %2065 = vmatprep.subr.mxu0 %v2032
  %2066 = vmatpush1.msra.mxu0 %v2031
  %2067 = vmatprep.subr.mxu0 0.0
  %2068 = vmatpush1.msra.mxu0 0.0
  %2069 = vmatprep.subr.mxu0 0.0
  %2070 = vmatpush1.msra.mxu0 0.0
  %2071 = vmatprep.subr.mxu0 0.0
  %2072 = vmatpush1.msra.mxu0 0.0
  %2073 = vmatprep.subr.mxu0 0.0
  %2074 = vmatpush1.msra.mxu0 0.0
  %2075 = vmatprep.subr.mxu0 0.0
  %2076 = vmatpush1.msra.mxu0 0.0
  %2077 = vmatprep.subr.mxu0 0.0
  %2078 = vmatpush1.msra.mxu0 0.0
  %2079 = vmatprep.subr.mxu0 0.0
  %2080 = vmatpush1.msra.mxu0 0.0
  %2081 = vmatprep.subr.mxu0 0.0
  %2082 = vmatpush1.msra.mxu0 0.0
  %2083 = vmatprep.subr.mxu0 0.0
  %2084 = vmatpush1.msra.mxu0 0.0
  %2085 = vmatprep.subr.mxu0 0.0
  %2086 = vmatpush1.msra.mxu0 0.0
  %2087 = vmatprep.subr.mxu0 0.0
  %2088 = vmatpush1.msra.mxu0 0.0
  %2089 = vmatprep.subr.mxu0 0.0
  %2090 = vmatpush1.msra.mxu0 0.0
  %2091 = vmatprep.subr.mxu0 0.0
  %2092 = vmatpush1.msra.mxu0 0.0
  %2093 = vmatprep.subr.mxu0 0.0
  %2094 = vmatpush1.msra.mxu0 0.0
  %2095 = vmatprep.subr.mxu0 0.0
  %2096 = vmatpush1.msra.mxu0 0.0
  %2097 = vmatprep.subr.mxu0 0.0
  %2098 = vmatpush1.msra.mxu0 0.0
  %2099 = vmatprep.mubr.f32.mxu0 0.0
  %2100 = vmatmul.mubr.f32.gmra.mrb[0].mxu0 %v1970
  %v2101 = vpop.f32.mrb[0].mxu0
  %v2102 = vadd.f32 0.0, %v2101
  %v2103 = vpop.f32.mrb[0].mxu0
  %v2104 = vadd.f32 0.0, %v2103
  %2105 = vdwg.mxu0
  %2106 = vmatprep.subr.mxu0 %v1974
  %2107 = vmatpush1.msra.mxu0 %v1973
  %2108 = vmatprep.subr.mxu0 %v1978
  %2109 = vmatpush1.msra.mxu0 %v1977
  %2110 = vmatprep.subr.mxu0 %v1982
  %2111 = vmatpush1.msra.mxu0 %v1981
  %2112 = vmatprep.subr.mxu0 %v1986
  %2113 = vmatpush1.msra.mxu0 %v1985
  %2114 = vmatprep.subr.mxu0 %v1990
  %2115 = vmatpush1.msra.mxu0 %v1989
  %2116 = vmatprep.subr.mxu0 %v1994
  %2117 = vmatpush1.msra.mxu0 %v1993
  %2118 = vmatprep.subr.mxu0 %v1998
  %2119 = vmatpush1.msra.mxu0 %v1997
  %2120 = vmatprep.subr.mxu0 %v2002
  %2121 = vmatpush1.msra.mxu0 %v2001
  %2122 = vmatprep.subr.mxu0 %v2006
  %2123 = vmatpush1.msra.mxu0 %v2005
  %2124 = vmatprep.subr.mxu0 %v2010
  %2125 = vmatpush1.msra.mxu0 %v2009
  %2126 = vmatprep.subr.mxu0 %v2014
  %2127 = vmatpush1.msra.mxu0 %v2013
  %2128 = vmatprep.subr.mxu0 %v2018
  %2129 = vmatpush1.msra.mxu0 %v2017
  %2130 = vmatprep.subr.mxu0 %v2022
  %2131 = vmatpush1.msra.mxu0 %v2021
  %2132 = vmatprep.subr.mxu0 %v2026
  %2133 = vmatpush1.msra.mxu0 %v2025
  %2134 = vmatprep.subr.mxu0 %v2030
  %2135 = vmatpush1.msra.mxu0 %v2029
  %2136 = vmatprep.subr.mxu0 %v2034
  %2137 = vmatpush1.msra.mxu0 %v2033
  %2138 = vmatprep.subr.mxu0 0.0
  %2139 = vmatpush1.msra.mxu0 0.0
  %2140 = vmatprep.subr.mxu0 0.0
  %2141 = vmatpush1.msra.mxu0 0.0
  %2142 = vmatprep.subr.mxu0 0.0
  %2143 = vmatpush1.msra.mxu0 0.0
  %2144 = vmatprep.subr.mxu0 0.0
  %2145 = vmatpush1.msra.mxu0 0.0
  %2146 = vmatprep.subr.mxu0 0.0
  %2147 = vmatpush1.msra.mxu0 0.0
  %2148 = vmatprep.subr.mxu0 0.0
  %2149 = vmatpush1.msra.mxu0 0.0
  %2150 = vmatprep.subr.mxu0 0.0
  %2151 = vmatpush1.msra.mxu0 0.0
  %2152 = vmatprep.subr.mxu0 0.0
  %2153 = vmatpush1.msra.mxu0 0.0
  %2154 = vmatprep.subr.mxu0 0.0
  %2155 = vmatpush1.msra.mxu0 0.0
  %2156 = vmatprep.subr.mxu0 0.0
  %2157 = vmatpush1.msra.mxu0 0.0
  %2158 = vmatprep.subr.mxu0 0.0
  %2159 = vmatpush1.msra.mxu0 0.0
  %2160 = vmatprep.subr.mxu0 0.0
  %2161 = vmatpush1.msra.mxu0 0.0
  %2162 = vmatprep.subr.mxu0 0.0
  %2163 = vmatpush1.msra.mxu0 0.0
  %2164 = vmatprep.subr.mxu0 0.0
  %2165 = vmatpush1.msra.mxu0 0.0
  %2166 = vmatprep.subr.mxu0 0.0
  %2167 = vmatpush1.msra.mxu0 0.0
  %2168 = vmatprep.subr.mxu0 0.0
  %2169 = vmatpush1.msra.mxu0 0.0
  %2170 = vmatprep.mubr.f32.mxu0 0.0
  %2171 = vmatmul.mubr.f32.gmra.mrb[0].mxu0 %v1970
  %v2172 = vpop.f32.mrb[0].mxu0
  %v2173 = vadd.f32 0.0, %v2172
  %v2174 = vpop.f32.mrb[0].mxu0
  %v2175 = vadd.f32 0.0, %v2174
  %2176 = vdwg.mxu0
  %v2181 = vcombine.low %v2102, %v2104
  %v2182 = vcombine.low %v2173, %v2175
  %v2184 = vunpack.c.l.s4 1983009808
  %v2185 = vunpack.c.0.s8 %v2184
  %v2186 = vlaneseq
  %v2187 = vshrl.u32 %v2186, 7
  %v2188 = vsub.s32 %v2185, %v2187
  %v2189 = vrot.slane %v2181, %v2188
  %v2191 = vunpack.c.l.s4 1983009808
  %v2192 = vunpack.c.0.s8 %v2191
  %v2193 = vlaneseq
  %v2194 = vshrl.u32 %v2193, 7
  %v2195 = vsub.s32 %v2192, %v2194
  %v2196 = vrot.slane %v2182, %v2195
  %v2197 = vcombine.low %v2189, %v2196
  %v2199 = vadd.f32 %v1969, %v2197
  %v2200 = vxor.u32 %v2199, 2147483648
  %v2201 = vmul.f32 %v2200, 1.442695
  %v2202 = vpow.pop %v2201
  %v2203 = vadd.f32 %v2202, 1.0
  %v2204 = vrcp.pop %v2203
  %v2205 = vmul.f32 1.0, %v2204
  %v2207 = vrot.slane %v2199, 2
  %v2209 = vxor.u32 %v2207, 2147483648
  %v2210 = vmul.f32 %v2209, 1.442695
  %v2211 = vpow.pop %v2210
  %v2212 = vadd.f32 %v2211, 1.0
  %v2213 = vrcp.pop %v2212
  %v2214 = vmul.f32 1.0, %v2213
  %v2215 = vrot.slane %v2199, 4
  %v2217 = vtanh.pop %v2215
  %v2218 = vrot.slane %v2199, 6
  %v2220 = vxor.u32 %v2218, 2147483648
  %v2221 = vmul.f32 %v2220, 1.442695
  %v2222 = vpow.pop %v2221
  %v2223 = vadd.f32 %v2222, 1.0
  %v2224 = vrcp.pop %v2223
  %v2225 = vmul.f32 1.0, %v2224
  %v2226 = vld [vmem:[#allocation3] sm:$0x3]
  %v2227 = vmul.f32 %v2214, %v2226
  %v2228 = vmul.f32 %v2205, %v2217
  %v2229 = vadd.f32 %v2227, %v2228
  %v2230 = vtanh.pop %v2229
  %v2231 = vmul.f32 %v2225, %v2230
  %2232 = vst [vmem:[#allocation3] sm:$0x3] %v2229
  %2233 = vst [vmem:[#allocation2] sm:$0x3] %v2231
  %v2236 = vunpack.c.l.s4 1983009808
  %v2237 = vunpack.c.0.s8 %v2236
  %v2238 = vlaneseq
  %v2239 = vshrl.u32 %v2238, 7
  %v2240 = vsub.s32 %v2237, %v2239
  %v2241 = vrot.slane %v2231, %v2240
  %2242 = vrot.lane.b32.xlu0 %v2241, 32
  %v2243 = vpop.permute.xlu0 %2242
  %s2245 = scalar_lea.vmem [#allocation4], 8
  %2246 = vst.msk [vmem:[%s2245] sm:$0x3] %vm295, %v2243
  %v2247 = vld [vmem:[%s1968] sm:$0xff]
  %v2248 = vld [vmem:[#allocation2] sm:$0x3]
  %v2249 = vld [vmem:[%s1] sm:$0xff]
  %v2250 = vld [vmem:[%s1 + $0x8] sm:$0xff]
  %v2251 = vld [vmem:[%s1 + $0x10] sm:$0xff]
  %v2252 = vld [vmem:[%s1 + $0x18] sm:$0xff]
  %v2253 = vld [vmem:[%s1 + $0x20] sm:$0xff]
  %v2254 = vld [vmem:[%s1 + $0x28] sm:$0xff]
  %v2255 = vld [vmem:[%s1 + $0x30] sm:$0xff]
  %v2256 = vld [vmem:[%s1 + $0x38] sm:$0xff]
  %v2257 = vld [vmem:[%s1 + $0x40] sm:$0xff]
  %v2258 = vld [vmem:[%s1 + $0x48] sm:$0xff]
  %v2259 = vld [vmem:[%s1 + $0x50] sm:$0xff]
  %v2260 = vld [vmem:[%s1 + $0x58] sm:$0xff]
  %v2261 = vld [vmem:[%s1 + $0x60] sm:$0xff]
  %v2262 = vld [vmem:[%s1 + $0x68] sm:$0xff]
  %v2263 = vld [vmem:[%s1 + $0x70] sm:$0xff]
  %v2264 = vld [vmem:[%s1 + $0x78] sm:$0xff]
  %v2265 = vld [vmem:[%s1 + $0x80] sm:$0xff]
  %v2266 = vld [vmem:[%s1 + $0x88] sm:$0xff]
  %v2267 = vld [vmem:[%s1 + $0x90] sm:$0xff]
  %v2268 = vld [vmem:[%s1 + $0x98] sm:$0xff]
  %v2269 = vld [vmem:[%s1 + $0xa0] sm:$0xff]
  %v2270 = vld [vmem:[%s1 + $0xa8] sm:$0xff]
  %v2271 = vld [vmem:[%s1 + $0xb0] sm:$0xff]
  %v2272 = vld [vmem:[%s1 + $0xb8] sm:$0xff]
  %v2273 = vld [vmem:[%s1 + $0xc0] sm:$0xff]
  %v2274 = vld [vmem:[%s1 + $0xc8] sm:$0xff]
  %v2275 = vld [vmem:[%s1 + $0xd0] sm:$0xff]
  %v2276 = vld [vmem:[%s1 + $0xd8] sm:$0xff]
  %v2277 = vld [vmem:[%s1 + $0xe0] sm:$0xff]
  %v2278 = vld [vmem:[%s1 + $0xe8] sm:$0xff]
  %v2279 = vld [vmem:[%s1 + $0xf0] sm:$0xff]
  %v2280 = vld [vmem:[%s1 + $0xf8] sm:$0xff]
  %v2281 = vld [vmem:[%s1 + $0x100] sm:$0xff]
  %v2282 = vld [vmem:[%s1 + $0x108] sm:$0xff]
  %v2283 = vld [vmem:[%s1 + $0x110] sm:$0xff]
  %v2284 = vld [vmem:[%s1 + $0x118] sm:$0xff]
  %v2285 = vld [vmem:[%s1 + $0x120] sm:$0xff]
  %v2286 = vld [vmem:[%s1 + $0x128] sm:$0xff]
  %v2287 = vld [vmem:[%s1 + $0x130] sm:$0xff]
  %v2288 = vld [vmem:[%s1 + $0x138] sm:$0xff]
  %v2289 = vld [vmem:[%s1 + $0x140] sm:$0xff]
  %v2290 = vld [vmem:[%s1 + $0x148] sm:$0xff]
  %v2291 = vld [vmem:[%s1 + $0x150] sm:$0xff]
  %v2292 = vld [vmem:[%s1 + $0x158] sm:$0xff]
  %v2293 = vld [vmem:[%s1 + $0x160] sm:$0xff]
  %v2294 = vld [vmem:[%s1 + $0x168] sm:$0xff]
  %v2295 = vld [vmem:[%s1 + $0x170] sm:$0xff]
  %v2296 = vld [vmem:[%s1 + $0x178] sm:$0xff]
  %v2297 = vld [vmem:[%s1 + $0x180] sm:$0xff]
  %v2298 = vld [vmem:[%s1 + $0x188] sm:$0xff]
  %v2299 = vld [vmem:[%s1 + $0x190] sm:$0xff]
  %v2300 = vld [vmem:[%s1 + $0x198] sm:$0xff]
  %v2301 = vld [vmem:[%s1 + $0x1a0] sm:$0xff]
  %v2302 = vld [vmem:[%s1 + $0x1a8] sm:$0xff]
  %v2303 = vld [vmem:[%s1 + $0x1b0] sm:$0xff]
  %v2304 = vld [vmem:[%s1 + $0x1b8] sm:$0xff]
  %v2305 = vld [vmem:[%s1 + $0x1c0] sm:$0xff]
  %v2306 = vld [vmem:[%s1 + $0x1c8] sm:$0xff]
  %v2307 = vld [vmem:[%s1 + $0x1d0] sm:$0xff]
  %v2308 = vld [vmem:[%s1 + $0x1d8] sm:$0xff]
  %v2309 = vld [vmem:[%s1 + $0x1e0] sm:$0xff]
  %v2310 = vld [vmem:[%s1 + $0x1e8] sm:$0xff]
  %v2311 = vld [vmem:[%s1 + $0x1f0] sm:$0xff]
  %v2312 = vld [vmem:[%s1 + $0x1f8] sm:$0xff]
  %2313 = vmatprep.subr.mxu0 %v2250
  %2314 = vmatpush1.msra.mxu0 %v2249
  %2315 = vmatprep.subr.mxu0 %v2254
  %2316 = vmatpush1.msra.mxu0 %v2253
  %2317 = vmatprep.subr.mxu0 %v2258
  %2318 = vmatpush1.msra.mxu0 %v2257
  %2319 = vmatprep.subr.mxu0 %v2262
  %2320 = vmatpush1.msra.mxu0 %v2261
  %2321 = vmatprep.subr.mxu0 %v2266
  %2322 = vmatpush1.msra.mxu0 %v2265
  %2323 = vmatprep.subr.mxu0 %v2270
  %2324 = vmatpush1.msra.mxu0 %v2269
  %2325 = vmatprep.subr.mxu0 %v2274
  %2326 = vmatpush1.msra.mxu0 %v2273
  %2327 = vmatprep.subr.mxu0 %v2278
  %2328 = vmatpush1.msra.mxu0 %v2277
  %2329 = vmatprep.subr.mxu0 %v2282
  %2330 = vmatpush1.msra.mxu0 %v2281
  %2331 = vmatprep.subr.mxu0 %v2286
  %2332 = vmatpush1.msra.mxu0 %v2285
  %2333 = vmatprep.subr.mxu0 %v2290
  %2334 = vmatpush1.msra.mxu0 %v2289
  %2335 = vmatprep.subr.mxu0 %v2294
  %2336 = vmatpush1.msra.mxu0 %v2293
  %2337 = vmatprep.subr.mxu0 %v2298
  %2338 = vmatpush1.msra.mxu0 %v2297
  %2339 = vmatprep.subr.mxu0 %v2302
  %2340 = vmatpush1.msra.mxu0 %v2301
  %2341 = vmatprep.subr.mxu0 %v2306
  %2342 = vmatpush1.msra.mxu0 %v2305
  %2343 = vmatprep.subr.mxu0 %v2310
  %2344 = vmatpush1.msra.mxu0 %v2309
  %2345 = vmatprep.subr.mxu0 0.0
  %2346 = vmatpush1.msra.mxu0 0.0
  %2347 = vmatprep.subr.mxu0 0.0
  %2348 = vmatpush1.msra.mxu0 0.0
  %2349 = vmatprep.subr.mxu0 0.0
  %2350 = vmatpush1.msra.mxu0 0.0
  %2351 = vmatprep.subr.mxu0 0.0
  %2352 = vmatpush1.msra.mxu0 0.0
  %2353 = vmatprep.subr.mxu0 0.0
  %2354 = vmatpush1.msra.mxu0 0.0
  %2355 = vmatprep.subr.mxu0 0.0
  %2356 = vmatpush1.msra.mxu0 0.0
  %2357 = vmatprep.subr.mxu0 0.0
  %2358 = vmatpush1.msra.mxu0 0.0
  %2359 = vmatprep.subr.mxu0 0.0
  %2360 = vmatpush1.msra.mxu0 0.0
  %2361 = vmatprep.subr.mxu0 0.0
  %2362 = vmatpush1.msra.mxu0 0.0
  %2363 = vmatprep.subr.mxu0 0.0
  %2364 = vmatpush1.msra.mxu0 0.0
  %2365 = vmatprep.subr.mxu0 0.0
  %2366 = vmatpush1.msra.mxu0 0.0
  %2367 = vmatprep.subr.mxu0 0.0
  %2368 = vmatpush1.msra.mxu0 0.0
  %2369 = vmatprep.subr.mxu0 0.0
  %2370 = vmatpush1.msra.mxu0 0.0
  %2371 = vmatprep.subr.mxu0 0.0
  %2372 = vmatpush1.msra.mxu0 0.0
  %2373 = vmatprep.subr.mxu0 0.0
  %2374 = vmatpush1.msra.mxu0 0.0
  %2375 = vmatprep.subr.mxu0 0.0
  %2376 = vmatpush1.msra.mxu0 0.0
  %2377 = vmatprep.mubr.f32.mxu0 0.0
  %2378 = vmatmul.mubr.f32.gmra.mrb[0].mxu0 %v2248
  %v2379 = vpop.f32.mrb[0].mxu0
  %v2380 = vadd.f32 0.0, %v2379
  %v2381 = vpop.f32.mrb[0].mxu0
  %v2382 = vadd.f32 0.0, %v2381
  %2383 = vdwg.mxu0
  %2384 = vmatprep.subr.mxu0 %v2252
  %2385 = vmatpush1.msra.mxu0 %v2251
  %2386 = vmatprep.subr.mxu0 %v2256
  %2387 = vmatpush1.msra.mxu0 %v2255
  %2388 = vmatprep.subr.mxu0 %v2260
  %2389 = vmatpush1.msra.mxu0 %v2259
  %2390 = vmatprep.subr.mxu0 %v2264
  %2391 = vmatpush1.msra.mxu0 %v2263
  %2392 = vmatprep.subr.mxu0 %v2268
  %2393 = vmatpush1.msra.mxu0 %v2267
  %2394 = vmatprep.subr.mxu0 %v2272
  %2395 = vmatpush1.msra.mxu0 %v2271
  %2396 = vmatprep.subr.mxu0 %v2276
  %2397 = vmatpush1.msra.mxu0 %v2275
  %2398 = vmatprep.subr.mxu0 %v2280
  %2399 = vmatpush1.msra.mxu0 %v2279
  %2400 = vmatprep.subr.mxu0 %v2284
  %2401 = vmatpush1.msra.mxu0 %v2283
  %2402 = vmatprep.subr.mxu0 %v2288
  %2403 = vmatpush1.msra.mxu0 %v2287
  %2404 = vmatprep.subr.mxu0 %v2292
  %2405 = vmatpush1.msra.mxu0 %v2291
  %2406 = vmatprep.subr.mxu0 %v2296
  %2407 = vmatpush1.msra.mxu0 %v2295
  %2408 = vmatprep.subr.mxu0 %v2300
  %2409 = vmatpush1.msra.mxu0 %v2299
  %2410 = vmatprep.subr.mxu0 %v2304
  %2411 = vmatpush1.msra.mxu0 %v2303
  %2412 = vmatprep.subr.mxu0 %v2308
  %2413 = vmatpush1.msra.mxu0 %v2307
  %2414 = vmatprep.subr.mxu0 %v2312
  %2415 = vmatpush1.msra.mxu0 %v2311
  %2416 = vmatprep.subr.mxu0 0.0
  %2417 = vmatpush1.msra.mxu0 0.0
  %2418 = vmatprep.subr.mxu0 0.0
  %2419 = vmatpush1.msra.mxu0 0.0
  %2420 = vmatprep.subr.mxu0 0.0
  %2421 = vmatpush1.msra.mxu0 0.0
  %2422 = vmatprep.subr.mxu0 0.0
  %2423 = vmatpush1.msra.mxu0 0.0
  %2424 = vmatprep.subr.mxu0 0.0
  %2425 = vmatpush1.msra.mxu0 0.0
  %2426 = vmatprep.subr.mxu0 0.0
  %2427 = vmatpush1.msra.mxu0 0.0
  %2428 = vmatprep.subr.mxu0 0.0
  %2429 = vmatpush1.msra.mxu0 0.0
  %2430 = vmatprep.subr.mxu0 0.0
  %2431 = vmatpush1.msra.mxu0 0.0
  %2432 = vmatprep.subr.mxu0 0.0
  %2433 = vmatpush1.msra.mxu0 0.0
  %2434 = vmatprep.subr.mxu0 0.0
  %2435 = vmatpush1.msra.mxu0 0.0
  %2436 = vmatprep.subr.mxu0 0.0
  %2437 = vmatpush1.msra.mxu0 0.0
  %2438 = vmatprep.subr.mxu0 0.0
  %2439 = vmatpush1.msra.mxu0 0.0
  %2440 = vmatprep.subr.mxu0 0.0
  %2441 = vmatpush1.msra.mxu0 0.0
  %2442 = vmatprep.subr.mxu0 0.0
  %2443 = vmatpush1.msra.mxu0 0.0
  %2444 = vmatprep.subr.mxu0 0.0
  %2445 = vmatpush1.msra.mxu0 0.0
  %2446 = vmatprep.subr.mxu0 0.0
  %2447 = vmatpush1.msra.mxu0 0.0
  %2448 = vmatprep.mubr.f32.mxu0 0.0
  %2449 = vmatmul.mubr.f32.gmra.mrb[0].mxu0 %v2248
  %v2450 = vpop.f32.mrb[0].mxu0
  %v2451 = vadd.f32 0.0, %v2450
  %v2452 = vpop.f32.mrb[0].mxu0
  %v2453 = vadd.f32 0.0, %v2452
  %2454 = vdwg.mxu0
  %v2459 = vcombine.low %v2380, %v2382
  %v2460 = vcombine.low %v2451, %v2453
  %v2462 = vunpack.c.l.s4 1983009808
  %v2463 = vunpack.c.0.s8 %v2462
  %v2464 = vlaneseq
  %v2465 = vshrl.u32 %v2464, 7
  %v2466 = vsub.s32 %v2463, %v2465
  %v2467 = vrot.slane %v2459, %v2466
  %v2469 = vunpack.c.l.s4 1983009808
  %v2470 = vunpack.c.0.s8 %v2469
  %v2471 = vlaneseq
  %v2472 = vshrl.u32 %v2471, 7
  %v2473 = vsub.s32 %v2470, %v2472
  %v2474 = vrot.slane %v2460, %v2473
  %v2475 = vcombine.low %v2467, %v2474
  %v2477 = vadd.f32 %v2247, %v2475
  %v2478 = vxor.u32 %v2477, 2147483648
  %v2479 = vmul.f32 %v2478, 1.442695
  %v2480 = vpow.pop %v2479
  %v2481 = vadd.f32 %v2480, 1.0
  %v2482 = vrcp.pop %v2481
  %v2483 = vmul.f32 1.0, %v2482
  %v2485 = vrot.slane %v2477, 2
  %v2487 = vxor.u32 %v2485, 2147483648
  %v2488 = vmul.f32 %v2487, 1.442695
  %v2489 = vpow.pop %v2488
  %v2490 = vadd.f32 %v2489, 1.0
  %v2491 = vrcp.pop %v2490
  %v2492 = vmul.f32 1.0, %v2491
  %v2493 = vrot.slane %v2477, 4
  %v2495 = vtanh.pop %v2493
  %v2496 = vrot.slane %v2477, 6
  %v2498 = vxor.u32 %v2496, 2147483648
  %v2499 = vmul.f32 %v2498, 1.442695
  %v2500 = vpow.pop %v2499
  %v2501 = vadd.f32 %v2500, 1.0
  %v2502 = vrcp.pop %v2501
  %v2503 = vmul.f32 1.0, %v2502
  %v2504 = vld [vmem:[#allocation3] sm:$0x3]
  %v2505 = vmul.f32 %v2492, %v2504
  %v2506 = vmul.f32 %v2483, %v2495
  %v2507 = vadd.f32 %v2505, %v2506
  %v2508 = vtanh.pop %v2507
  %v2509 = vmul.f32 %v2503, %v2508
  %2510 = vst [vmem:[#allocation3] sm:$0x3] %v2507
  %2511 = vst [vmem:[#allocation2] sm:$0x3] %v2509
  %v2514 = vunpack.c.l.s4 1983009808
  %v2515 = vunpack.c.0.s8 %v2514
  %v2516 = vlaneseq
  %v2517 = vshrl.u32 %v2516, 7
  %v2518 = vsub.s32 %v2515, %v2517
  %v2519 = vrot.slane %v2509, %v2518
  %2520 = vrot.lane.b32.xlu0 %v2519, 32
  %v2521 = vpop.permute.xlu0 %2520
  %s2523 = scalar_lea.vmem [#allocation4], 10
  %2524 = vst.msk [vmem:[%s2523] sm:$0x3] %vm295, %v2521
  %v2525 = vld [vmem:[%s1968] sm:$0xff]
  %v2526 = vld [vmem:[#allocation2] sm:$0x3]
  %v2527 = vld [vmem:[%s1] sm:$0xff]
  %v2528 = vld [vmem:[%s1 + $0x8] sm:$0xff]
  %v2529 = vld [vmem:[%s1 + $0x10] sm:$0xff]
  %v2530 = vld [vmem:[%s1 + $0x18] sm:$0xff]
  %v2531 = vld [vmem:[%s1 + $0x20] sm:$0xff]
  %v2532 = vld [vmem:[%s1 + $0x28] sm:$0xff]
  %v2533 = vld [vmem:[%s1 + $0x30] sm:$0xff]
  %v2534 = vld [vmem:[%s1 + $0x38] sm:$0xff]
  %v2535 = vld [vmem:[%s1 + $0x40] sm:$0xff]
  %v2536 = vld [vmem:[%s1 + $0x48] sm:$0xff]
  %v2537 = vld [vmem:[%s1 + $0x50] sm:$0xff]
  %v2538 = vld [vmem:[%s1 + $0x58] sm:$0xff]
  %v2539 = vld [vmem:[%s1 + $0x60] sm:$0xff]
  %v2540 = vld [vmem:[%s1 + $0x68] sm:$0xff]
  %v2541 = vld [vmem:[%s1 + $0x70] sm:$0xff]
  %v2542 = vld [vmem:[%s1 + $0x78] sm:$0xff]
  %v2543 = vld [vmem:[%s1 + $0x80] sm:$0xff]
  %v2544 = vld [vmem:[%s1 + $0x88] sm:$0xff]
  %v2545 = vld [vmem:[%s1 + $0x90] sm:$0xff]
  %v2546 = vld [vmem:[%s1 + $0x98] sm:$0xff]
  %v2547 = vld [vmem:[%s1 + $0xa0] sm:$0xff]
  %v2548 = vld [vmem:[%s1 + $0xa8] sm:$0xff]
  %v2549 = vld [vmem:[%s1 + $0xb0] sm:$0xff]
  %v2550 = vld [vmem:[%s1 + $0xb8] sm:$0xff]
  %v2551 = vld [vmem:[%s1 + $0xc0] sm:$0xff]
  %v2552 = vld [vmem:[%s1 + $0xc8] sm:$0xff]
  %v2553 = vld [vmem:[%s1 + $0xd0] sm:$0xff]
  %v2554 = vld [vmem:[%s1 + $0xd8] sm:$0xff]
  %v2555 = vld [vmem:[%s1 + $0xe0] sm:$0xff]
  %v2556 = vld [vmem:[%s1 + $0xe8] sm:$0xff]
  %v2557 = vld [vmem:[%s1 + $0xf0] sm:$0xff]
  %v2558 = vld [vmem:[%s1 + $0xf8] sm:$0xff]
  %v2559 = vld [vmem:[%s1 + $0x100] sm:$0xff]
  %v2560 = vld [vmem:[%s1 + $0x108] sm:$0xff]
  %v2561 = vld [vmem:[%s1 + $0x110] sm:$0xff]
  %v2562 = vld [vmem:[%s1 + $0x118] sm:$0xff]
  %v2563 = vld [vmem:[%s1 + $0x120] sm:$0xff]
  %v2564 = vld [vmem:[%s1 + $0x128] sm:$0xff]
  %v2565 = vld [vmem:[%s1 + $0x130] sm:$0xff]
  %v2566 = vld [vmem:[%s1 + $0x138] sm:$0xff]
  %v2567 = vld [vmem:[%s1 + $0x140] sm:$0xff]
  %v2568 = vld [vmem:[%s1 + $0x148] sm:$0xff]
  %v2569 = vld [vmem:[%s1 + $0x150] sm:$0xff]
  %v2570 = vld [vmem:[%s1 + $0x158] sm:$0xff]
  %v2571 = vld [vmem:[%s1 + $0x160] sm:$0xff]
  %v2572 = vld [vmem:[%s1 + $0x168] sm:$0xff]
  %v2573 = vld [vmem:[%s1 + $0x170] sm:$0xff]
  %v2574 = vld [vmem:[%s1 + $0x178] sm:$0xff]
  %v2575 = vld [vmem:[%s1 + $0x180] sm:$0xff]
  %v2576 = vld [vmem:[%s1 + $0x188] sm:$0xff]
  %v2577 = vld [vmem:[%s1 + $0x190] sm:$0xff]
  %v2578 = vld [vmem:[%s1 + $0x198] sm:$0xff]
  %v2579 = vld [vmem:[%s1 + $0x1a0] sm:$0xff]
  %v2580 = vld [vmem:[%s1 + $0x1a8] sm:$0xff]
  %v2581 = vld [vmem:[%s1 + $0x1b0] sm:$0xff]
  %v2582 = vld [vmem:[%s1 + $0x1b8] sm:$0xff]
  %v2583 = vld [vmem:[%s1 + $0x1c0] sm:$0xff]
  %v2584 = vld [vmem:[%s1 + $0x1c8] sm:$0xff]
  %v2585 = vld [vmem:[%s1 + $0x1d0] sm:$0xff]
  %v2586 = vld [vmem:[%s1 + $0x1d8] sm:$0xff]
  %v2587 = vld [vmem:[%s1 + $0x1e0] sm:$0xff]
  %v2588 = vld [vmem:[%s1 + $0x1e8] sm:$0xff]
  %v2589 = vld [vmem:[%s1 + $0x1f0] sm:$0xff]
  %v2590 = vld [vmem:[%s1 + $0x1f8] sm:$0xff]
  %2591 = vmatprep.subr.mxu0 %v2528
  %2592 = vmatpush1.msra.mxu0 %v2527
  %2593 = vmatprep.subr.mxu0 %v2532
  %2594 = vmatpush1.msra.mxu0 %v2531
  %2595 = vmatprep.subr.mxu0 %v2536
  %2596 = vmatpush1.msra.mxu0 %v2535
  %2597 = vmatprep.subr.mxu0 %v2540
  %2598 = vmatpush1.msra.mxu0 %v2539
  %2599 = vmatprep.subr.mxu0 %v2544
  %2600 = vmatpush1.msra.mxu0 %v2543
  %2601 = vmatprep.subr.mxu0 %v2548
  %2602 = vmatpush1.msra.mxu0 %v2547
  %2603 = vmatprep.subr.mxu0 %v2552
  %2604 = vmatpush1.msra.mxu0 %v2551
  %2605 = vmatprep.subr.mxu0 %v2556
  %2606 = vmatpush1.msra.mxu0 %v2555
  %2607 = vmatprep.subr.mxu0 %v2560
  %2608 = vmatpush1.msra.mxu0 %v2559
  %2609 = vmatprep.subr.mxu0 %v2564
  %2610 = vmatpush1.msra.mxu0 %v2563
  %2611 = vmatprep.subr.mxu0 %v2568
  %2612 = vmatpush1.msra.mxu0 %v2567
  %2613 = vmatprep.subr.mxu0 %v2572
  %2614 = vmatpush1.msra.mxu0 %v2571
  %2615 = vmatprep.subr.mxu0 %v2576
  %2616 = vmatpush1.msra.mxu0 %v2575
  %2617 = vmatprep.subr.mxu0 %v2580
  %2618 = vmatpush1.msra.mxu0 %v2579
  %2619 = vmatprep.subr.mxu0 %v2584
  %2620 = vmatpush1.msra.mxu0 %v2583
  %2621 = vmatprep.subr.mxu0 %v2588
  %2622 = vmatpush1.msra.mxu0 %v2587
  %2623 = vmatprep.subr.mxu0 0.0
  %2624 = vmatpush1.msra.mxu0 0.0
  %2625 = vmatprep.subr.mxu0 0.0
  %2626 = vmatpush1.msra.mxu0 0.0
  %2627 = vmatprep.subr.mxu0 0.0
  %2628 = vmatpush1.msra.mxu0 0.0
  %2629 = vmatprep.subr.mxu0 0.0
  %2630 = vmatpush1.msra.mxu0 0.0
  %2631 = vmatprep.subr.mxu0 0.0
  %2632 = vmatpush1.msra.mxu0 0.0
  %2633 = vmatprep.subr.mxu0 0.0
  %2634 = vmatpush1.msra.mxu0 0.0
  %2635 = vmatprep.subr.mxu0 0.0
  %2636 = vmatpush1.msra.mxu0 0.0
  %2637 = vmatprep.subr.mxu0 0.0
  %2638 = vmatpush1.msra.mxu0 0.0
  %2639 = vmatprep.subr.mxu0 0.0
  %2640 = vmatpush1.msra.mxu0 0.0
  %2641 = vmatprep.subr.mxu0 0.0
  %2642 = vmatpush1.msra.mxu0 0.0
  %2643 = vmatprep.subr.mxu0 0.0
  %2644 = vmatpush1.msra.mxu0 0.0
  %2645 = vmatprep.subr.mxu0 0.0
  %2646 = vmatpush1.msra.mxu0 0.0
  %2647 = vmatprep.subr.mxu0 0.0
  %2648 = vmatpush1.msra.mxu0 0.0
  %2649 = vmatprep.subr.mxu0 0.0
  %2650 = vmatpush1.msra.mxu0 0.0
  %2651 = vmatprep.subr.mxu0 0.0
  %2652 = vmatpush1.msra.mxu0 0.0
  %2653 = vmatprep.subr.mxu0 0.0
  %2654 = vmatpush1.msra.mxu0 0.0
  %2655 = vmatprep.mubr.f32.mxu0 0.0
  %2656 = vmatmul.mubr.f32.gmra.mrb[0].mxu0 %v2526
  %v2657 = vpop.f32.mrb[0].mxu0
  %v2658 = vadd.f32 0.0, %v2657
  %v2659 = vpop.f32.mrb[0].mxu0
  %v2660 = vadd.f32 0.0, %v2659
  %2661 = vdwg.mxu0
  %2662 = vmatprep.subr.mxu0 %v2530
  %2663 = vmatpush1.msra.mxu0 %v2529
  %2664 = vmatprep.subr.mxu0 %v2534
  %2665 = vmatpush1.msra.mxu0 %v2533
  %2666 = vmatprep.subr.mxu0 %v2538
  %2667 = vmatpush1.msra.mxu0 %v2537
  %2668 = vmatprep.subr.mxu0 %v2542
  %2669 = vmatpush1.msra.mxu0 %v2541
  %2670 = vmatprep.subr.mxu0 %v2546
  %2671 = vmatpush1.msra.mxu0 %v2545
  %2672 = vmatprep.subr.mxu0 %v2550
  %2673 = vmatpush1.msra.mxu0 %v2549
  %2674 = vmatprep.subr.mxu0 %v2554
  %2675 = vmatpush1.msra.mxu0 %v2553
  %2676 = vmatprep.subr.mxu0 %v2558
  %2677 = vmatpush1.msra.mxu0 %v2557
  %2678 = vmatprep.subr.mxu0 %v2562
  %2679 = vmatpush1.msra.mxu0 %v2561
  %2680 = vmatprep.subr.mxu0 %v2566
  %2681 = vmatpush1.msra.mxu0 %v2565
  %2682 = vmatprep.subr.mxu0 %v2570
  %2683 = vmatpush1.msra.mxu0 %v2569
  %2684 = vmatprep.subr.mxu0 %v2574
  %2685 = vmatpush1.msra.mxu0 %v2573
  %2686 = vmatprep.subr.mxu0 %v2578
  %2687 = vmatpush1.msra.mxu0 %v2577
  %2688 = vmatprep.subr.mxu0 %v2582
  %2689 = vmatpush1.msra.mxu0 %v2581
  %2690 = vmatprep.subr.mxu0 %v2586
  %2691 = vmatpush1.msra.mxu0 %v2585
  %2692 = vmatprep.subr.mxu0 %v2590
  %2693 = vmatpush1.msra.mxu0 %v2589
  %2694 = vmatprep.subr.mxu0 0.0
  %2695 = vmatpush1.msra.mxu0 0.0
  %2696 = vmatprep.subr.mxu0 0.0
  %2697 = vmatpush1.msra.mxu0 0.0
  %2698 = vmatprep.subr.mxu0 0.0
  %2699 = vmatpush1.msra.mxu0 0.0
  %2700 = vmatprep.subr.mxu0 0.0
  %2701 = vmatpush1.msra.mxu0 0.0
  %2702 = vmatprep.subr.mxu0 0.0
  %2703 = vmatpush1.msra.mxu0 0.0
  %2704 = vmatprep.subr.mxu0 0.0
  %2705 = vmatpush1.msra.mxu0 0.0
  %2706 = vmatprep.subr.mxu0 0.0
  %2707 = vmatpush1.msra.mxu0 0.0
  %2708 = vmatprep.subr.mxu0 0.0
  %2709 = vmatpush1.msra.mxu0 0.0
  %2710 = vmatprep.subr.mxu0 0.0
  %2711 = vmatpush1.msra.mxu0 0.0
  %2712 = vmatprep.subr.mxu0 0.0
  %2713 = vmatpush1.msra.mxu0 0.0
  %2714 = vmatprep.subr.mxu0 0.0
  %2715 = vmatpush1.msra.mxu0 0.0
  %2716 = vmatprep.subr.mxu0 0.0
  %2717 = vmatpush1.msra.mxu0 0.0
  %2718 = vmatprep.subr.mxu0 0.0
  %2719 = vmatpush1.msra.mxu0 0.0
  %2720 = vmatprep.subr.mxu0 0.0
  %2721 = vmatpush1.msra.mxu0 0.0
  %2722 = vmatprep.subr.mxu0 0.0
  %2723 = vmatpush1.msra.mxu0 0.0
  %2724 = vmatprep.subr.mxu0 0.0
  %2725 = vmatpush1.msra.mxu0 0.0
  %2726 = vmatprep.mubr.f32.mxu0 0.0
  %2727 = vmatmul.mubr.f32.gmra.mrb[0].mxu0 %v2526
  %v2728 = vpop.f32.mrb[0].mxu0
  %v2729 = vadd.f32 0.0, %v2728
  %v2730 = vpop.f32.mrb[0].mxu0
  %v2731 = vadd.f32 0.0, %v2730
  %2732 = vdwg.mxu0
  %v2737 = vcombine.low %v2658, %v2660
  %v2738 = vcombine.low %v2729, %v2731
  %v2740 = vunpack.c.l.s4 1983009808
  %v2741 = vunpack.c.0.s8 %v2740
  %v2742 = vlaneseq
  %v2743 = vshrl.u32 %v2742, 7
  %v2744 = vsub.s32 %v2741, %v2743
  %v2745 = vrot.slane %v2737, %v2744
  %v2747 = vunpack.c.l.s4 1983009808
  %v2748 = vunpack.c.0.s8 %v2747
  %v2749 = vlaneseq
  %v2750 = vshrl.u32 %v2749, 7
  %v2751 = vsub.s32 %v2748, %v2750
  %v2752 = vrot.slane %v2738, %v2751
  %v2753 = vcombine.low %v2745, %v2752
  %v2755 = vadd.f32 %v2525, %v2753
  %v2756 = vxor.u32 %v2755, 2147483648
  %v2757 = vmul.f32 %v2756, 1.442695
  %v2758 = vpow.pop %v2757
  %v2759 = vadd.f32 %v2758, 1.0
  %v2760 = vrcp.pop %v2759
  %v2761 = vmul.f32 1.0, %v2760
  %v2763 = vrot.slane %v2755, 2
  %v2765 = vxor.u32 %v2763, 2147483648
  %v2766 = vmul.f32 %v2765, 1.442695
  %v2767 = vpow.pop %v2766
  %v2768 = vadd.f32 %v2767, 1.0
  %v2769 = vrcp.pop %v2768
  %v2770 = vmul.f32 1.0, %v2769
  %v2771 = vrot.slane %v2755, 4
  %v2773 = vtanh.pop %v2771
  %v2774 = vrot.slane %v2755, 6
  %v2776 = vxor.u32 %v2774, 2147483648
  %v2777 = vmul.f32 %v2776, 1.442695
  %v2778 = vpow.pop %v2777
  %v2779 = vadd.f32 %v2778, 1.0
  %v2780 = vrcp.pop %v2779
  %v2781 = vmul.f32 1.0, %v2780
  %v2782 = vld [vmem:[#allocation3] sm:$0x3]
  %v2783 = vmul.f32 %v2770, %v2782
  %v2784 = vmul.f32 %v2761, %v2773
  %v2785 = vadd.f32 %v2783, %v2784
  %v2786 = vtanh.pop %v2785
  %v2787 = vmul.f32 %v2781, %v2786
  %2788 = vst [vmem:[#allocation3] sm:$0x3] %v2785
  %2789 = vst [vmem:[#allocation2] sm:$0x3] %v2787
  %v2792 = vunpack.c.l.s4 1983009808
  %v2793 = vunpack.c.0.s8 %v2792
  %v2794 = vlaneseq
  %v2795 = vshrl.u32 %v2794, 7
  %v2796 = vsub.s32 %v2793, %v2795
  %v2797 = vrot.slane %v2787, %v2796
  %2798 = vrot.lane.b32.xlu0 %v2797, 32
  %v2799 = vpop.permute.xlu0 %2798
  %s2801 = scalar_lea.vmem [#allocation4], 12
  %2802 = vst.msk [vmem:[%s2801] sm:$0x3] %vm295, %v2799
  %v2803 = vld [vmem:[%s1968] sm:$0xff]
  %v2804 = vld [vmem:[#allocation2] sm:$0x3]
  %v2805 = vld [vmem:[%s1] sm:$0xff]
  %v2806 = vld [vmem:[%s1 + $0x8] sm:$0xff]
  %v2807 = vld [vmem:[%s1 + $0x10] sm:$0xff]
  %v2808 = vld [vmem:[%s1 + $0x18] sm:$0xff]
  %v2809 = vld [vmem:[%s1 + $0x20] sm:$0xff]
  %v2810 = vld [vmem:[%s1 + $0x28] sm:$0xff]
  %v2811 = vld [vmem:[%s1 + $0x30] sm:$0xff]
  %v2812 = vld [vmem:[%s1 + $0x38] sm:$0xff]
  %v2813 = vld [vmem:[%s1 + $0x40] sm:$0xff]
  %v2814 = vld [vmem:[%s1 + $0x48] sm:$0xff]
  %v2815 = vld [vmem:[%s1 + $0x50] sm:$0xff]
  %v2816 = vld [vmem:[%s1 + $0x58] sm:$0xff]
  %v2817 = vld [vmem:[%s1 + $0x60] sm:$0xff]
  %v2818 = vld [vmem:[%s1 + $0x68] sm:$0xff]
  %v2819 = vld [vmem:[%s1 + $0x70] sm:$0xff]
  %v2820 = vld [vmem:[%s1 + $0x78] sm:$0xff]
  %v2821 = vld [vmem:[%s1 + $0x80] sm:$0xff]
  %v2822 = vld [vmem:[%s1 + $0x88] sm:$0xff]
  %v2823 = vld [vmem:[%s1 + $0x90] sm:$0xff]
  %v2824 = vld [vmem:[%s1 + $0x98] sm:$0xff]
  %v2825 = vld [vmem:[%s1 + $0xa0] sm:$0xff]
  %v2826 = vld [vmem:[%s1 + $0xa8] sm:$0xff]
  %v2827 = vld [vmem:[%s1 + $0xb0] sm:$0xff]
  %v2828 = vld [vmem:[%s1 + $0xb8] sm:$0xff]
  %v2829 = vld [vmem:[%s1 + $0xc0] sm:$0xff]
  %v2830 = vld [vmem:[%s1 + $0xc8] sm:$0xff]
  %v2831 = vld [vmem:[%s1 + $0xd0] sm:$0xff]
  %v2832 = vld [vmem:[%s1 + $0xd8] sm:$0xff]
  %v2833 = vld [vmem:[%s1 + $0xe0] sm:$0xff]
  %v2834 = vld [vmem:[%s1 + $0xe8] sm:$0xff]
  %v2835 = vld [vmem:[%s1 + $0xf0] sm:$0xff]
  %v2836 = vld [vmem:[%s1 + $0xf8] sm:$0xff]
  %v2837 = vld [vmem:[%s1 + $0x100] sm:$0xff]
  %v2838 = vld [vmem:[%s1 + $0x108] sm:$0xff]
  %v2839 = vld [vmem:[%s1 + $0x110] sm:$0xff]
  %v2840 = vld [vmem:[%s1 + $0x118] sm:$0xff]
  %v2841 = vld [vmem:[%s1 + $0x120] sm:$0xff]
  %v2842 = vld [vmem:[%s1 + $0x128] sm:$0xff]
  %v2843 = vld [vmem:[%s1 + $0x130] sm:$0xff]
  %v2844 = vld [vmem:[%s1 + $0x138] sm:$0xff]
  %v2845 = vld [vmem:[%s1 + $0x140] sm:$0xff]
  %v2846 = vld [vmem:[%s1 + $0x148] sm:$0xff]
  %v2847 = vld [vmem:[%s1 + $0x150] sm:$0xff]
  %v2848 = vld [vmem:[%s1 + $0x158] sm:$0xff]
  %v2849 = vld [vmem:[%s1 + $0x160] sm:$0xff]
  %v2850 = vld [vmem:[%s1 + $0x168] sm:$0xff]
  %v2851 = vld [vmem:[%s1 + $0x170] sm:$0xff]
  %v2852 = vld [vmem:[%s1 + $0x178] sm:$0xff]
  %v2853 = vld [vmem:[%s1 + $0x180] sm:$0xff]
  %v2854 = vld [vmem:[%s1 + $0x188] sm:$0xff]
  %v2855 = vld [vmem:[%s1 + $0x190] sm:$0xff]
  %v2856 = vld [vmem:[%s1 + $0x198] sm:$0xff]
  %v2857 = vld [vmem:[%s1 + $0x1a0] sm:$0xff]
  %v2858 = vld [vmem:[%s1 + $0x1a8] sm:$0xff]
  %v2859 = vld [vmem:[%s1 + $0x1b0] sm:$0xff]
  %v2860 = vld [vmem:[%s1 + $0x1b8] sm:$0xff]
  %v2861 = vld [vmem:[%s1 + $0x1c0] sm:$0xff]
  %v2862 = vld [vmem:[%s1 + $0x1c8] sm:$0xff]
  %v2863 = vld [vmem:[%s1 + $0x1d0] sm:$0xff]
  %v2864 = vld [vmem:[%s1 + $0x1d8] sm:$0xff]
  %v2865 = vld [vmem:[%s1 + $0x1e0] sm:$0xff]
  %v2866 = vld [vmem:[%s1 + $0x1e8] sm:$0xff]
  %v2867 = vld [vmem:[%s1 + $0x1f0] sm:$0xff]
  %v2868 = vld [vmem:[%s1 + $0x1f8] sm:$0xff]
  %2869 = vmatprep.subr.mxu0 %v2806
  %2870 = vmatpush1.msra.mxu0 %v2805
  %2871 = vmatprep.subr.mxu0 %v2810
  %2872 = vmatpush1.msra.mxu0 %v2809
  %2873 = vmatprep.subr.mxu0 %v2814
  %2874 = vmatpush1.msra.mxu0 %v2813
  %2875 = vmatprep.subr.mxu0 %v2818
  %2876 = vmatpush1.msra.mxu0 %v2817
  %2877 = vmatprep.subr.mxu0 %v2822
  %2878 = vmatpush1.msra.mxu0 %v2821
  %2879 = vmatprep.subr.mxu0 %v2826
  %2880 = vmatpush1.msra.mxu0 %v2825
  %2881 = vmatprep.subr.mxu0 %v2830
  %2882 = vmatpush1.msra.mxu0 %v2829
  %2883 = vmatprep.subr.mxu0 %v2834
  %2884 = vmatpush1.msra.mxu0 %v2833
  %2885 = vmatprep.subr.mxu0 %v2838
  %2886 = vmatpush1.msra.mxu0 %v2837
  %2887 = vmatprep.subr.mxu0 %v2842
  %2888 = vmatpush1.msra.mxu0 %v2841
  %2889 = vmatprep.subr.mxu0 %v2846
  %2890 = vmatpush1.msra.mxu0 %v2845
  %2891 = vmatprep.subr.mxu0 %v2850
  %2892 = vmatpush1.msra.mxu0 %v2849
  %2893 = vmatprep.subr.mxu0 %v2854
  %2894 = vmatpush1.msra.mxu0 %v2853
  %2895 = vmatprep.subr.mxu0 %v2858
  %2896 = vmatpush1.msra.mxu0 %v2857
  %2897 = vmatprep.subr.mxu0 %v2862
  %2898 = vmatpush1.msra.mxu0 %v2861
  %2899 = vmatprep.subr.mxu0 %v2866
  %2900 = vmatpush1.msra.mxu0 %v2865
  %2901 = vmatprep.subr.mxu0 0.0
  %2902 = vmatpush1.msra.mxu0 0.0
  %2903 = vmatprep.subr.mxu0 0.0
  %2904 = vmatpush1.msra.mxu0 0.0
  %2905 = vmatprep.subr.mxu0 0.0
  %2906 = vmatpush1.msra.mxu0 0.0
  %2907 = vmatprep.subr.mxu0 0.0
  %2908 = vmatpush1.msra.mxu0 0.0
  %2909 = vmatprep.subr.mxu0 0.0
  %2910 = vmatpush1.msra.mxu0 0.0
  %2911 = vmatprep.subr.mxu0 0.0
  %2912 = vmatpush1.msra.mxu0 0.0
  %2913 = vmatprep.subr.mxu0 0.0
  %2914 = vmatpush1.msra.mxu0 0.0
  %2915 = vmatprep.subr.mxu0 0.0
  %2916 = vmatpush1.msra.mxu0 0.0
  %2917 = vmatprep.subr.mxu0 0.0
  %2918 = vmatpush1.msra.mxu0 0.0
  %2919 = vmatprep.subr.mxu0 0.0
  %2920 = vmatpush1.msra.mxu0 0.0
  %2921 = vmatprep.subr.mxu0 0.0
  %2922 = vmatpush1.msra.mxu0 0.0
  %2923 = vmatprep.subr.mxu0 0.0
  %2924 = vmatpush1.msra.mxu0 0.0
  %2925 = vmatprep.subr.mxu0 0.0
  %2926 = vmatpush1.msra.mxu0 0.0
  %2927 = vmatprep.subr.mxu0 0.0
  %2928 = vmatpush1.msra.mxu0 0.0
  %2929 = vmatprep.subr.mxu0 0.0
  %2930 = vmatpush1.msra.mxu0 0.0
  %2931 = vmatprep.subr.mxu0 0.0
  %2932 = vmatpush1.msra.mxu0 0.0
  %2933 = vmatprep.mubr.f32.mxu0 0.0
  %2934 = vmatmul.mubr.f32.gmra.mrb[0].mxu0 %v2804
  %v2935 = vpop.f32.mrb[0].mxu0
  %v2936 = vadd.f32 0.0, %v2935
  %v2937 = vpop.f32.mrb[0].mxu0
  %v2938 = vadd.f32 0.0, %v2937
  %2939 = vdwg.mxu0
  %2940 = vmatprep.subr.mxu0 %v2808
  %2941 = vmatpush1.msra.mxu0 %v2807
  %2942 = vmatprep.subr.mxu0 %v2812
  %2943 = vmatpush1.msra.mxu0 %v2811
  %2944 = vmatprep.subr.mxu0 %v2816
  %2945 = vmatpush1.msra.mxu0 %v2815
  %2946 = vmatprep.subr.mxu0 %v2820
  %2947 = vmatpush1.msra.mxu0 %v2819
  %2948 = vmatprep.subr.mxu0 %v2824
  %2949 = vmatpush1.msra.mxu0 %v2823
  %2950 = vmatprep.subr.mxu0 %v2828
  %2951 = vmatpush1.msra.mxu0 %v2827
  %2952 = vmatprep.subr.mxu0 %v2832
  %2953 = vmatpush1.msra.mxu0 %v2831
  %2954 = vmatprep.subr.mxu0 %v2836
  %2955 = vmatpush1.msra.mxu0 %v2835
  %2956 = vmatprep.subr.mxu0 %v2840
  %2957 = vmatpush1.msra.mxu0 %v2839
  %2958 = vmatprep.subr.mxu0 %v2844
  %2959 = vmatpush1.msra.mxu0 %v2843
  %2960 = vmatprep.subr.mxu0 %v2848
  %2961 = vmatpush1.msra.mxu0 %v2847
  %2962 = vmatprep.subr.mxu0 %v2852
  %2963 = vmatpush1.msra.mxu0 %v2851
  %2964 = vmatprep.subr.mxu0 %v2856
  %2965 = vmatpush1.msra.mxu0 %v2855
  %2966 = vmatprep.subr.mxu0 %v2860
  %2967 = vmatpush1.msra.mxu0 %v2859
  %2968 = vmatprep.subr.mxu0 %v2864
  %2969 = vmatpush1.msra.mxu0 %v2863
  %2970 = vmatprep.subr.mxu0 %v2868
  %2971 = vmatpush1.msra.mxu0 %v2867
  %2972 = vmatprep.subr.mxu0 0.0
  %2973 = vmatpush1.msra.mxu0 0.0
  %2974 = vmatprep.subr.mxu0 0.0
  %2975 = vmatpush1.msra.mxu0 0.0
  %2976 = vmatprep.subr.mxu0 0.0
  %2977 = vmatpush1.msra.mxu0 0.0
  %2978 = vmatprep.subr.mxu0 0.0
  %2979 = vmatpush1.msra.mxu0 0.0
  %2980 = vmatprep.subr.mxu0 0.0
  %2981 = vmatpush1.msra.mxu0 0.0
  %2982 = vmatprep.subr.mxu0 0.0
  %2983 = vmatpush1.msra.mxu0 0.0
  %2984 = vmatprep.subr.mxu0 0.0
  %2985 = vmatpush1.msra.mxu0 0.0
  %2986 = vmatprep.subr.mxu0 0.0
  %2987 = vmatpush1.msra.mxu0 0.0
  %2988 = vmatprep.subr.mxu0 0.0
  %2989 = vmatpush1.msra.mxu0 0.0
  %2990 = vmatprep.subr.mxu0 0.0
  %2991 = vmatpush1.msra.mxu0 0.0
  %2992 = vmatprep.subr.mxu0 0.0
  %2993 = vmatpush1.msra.mxu0 0.0
  %2994 = vmatprep.subr.mxu0 0.0
  %2995 = vmatpush1.msra.mxu0 0.0
  %2996 = vmatprep.subr.mxu0 0.0
  %2997 = vmatpush1.msra.mxu0 0.0
  %2998 = vmatprep.subr.mxu0 0.0
  %2999 = vmatpush1.msra.mxu0 0.0
  %3000 = vmatprep.subr.mxu0 0.0
  %3001 = vmatpush1.msra.mxu0 0.0
  %3002 = vmatprep.subr.mxu0 0.0
  %3003 = vmatpush1.msra.mxu0 0.0
  %3004 = vmatprep.mubr.f32.mxu0 0.0
  %3005 = vmatmul.mubr.f32.gmra.mrb[0].mxu0 %v2804
  %v3006 = vpop.f32.mrb[0].mxu0
  %v3007 = vadd.f32 0.0, %v3006
  %v3008 = vpop.f32.mrb[0].mxu0
  %v3009 = vadd.f32 0.0, %v3008
  %3010 = vdwg.mxu0
  %v3015 = vcombine.low %v2936, %v2938
  %v3016 = vcombine.low %v3007, %v3009
  %v3018 = vunpack.c.l.s4 1983009808
  %v3019 = vunpack.c.0.s8 %v3018
  %v3020 = vlaneseq
  %v3021 = vshrl.u32 %v3020, 7
  %v3022 = vsub.s32 %v3019, %v3021
  %v3023 = vrot.slane %v3015, %v3022
  %v3025 = vunpack.c.l.s4 1983009808
  %v3026 = vunpack.c.0.s8 %v3025
  %v3027 = vlaneseq
  %v3028 = vshrl.u32 %v3027, 7
  %v3029 = vsub.s32 %v3026, %v3028
  %v3030 = vrot.slane %v3016, %v3029
  %v3031 = vcombine.low %v3023, %v3030
  %v3033 = vadd.f32 %v2803, %v3031
  %v3034 = vxor.u32 %v3033, 2147483648
  %v3035 = vmul.f32 %v3034, 1.442695
  %v3036 = vpow.pop %v3035
  %v3037 = vadd.f32 %v3036, 1.0
  %v3038 = vrcp.pop %v3037
  %v3039 = vmul.f32 1.0, %v3038
  %v3041 = vrot.slane %v3033, 2
  %v3043 = vxor.u32 %v3041, 2147483648
  %v3044 = vmul.f32 %v3043, 1.442695
  %v3045 = vpow.pop %v3044
  %v3046 = vadd.f32 %v3045, 1.0
  %v3047 = vrcp.pop %v3046
  %v3048 = vmul.f32 1.0, %v3047
  %v3049 = vrot.slane %v3033, 4
  %v3051 = vtanh.pop %v3049
  %v3052 = vrot.slane %v3033, 6
  %v3054 = vxor.u32 %v3052, 2147483648
  %v3055 = vmul.f32 %v3054, 1.442695
  %v3056 = vpow.pop %v3055
  %v3057 = vadd.f32 %v3056, 1.0
  %v3058 = vrcp.pop %v3057
  %v3059 = vmul.f32 1.0, %v3058
  %v3060 = vld [vmem:[#allocation3] sm:$0x3]
  %v3061 = vmul.f32 %v3048, %v3060
  %v3062 = vmul.f32 %v3039, %v3051
  %v3063 = vadd.f32 %v3061, %v3062
  %v3064 = vtanh.pop %v3063
  %v3065 = vmul.f32 %v3059, %v3064
  %3066 = vst [vmem:[#allocation3] sm:$0x3] %v3063
  %3067 = vst [vmem:[#allocation2] sm:$0x3] %v3065
  %v3070 = vunpack.c.l.s4 1983009808
  %v3071 = vunpack.c.0.s8 %v3070
  %v3072 = vlaneseq
  %v3073 = vshrl.u32 %v3072, 7
  %v3074 = vsub.s32 %v3071, %v3073
  %v3075 = vrot.slane %v3065, %v3074
  %3076 = vrot.lane.b32.xlu0 %v3075, 32
  %v3077 = vpop.permute.xlu0 %3076
  %s3079 = scalar_lea.vmem [#allocation4], 14
  %3080 = vst.msk [vmem:[%s3079] sm:$0x3] %vm295, %v3077
  %v3081 = vld [vmem:[#allocation4] sm:$0x3]
  %v3082 = vld [vmem:[#allocation4 + $0x2] sm:$0x3]
  %v3083 = vld [vmem:[#allocation4 + $0x4] sm:$0x3]
  %v3084 = vld [vmem:[#allocation4 + $0x6] sm:$0x3]
  %v3085 = vld [vmem:[#allocation4 + $0x8] sm:$0x3]
  %v3086 = vld [vmem:[#allocation4 + $0xa] sm:$0x3]
  %v3087 = vld [vmem:[#allocation4 + $0xc] sm:$0x3]
  %v3088 = vld [vmem:[#allocation4 + $0xe] sm:$0x3]
  %v3089 = vld [vmem:[%s2] sm:$0xff]
  %v3090 = vld [vmem:[%s2 + $0x8] sm:$0xff]
  %v3091 = vld [vmem:[%s2 + $0x10] sm:$0xff]
  %v3092 = vld [vmem:[%s2 + $0x18] sm:$0xff]
  %v3093 = vld [vmem:[%s3] sm:$0x1]
  %v3095 = vlaneseq
  %v3096 = vshrl.u32 %v3095, 7
  %v3097 = vsub.s32 0, %v3096
  %v3098 = vrot.slane %v3093, %v3097
  %v3108 = vcombine.low %v3081, %v3082
  %v3109 = vcombine.low %v3083, %v3084
  %v3111 = vunpack.c.l.s4 1983009808
  %v3112 = vunpack.c.0.s8 %v3111
  %v3113 = vlaneseq
  %v3114 = vshrl.u32 %v3113, 7
  %v3115 = vsub.s32 %v3112, %v3114
  %v3116 = vrot.slane %v3108, %v3115
  %v3118 = vunpack.c.l.s4 1983009808
  %v3119 = vunpack.c.0.s8 %v3118
  %v3120 = vlaneseq
  %v3121 = vshrl.u32 %v3120, 7
  %v3122 = vsub.s32 %v3119, %v3121
  %v3123 = vrot.slane %v3109, %v3122
  %v3124 = vcombine.low %v3116, %v3123
  %v3125 = vcombine.low %v3085, %v3086
  %v3126 = vcombine.low %v3087, %v3088
  %v3128 = vunpack.c.l.s4 1983009808
  %v3129 = vunpack.c.0.s8 %v3128
  %v3130 = vlaneseq
  %v3131 = vshrl.u32 %v3130, 7
  %v3132 = vsub.s32 %v3129, %v3131
  %v3133 = vrot.slane %v3125, %v3132
  %v3135 = vunpack.c.l.s4 1983009808
  %v3136 = vunpack.c.0.s8 %v3135
  %v3137 = vlaneseq
  %v3138 = vshrl.u32 %v3137, 7
  %v3139 = vsub.s32 %v3136, %v3138
  %v3140 = vrot.slane %v3126, %v3139
  %v3141 = vcombine.low %v3133, %v3140
  %vm3142 = vcmask 261120
  %v3143 = vsel %vm3142, %v3124, 0
  %v3145 = vsel %vm3142, %v3141, 0
  %3147 = vmatprep.subr.mxu0 0.0
  %3148 = vmatpush1.msra.mxu0 %v3089
  %3149 = vmatprep.subr.mxu0 0.0
  %3150 = vmatpush1.msra.mxu0 %v3090
  %3151 = vmatprep.subr.mxu0 0.0
  %3152 = vmatpush1.msra.mxu0 %v3091
  %3153 = vmatprep.subr.mxu0 0.0
  %3154 = vmatpush1.msra.mxu0 %v3092
  %3155 = vmatprep.subr.mxu0 0.0
  %3156 = vmatpush1.msra.mxu0 0.0
  %3157 = vmatprep.subr.mxu0 0.0
  %3158 = vmatpush1.msra.mxu0 0.0
  %3159 = vmatprep.subr.mxu0 0.0
  %3160 = vmatpush1.msra.mxu0 0.0
  %3161 = vmatprep.subr.mxu0 0.0
  %3162 = vmatpush1.msra.mxu0 0.0
  %3163 = vmatprep.subr.mxu0 0.0
  %3164 = vmatpush1.msra.mxu0 0.0
  %3165 = vmatprep.subr.mxu0 0.0
  %3166 = vmatpush1.msra.mxu0 0.0
  %3167 = vmatprep.subr.mxu0 0.0
  %3168 = vmatpush1.msra.mxu0 0.0
  %3169 = vmatprep.subr.mxu0 0.0
  %3170 = vmatpush1.msra.mxu0 0.0
  %3171 = vmatprep.subr.mxu0 0.0
  %3172 = vmatpush1.msra.mxu0 0.0
  %3173 = vmatprep.subr.mxu0 0.0
  %3174 = vmatpush1.msra.mxu0 0.0
  %3175 = vmatprep.subr.mxu0 0.0
  %3176 = vmatpush1.msra.mxu0 0.0
  %3177 = vmatprep.subr.mxu0 0.0
  %3178 = vmatpush1.msra.mxu0 0.0
  %3179 = vmatprep.subr.mxu0 0.0
  %3180 = vmatpush1.msra.mxu0 0.0
  %3181 = vmatprep.subr.mxu0 0.0
  %3182 = vmatpush1.msra.mxu0 0.0
  %3183 = vmatprep.subr.mxu0 0.0
  %3184 = vmatpush1.msra.mxu0 0.0
  %3185 = vmatprep.subr.mxu0 0.0
  %3186 = vmatpush1.msra.mxu0 0.0
  %3187 = vmatprep.subr.mxu0 0.0
  %3188 = vmatpush1.msra.mxu0 0.0
  %3189 = vmatprep.subr.mxu0 0.0
  %3190 = vmatpush1.msra.mxu0 0.0
  %3191 = vmatprep.subr.mxu0 0.0
  %3192 = vmatpush1.msra.mxu0 0.0
  %3193 = vmatprep.subr.mxu0 0.0
  %3194 = vmatpush1.msra.mxu0 0.0
  %3195 = vmatprep.subr.mxu0 0.0
  %3196 = vmatpush1.msra.mxu0 0.0
  %3197 = vmatprep.subr.mxu0 0.0
  %3198 = vmatpush1.msra.mxu0 0.0
  %3199 = vmatprep.subr.mxu0 0.0
  %3200 = vmatpush1.msra.mxu0 0.0
  %3201 = vmatprep.subr.mxu0 0.0
  %3202 = vmatpush1.msra.mxu0 0.0
  %3203 = vmatprep.subr.mxu0 0.0
  %3204 = vmatpush1.msra.mxu0 0.0
  %3205 = vmatprep.subr.mxu0 0.0
  %3206 = vmatpush1.msra.mxu0 0.0
  %3207 = vmatprep.subr.mxu0 0.0
  %3208 = vmatpush1.msra.mxu0 0.0
  %3209 = vmatprep.subr.mxu0 0.0
  %3210 = vmatpush1.msra.mxu0 0.0
  %3211 = vmatprep.mubr.f32.mxu0 0.0
  %3212 = vmatmul.mubr.f32.gmra.mrb[0].mxu0 %v3143
  %v3213 = vpop.f32.mrb[0].mxu0
  %v3214 = vadd.f32 %v3098, %v3213
  %v3215 = vpop.f32.mrb[0].mxu0
  %3216 = vmatprep.mubr.f32.mxu0 0.0
  %3217 = vmatmul.mubr.f32.gmra.mrb[0].mxu0 %v3145
  %v3218 = vpop.f32.mrb[0].mxu0
  %v3219 = vadd.f32 %v3098, %v3218
  %v3220 = vpop.f32.mrb[0].mxu0
  %3221 = vdwg.mxu0
  %vm3222 = vcmask 48128
  %v3223 = vsel %vm3222, %v3214, -inf
  %3224 = vmax.xlane.f32.xlu0 %v3223
  %v3225 = vpop.xlane.xlu0 %3224
  %v3226 = vsel %vm3222, %v3219, -inf
  %3227 = vmax.xlane.f32.xlu0 %v3226
  %v3228 = vpop.xlane.xlu0 %3227
  %v3229 = vsub.f32 %v3214, %v3225
  %v3230 = vsub.f32 %v3219, %v3228
  %v3231 = vmul.f32 %v3229, 1.442695
  %v3232 = vpow.pop %v3231
  %v3233 = vmul.f32 %v3230, 1.442695
  %v3234 = vpow.pop %v3233
  %v3235 = vsel %vm3222, %v3232, 0.0
  %3236 = vadd.xlane.f32.xlu0 %v3235
  %v3237 = vpop.xlane.xlu0 %3236
  %v3238 = vsel %vm3222, %v3234, 0.0
  %3239 = vadd.xlane.f32.xlu0 %v3238
  %v3240 = vpop.xlane.xlu0 %3239
  %v3241 = vlog2.pop %v3237
  %v3242 = vmul.f32 %v3241, 0.6931472
  %v3243 = vlog2.pop %v3240
  %v3244 = vmul.f32 %v3243, 0.6931472
  %v3245 = vadd.f32 %v3225, %v3242
  %v3246 = vadd.f32 %v3228, %v3244
  %v3247 = vlaneseq
  %v3248 = vand.u32 %v3247, 127
  %vm3249 = vcmp.lt.s32.totalorder %v3248, 6
  %v3250 = vsub.f32 %v3214, %v3245
  %v3251 = vsub.f32 %v3219, %v3246
  %v3252 = vxor.u32 %v3214, 2147483648
  %v3253 = vxor.u32 %v3219, 2147483648
  %v3254 = vmul.f32 %v3252, 1.442695
  %v3255 = vpow.pop %v3254
  %v3256 = vmul.f32 %v3253, 1.442695
  %v3257 = vpow.pop %v3256
  %v3258 = vadd.f32 %v3255, 1.0
  %v3259 = vadd.f32 %v3257, 1.0
  %v3260 = vrcp.pop %v3258
  %v3261 = vmul.f32 1.0, %v3260
  %v3262 = vrcp.pop %v3259
  %v3263 = vmul.f32 1.0, %v3262
  %v3264 = vsel %vm3249, %v3250, %v3261
  %v3265 = vsel %vm3249, %v3251, %v3263
  %vm3266 = vcmask 56320
  %3267 = vst.msk [vmem:[%s4] sm:$0xff] %vm3266, %v3264
  %3268 = vst.msk [vmem:[%s4 + $0x8] sm:$0xff] %vm3266, %v3265
  // Predicated region
  $region18: #{early_rnn_forward.3} parent=0 // pred_check
    _
  $region19: #{early_rnn_forward.3} parent=0 // pred_check_branch
    %3270 = sbr.rel (0) target = $region21
  $region20: #{early_rnn_forward.3} parent=0 // pred_region
    _
  $region21: #{early_rnn_forward.3} parent=0 // pred_fallthru
    _
  // Predicated region
  $region22: #{early_rnn_forward.3} parent=0 // pred_check
    _
  $region23: #{early_rnn_forward.3} parent=0 // pred_check_branch
    %3272 = sbr.rel (0) target = $region25
  $region24: #{early_rnn_forward.3} parent=0 // pred_region
    _
  $region25: #{early_rnn_forward.3} parent=0 // pred_fallthru
    _

</llo_original>
